<compile_context>
chip_gen: v6e
topology: v6e:2x2x1
jax: 0.10.0
libtpu: 0.0.40
codegen_flags: <defaults>
</compile_context>

<pallas_src>
import math
import functools

import jax
import jax.numpy as jnp
from jax.experimental import pallas as pl
from jax.experimental.pallas import tpu as pltpu


# ----------------------------------------------------------------------------
# Fused kernel: base_network -> encoder layer -> concat -> fc8
# ----------------------------------------------------------------------------
def _fused_vcopn_kernel(x_ref, wb_ref, bb_ref, wqkv_ref, bqkv_ref, wo_ref,
                        bo_ref, ln_ref, w1_ref, b1_ref, w2_ref, b2_ref,
                        w8_ref, b8_ref, o_ref, *, scale, eps):
    Bt, L, K = x_ref.shape
    F = wb_ref.shape[1]

    # ---- base_network: flatten -> Linear -> ReLU ---------------------------
    # x streamed f32 (no wrapper-side cast round trip); cast to bf16 only for
    # the MXU input, accumulate in f32.
    x2 = x_ref[...].reshape(Bt * L, K).astype(jnp.bfloat16)
    f = jnp.dot(x2, wb_ref[...], preferred_element_type=jnp.float32) + bb_ref[...]
    f = jnp.maximum(f, 0.0)                                   # (Bt*L, F) f32

    ln1_g, ln1_b, ln2_g, ln2_b = ln_ref[0], ln_ref[1], ln_ref[2], ln_ref[3]

    # ---- encoder: fused Q/K/V projection (single bf16 matmul) --------------
    qkv = jnp.dot(f.astype(jnp.bfloat16), wqkv_ref[...],
                  preferred_element_type=jnp.float32) + bqkv_ref[...]   # (Bt*L, 3F)
    q3 = qkv[:, :F].reshape(Bt, L, F)
    k3 = qkv[:, F:2 * F].reshape(Bt, L, F)
    v3 = qkv[:, 2 * F:].reshape(Bt, L, F)

    scores = jnp.einsum('bld,bmd->blm', q3, k3,
                        preferred_element_type=jnp.float32) * scale     # (Bt,L,L)
    scores = scores - jnp.max(scores, axis=-1, keepdims=True)
    p = jnp.exp(scores)
    p = p * pl.reciprocal(jnp.sum(p, axis=-1, keepdims=True), approx=True)

    ctx = jnp.einsum('blm,bmd->bld', p, v3,
                     preferred_element_type=jnp.float32).reshape(Bt * L, F)
    attn = jnp.dot(ctx.astype(jnp.bfloat16), wo_ref[...],
                   preferred_element_type=jnp.float32) + bo_ref[...]

    # residual + LayerNorm 1 (post-LN, biased variance, eps matches PyTorch)
    h = f + attn
    mu = jnp.mean(h, axis=-1, keepdims=True)
    var = jnp.mean((h - mu) ** 2, axis=-1, keepdims=True)
    h = (h - mu) * jax.lax.rsqrt(var + eps) * ln1_g + ln1_b

    # FFN + residual + LayerNorm 2
    f1 = jnp.maximum(
        jnp.dot(h.astype(jnp.bfloat16), w1_ref[...],
                preferred_element_type=jnp.float32) + b1_ref[...], 0.0)
    f2 = jnp.dot(f1.astype(jnp.bfloat16), w2_ref[...],
                 preferred_element_type=jnp.float32) + b2_ref[...]
    h2 = h + f2
    mu2 = jnp.mean(h2, axis=-1, keepdims=True)
    var2 = jnp.mean((h2 - mu2) ** 2, axis=-1, keepdims=True)
    out = (h2 - mu2) * jax.lax.rsqrt(var2 + eps) * ln2_g + ln2_b         # (Bt*L, F)

    # ---- cat over seq positions + dropout(eval=identity) + fc8 -------------
    # Row b of the reshape is exactly cat([enc_out[b, i, :] for i], axis=-1),
    # so fc8 is one (Bt, L*F) @ (L*F, CN) matmul on the unpadded weight.
    out_cat = out.reshape(Bt, L * F)
    logits = jnp.dot(out_cat.astype(jnp.bfloat16), w8_ref[...],
                     preferred_element_type=jnp.float32) + b8_ref[...]   # (Bt, CN)
    o_ref[...] = logits.astype(o_ref.dtype)


# ----------------------------------------------------------------------------
# Wrapper
# ----------------------------------------------------------------------------
def vcopn_attention_forward(x, params, feature_size, class_num):
    B, L, C, T, H, W = x.shape
    K = C * T * H * W
    F = feature_size
    FF = params["w1"].shape[1]
    CN = class_num

    x3 = x.reshape(B, L, K)          # stays f32; cast happens inside the kernel

    # Total streamed parameter bytes (bf16 matrices + f32 biases / LN).
    weight_bytes = sum(int(params[k].size) * params[k].dtype.itemsize
                       for k in ("w_base", "b_base", "wqkv", "bqkv", "wo", "bo",
                                 "ln", "w1", "b1", "w2", "b2", "w8", "b8"))

    # Split across v7x's two TensorCores only when each core's activation
    # stream is at least as large as the (duplicated-per-core) weight stream;
    # on single-TC v5e/v6e the split is pure grid overhead.  Bt must stay
    # sublane-aligned for the (Bt, CN) output block.
    Bt_half = B // 2
    split_ok = (B % 2 == 0) and (Bt_half % 8 == 0)
    NB = 2 if (split_ok and
               Bt_half * L * K * x3.dtype.itemsize >= weight_bytes) else 1
    Bt = B // NB

    kernel = functools.partial(_fused_vcopn_kernel,
                               scale=1.0 / math.sqrt(F), eps=1e-5)

    out = pl.pallas_call(
        kernel,
        out_shape=jax.ShapeDtypeStruct((B, CN), jnp.float32),
        grid=(NB,),
        in_specs=[
            pl.BlockSpec((Bt, L, K), lambda nb: (nb, 0, 0)),   # clips (f32)
            pl.BlockSpec((K, F), lambda nb: (0, 0)),           # w_base (bf16)
            pl.BlockSpec((1, F), lambda nb: (0, 0)),           # b_base (f32)
            pl.BlockSpec((F, 3 * F), lambda nb: (0, 0)),       # fused Wqkv (bf16)
            pl.BlockSpec((1, 3 * F), lambda nb: (0, 0)),       # fused bqkv (f32)
            pl.BlockSpec((F, F), lambda nb: (0, 0)),           # Wo (bf16)
            pl.BlockSpec((1, F), lambda nb: (0, 0)),           # bo (f32)
            pl.BlockSpec((4, 1, F), lambda nb: (0, 0, 0)),     # ln1_g/ln1_b/ln2_g/ln2_b
            pl.BlockSpec((F, FF), lambda nb: (0, 0)),          # FFN w1 (bf16)
            pl.BlockSpec((1, FF), lambda nb: (0, 0)),          # FFN b1 (f32)
            pl.BlockSpec((FF, F), lambda nb: (0, 0)),          # FFN w2 (bf16)
            pl.BlockSpec((1, F), lambda nb: (0, 0)),           # FFN b2 (f32)
            pl.BlockSpec((L * F, CN), lambda nb: (0, 0)),      # fc8 weight (bf16, unpadded)
            pl.BlockSpec((1, CN), lambda nb: (0, 0)),          # fc8 bias (f32)
        ],
        out_specs=pl.BlockSpec((Bt, CN), lambda nb: (nb, 0)),
        compiler_params=pltpu.CompilerParams(
            dimension_semantics=("parallel",)),
    )(x3, params["w_base"], params["b_base"], params["wqkv"], params["bqkv"],
      params["wo"], params["bo"], params["ln"], params["w1"], params["b1"],
      params["w2"], params["b2"], params["w8"], params["b8"])

    return out


# ----------------------------------------------------------------------------
# Example / smoke test
# ----------------------------------------------------------------------------
if __name__ == "__main__":
    # Small, deterministic synthetic config.
    B, tuple_len = 2, 3
    C, T, H, W = 3, 4, 16, 16
    feature_size = 128
    ffn_dim = 256
    class_num = math.factorial(tuple_len)          # 6
    K = C * T * H * W                              # 3072

    key = jax.random.PRNGKey(0)
    ks = jax.random.split(key, 12)

    x = jax.random.normal(ks[0], (B, tuple_len, C, T, H, W), jnp.float32)

    params = {
        # bf16 weight matrices (f32 accumulation inside the kernel)
        "w_base": (0.02 * jax.random.normal(ks[1], (K, feature_size),
                                            jnp.float32)).astype(jnp.bfloat16),
        "b_base": 0.01 * jax.random.normal(ks[2], (1, feature_size), jnp.float32),
        "wqkv": (0.05 * jax.random.normal(ks[3], (feature_size, 3 * feature_size),
                                          jnp.float32)).astype(jnp.bfloat16),
        "bqkv": jnp.zeros((1, 3 * feature_size), jnp.float32),
        "wo": (0.05 * jax.random.normal(ks[8], (feature_size, feature_size),
                                        jnp.float32)).astype(jnp.bfloat16),
        "bo": jnp.zeros((1, feature_size), jnp.float32),
        # ln = [ln1_gamma, ln1_beta, ln2_gamma, ln2_beta]
        "ln": jnp.stack([jnp.ones((1, feature_size), jnp.float32),
                         jnp.zeros((1, feature_size), jnp.float32),
                         jnp.ones((1, feature_size), jnp.float32),
                         jnp.zeros((1, feature_size), jnp.float32)], axis=0),
        "w1": (0.05 * jax.random.normal(ks[4], (feature_size, ffn_dim),
                                        jnp.float32)).astype(jnp.bfloat16),
        "b1": jnp.zeros((1, ffn_dim), jnp.float32),
        "w2": (0.05 * jax.random.normal(ks[5], (ffn_dim, feature_size),
                                        jnp.float32)).astype(jnp.bfloat16),
        "b2": jnp.zeros((1, feature_size), jnp.float32),
        # fc8: real unpadded (L*F, class_num) weight, bf16
        "w8": (0.05 * jax.random.normal(ks[6], (tuple_len * feature_size, class_num),
                                        jnp.float32)).astype(jnp.bfloat16),
        "b8": 0.01 * jax.random.normal(ks[7], (1, class_num), jnp.float32),
    }

    fwd = jax.jit(functools.partial(vcopn_attention_forward,
                                    feature_size=feature_size,
                                    class_num=class_num))
    logits = fwd(x, params)
    jax.block_until_ready(logits)
    assert logits.shape == (B, class_num)
    print("KERNEL_OK")
</pallas_src>

<mosaic_0001>
module attributes {stable_mosaic.version = 11 : i64} {
  func.func @_fused_vcopn_kernel(%arg0: i32, %arg1: memref<2x3x3072xf32, #tpu.memory_space<vmem>>, %arg2: memref<3072x128xbf16, #tpu.memory_space<vmem>>, %arg3: memref<1x128xf32, #tpu.memory_space<vmem>>, %arg4: memref<128x384xbf16, #tpu.memory_space<vmem>>, %arg5: memref<1x384xf32, #tpu.memory_space<vmem>>, %arg6: memref<128x128xbf16, #tpu.memory_space<vmem>>, %arg7: memref<1x128xf32, #tpu.memory_space<vmem>>, %arg8: memref<4x1x128xf32, #tpu.memory_space<vmem>>, %arg9: memref<128x256xbf16, #tpu.memory_space<vmem>>, %arg10: memref<1x256xf32, #tpu.memory_space<vmem>>, %arg11: memref<256x128xbf16, #tpu.memory_space<vmem>>, %arg12: memref<1x128xf32, #tpu.memory_space<vmem>>, %arg13: memref<384x6xbf16, #tpu.memory_space<vmem>>, %arg14: memref<1x6xf32, #tpu.memory_space<vmem>>, %arg15: memref<2x6xf32, #tpu.memory_space<vmem>>) attributes {dimension_semantics = [#tpu.dimension_semantics<parallel>], iteration_bounds = array<i64: 1>, scalar_prefetch = 0 : i64, scratch_operands = 0 : i64, tpu.core_type = #tpu.core_type<tc>, window_params = [{transform_indices = @transform_0, window_bounds = array<i64: 2, 3, 3072>}, {pipeline_mode = #tpu.pipeline_mode<synchronous>, transform_indices = @transform_1, window_bounds = array<i64: 3072, 128>}, {pipeline_mode = #tpu.pipeline_mode<synchronous>, transform_indices = @transform_2, window_bounds = array<i64: 1, 128>}, {pipeline_mode = #tpu.pipeline_mode<synchronous>, transform_indices = @transform_3, window_bounds = array<i64: 128, 384>}, {pipeline_mode = #tpu.pipeline_mode<synchronous>, transform_indices = @transform_4, window_bounds = array<i64: 1, 384>}, {pipeline_mode = #tpu.pipeline_mode<synchronous>, transform_indices = @transform_5, window_bounds = array<i64: 128, 128>}, {pipeline_mode = #tpu.pipeline_mode<synchronous>, transform_indices = @transform_6, window_bounds = array<i64: 1, 128>}, {pipeline_mode = #tpu.pipeline_mode<synchronous>, transform_indices = @transform_7, window_bounds = array<i64: 4, 1, 128>}, {pipeline_mode = #tpu.pipeline_mode<synchronous>, transform_indices = @transform_8, window_bounds = array<i64: 128, 256>}, {pipeline_mode = #tpu.pipeline_mode<synchronous>, transform_indices = @transform_9, window_bounds = array<i64: 1, 256>}, {pipeline_mode = #tpu.pipeline_mode<synchronous>, transform_indices = @transform_10, window_bounds = array<i64: 256, 128>}, {pipeline_mode = #tpu.pipeline_mode<synchronous>, transform_indices = @transform_11, window_bounds = array<i64: 1, 128>}, {pipeline_mode = #tpu.pipeline_mode<synchronous>, transform_indices = @transform_12, window_bounds = array<i64: 384, 6>}, {pipeline_mode = #tpu.pipeline_mode<synchronous>, transform_indices = @transform_13, window_bounds = array<i64: 1, 6>}, {transform_indices = @transform_14, window_bounds = array<i64: 2, 6>}]} {
    %c0 = arith.constant 0 : index
    %c0_0 = arith.constant 0 : index
    %c0_1 = arith.constant 0 : index
    %0 = vector.load %arg1[%c0, %c0_0, %c0_1] : memref<2x3x3072xf32, #tpu.memory_space<vmem>>, vector<2x3x3072xf32>
    %1 = vector.shape_cast %0 : vector<2x3x3072xf32> to vector<6x3072xf32>
    %2 = arith.truncf %1 : vector<6x3072xf32> to vector<6x3072xbf16>
    %c0_2 = arith.constant 0 : index
    %c0_3 = arith.constant 0 : index
    %3 = vector.load %arg2[%c0_2, %c0_3] : memref<3072x128xbf16, #tpu.memory_space<vmem>>, vector<3072x128xbf16>
    %cst = arith.constant dense<0.000000e+00> : vector<6x128xf32>
    %4 = tpu.matmul %2, %3, %cst {dimension_numbers = #tpu.dot_dimension_numbers<[1], [0], [0], [1], [0, 0, 1, 1], [], []>} : vector<6x3072xbf16>, vector<3072x128xbf16>, vector<6x128xf32> -> vector<6x128xf32>
    %c0_4 = arith.constant 0 : index
    %c0_5 = arith.constant 0 : index
    %5 = vector.load %arg3[%c0_4, %c0_5] : memref<1x128xf32, #tpu.memory_space<vmem>>, vector<1x128xf32>
    %6 = vector.broadcast %5 : vector<1x128xf32> to vector<6x128xf32>
    %7 = arith.addf %4, %6 : vector<6x128xf32>
    %cst_6 = arith.constant 0.000000e+00 : f32
    %8 = vector.broadcast %cst_6 : f32 to vector<6x128xf32>
    %9 = arith.maximumf %7, %8 : vector<6x128xf32>
    %c0_7 = arith.constant 0 : index
    %c0_8 = arith.constant 0 : index
    %c0_9 = arith.constant 0 : index
    %10 = vector.load %arg8[%c0_7, %c0_8, %c0_9] : memref<4x1x128xf32, #tpu.memory_space<vmem>>, vector<1x1x128xf32>
    %11 = vector.shape_cast %10 : vector<1x1x128xf32> to vector<1x128xf32>
    %c1 = arith.constant 1 : index
    %c0_10 = arith.constant 0 : index
    %c0_11 = arith.constant 0 : index
    %12 = vector.load %arg8[%c1, %c0_10, %c0_11] : memref<4x1x128xf32, #tpu.memory_space<vmem>>, vector<1x1x128xf32>
    %13 = vector.shape_cast %12 : vector<1x1x128xf32> to vector<1x128xf32>
    %c2 = arith.constant 2 : index
    %c0_12 = arith.constant 0 : index
    %c0_13 = arith.constant 0 : index
    %14 = vector.load %arg8[%c2, %c0_12, %c0_13] : memref<4x1x128xf32, #tpu.memory_space<vmem>>, vector<1x1x128xf32>
    %15 = vector.shape_cast %14 : vector<1x1x128xf32> to vector<1x128xf32>
    %c3 = arith.constant 3 : index
    %c0_14 = arith.constant 0 : index
    %c0_15 = arith.constant 0 : index
    %16 = vector.load %arg8[%c3, %c0_14, %c0_15] : memref<4x1x128xf32, #tpu.memory_space<vmem>>, vector<1x1x128xf32>
    %17 = vector.shape_cast %16 : vector<1x1x128xf32> to vector<1x128xf32>
    %18 = arith.truncf %9 : vector<6x128xf32> to vector<6x128xbf16>
    %c0_16 = arith.constant 0 : index
    %c0_17 = arith.constant 0 : index
    %19 = vector.load %arg4[%c0_16, %c0_17] : memref<128x384xbf16, #tpu.memory_space<vmem>>, vector<128x384xbf16>
    %cst_18 = arith.constant dense<0.000000e+00> : vector<6x384xf32>
    %20 = tpu.matmul %18, %19, %cst_18 {dimension_numbers = #tpu.dot_dimension_numbers<[1], [0], [0], [1], [0, 0, 1, 1], [], []>} : vector<6x128xbf16>, vector<128x384xbf16>, vector<6x384xf32> -> vector<6x384xf32>
    %c0_19 = arith.constant 0 : index
    %c0_20 = arith.constant 0 : index
    %21 = vector.load %arg5[%c0_19, %c0_20] : memref<1x384xf32, #tpu.memory_space<vmem>>, vector<1x384xf32>
    %22 = vector.broadcast %21 : vector<1x384xf32> to vector<6x384xf32>
    %23 = arith.addf %20, %22 : vector<6x384xf32>
    %24 = vector.extract_strided_slice %23 {offsets = [0, 0], sizes = [6, 128], strides = [1, 1]} : vector<6x384xf32> to vector<6x128xf32>
    %25 = vector.shape_cast %24 : vector<6x128xf32> to vector<2x3x128xf32>
    %26 = vector.extract_strided_slice %23 {offsets = [0, 128], sizes = [6, 128], strides = [1, 1]} : vector<6x384xf32> to vector<6x128xf32>
    %27 = vector.shape_cast %26 : vector<6x128xf32> to vector<2x3x128xf32>
    %28 = vector.extract_strided_slice %23 {offsets = [0, 256], sizes = [6, 128], strides = [1, 1]} : vector<6x384xf32> to vector<6x128xf32>
    %29 = vector.shape_cast %28 : vector<6x128xf32> to vector<2x3x128xf32>
    "tpu.trace_start"() <{level = 10 : i32, message = "bld,bmd->blm"}> : () -> ()
    %cst_21 = arith.constant dense<0.000000e+00> : vector<2x3x3xf32>
    %30 = tpu.matmul %25, %27, %cst_21 {dimension_numbers = #tpu.dot_dimension_numbers<[2], [2], [1], [1], [0, 0, 0, 1, 1, 1], [0], [0]>} : vector<2x3x128xf32>, vector<2x3x128xf32>, vector<2x3x3xf32> -> vector<2x3x3xf32>
    "tpu.trace_stop"() : () -> ()
    %cst_22 = arith.constant 0.0883883461 : f32
    %31 = vector.broadcast %cst_22 : f32 to vector<2x3x3xf32>
    %32 = arith.mulf %30, %31 : vector<2x3x3xf32>
    %cst_23 = arith.constant dense<0xFF800000> : vector<2x3xf32>
    %33 = vector.multi_reduction <maximumf>, %32, %cst_23 [2] : vector<2x3x3xf32> to vector<2x3xf32>
    %34 = vector.shape_cast %33 : vector<2x3xf32> to vector<2x3x1xf32>
    %35 = vector.broadcast %34 : vector<2x3x1xf32> to vector<2x3x3xf32>
    %36 = arith.subf %32, %35 : vector<2x3x3xf32>
    %37 = math.exp %36 : vector<2x3x3xf32>
    %cst_24 = arith.constant dense<0.000000e+00> : vector<2x3xf32>
    %38 = vector.multi_reduction <add>, %37, %cst_24 [2] : vector<2x3x3xf32> to vector<2x3xf32>
    %39 = vector.shape_cast %38 : vector<2x3xf32> to vector<2x3x1xf32>
    %40 = tpu.reciprocal %39 {approx = true} : vector<2x3x1xf32> -> vector<2x3x1xf32>
    %41 = vector.broadcast %40 : vector<2x3x1xf32> to vector<2x3x3xf32>
    %42 = arith.mulf %37, %41 : vector<2x3x3xf32>
    "tpu.trace_start"() <{level = 10 : i32, message = "blm,bmd->bld"}> : () -> ()
    %cst_25 = arith.constant dense<0.000000e+00> : vector<2x3x128xf32>
    %43 = tpu.matmul %42, %29, %cst_25 {dimension_numbers = #tpu.dot_dimension_numbers<[2], [1], [1], [2], [0, 0, 0, 1, 1, 2], [0], [0]>} : vector<2x3x3xf32>, vector<2x3x128xf32>, vector<2x3x128xf32> -> vector<2x3x128xf32>
    "tpu.trace_stop"() : () -> ()
    %44 = vector.shape_cast %43 : vector<2x3x128xf32> to vector<6x128xf32>
    %45 = arith.truncf %44 : vector<6x128xf32> to vector<6x128xbf16>
    %c0_26 = arith.constant 0 : index
    %c0_27 = arith.constant 0 : index
    %46 = vector.load %arg6[%c0_26, %c0_27] : memref<128x128xbf16, #tpu.memory_space<vmem>>, vector<128x128xbf16>
    %cst_28 = arith.constant dense<0.000000e+00> : vector<6x128xf32>
    %47 = tpu.matmul %45, %46, %cst_28 {dimension_numbers = #tpu.dot_dimension_numbers<[1], [0], [0], [1], [0, 0, 1, 1], [], []>} : vector<6x128xbf16>, vector<128x128xbf16>, vector<6x128xf32> -> vector<6x128xf32>
    %c0_29 = arith.constant 0 : index
    %c0_30 = arith.constant 0 : index
    %48 = vector.load %arg7[%c0_29, %c0_30] : memref<1x128xf32, #tpu.memory_space<vmem>>, vector<1x128xf32>
    %49 = vector.broadcast %48 : vector<1x128xf32> to vector<6x128xf32>
    %50 = arith.addf %47, %49 : vector<6x128xf32>
    %51 = arith.addf %9, %50 : vector<6x128xf32>
    %cst_31 = arith.constant dense<0.000000e+00> : vector<6xf32>
    %52 = vector.multi_reduction <add>, %51, %cst_31 [1] : vector<6x128xf32> to vector<6xf32>
    %53 = vector.shape_cast %52 : vector<6xf32> to vector<6x1xf32>
    %cst_32 = arith.constant 1.280000e+02 : f32
    %54 = vector.broadcast %cst_32 : f32 to vector<6x1xf32>
    %55 = arith.divf %53, %54 : vector<6x1xf32>
    %56 = vector.broadcast %55 : vector<6x1xf32> to vector<6x128xf32>
    %57 = arith.subf %51, %56 : vector<6x128xf32>
    %58 = arith.mulf %57, %57 : vector<6x128xf32>
    %cst_33 = arith.constant dense<0.000000e+00> : vector<6xf32>
    %59 = vector.multi_reduction <add>, %58, %cst_33 [1] : vector<6x128xf32> to vector<6xf32>
    %60 = vector.shape_cast %59 : vector<6xf32> to vector<6x1xf32>
    %cst_34 = arith.constant 1.280000e+02 : f32
    %61 = vector.broadcast %cst_34 : f32 to vector<6x1xf32>
    %62 = arith.divf %60, %61 : vector<6x1xf32>
    %63 = vector.broadcast %55 : vector<6x1xf32> to vector<6x128xf32>
    %64 = arith.subf %51, %63 : vector<6x128xf32>
    %cst_35 = arith.constant 9.99999974E-6 : f32
    %65 = vector.broadcast %cst_35 : f32 to vector<6x1xf32>
    %66 = arith.addf %62, %65 : vector<6x1xf32>
    %67 = math.rsqrt %66 : vector<6x1xf32>
    %68 = vector.broadcast %67 : vector<6x1xf32> to vector<6x128xf32>
    %69 = arith.mulf %64, %68 : vector<6x128xf32>
    %70 = vector.broadcast %11 : vector<1x128xf32> to vector<6x128xf32>
    %71 = arith.mulf %69, %70 : vector<6x128xf32>
    %72 = vector.broadcast %13 : vector<1x128xf32> to vector<6x128xf32>
    %73 = arith.addf %71, %72 : vector<6x128xf32>
    %74 = arith.truncf %73 : vector<6x128xf32> to vector<6x128xbf16>
    %c0_36 = arith.constant 0 : index
    %c0_37 = arith.constant 0 : index
    %75 = vector.load %arg9[%c0_36, %c0_37] : memref<128x256xbf16, #tpu.memory_space<vmem>>, vector<128x256xbf16>
    %cst_38 = arith.constant dense<0.000000e+00> : vector<6x256xf32>
    %76 = tpu.matmul %74, %75, %cst_38 {dimension_numbers = #tpu.dot_dimension_numbers<[1], [0], [0], [1], [0, 0, 1, 1], [], []>} : vector<6x128xbf16>, vector<128x256xbf16>, vector<6x256xf32> -> vector<6x256xf32>
    %c0_39 = arith.constant 0 : index
    %c0_40 = arith.constant 0 : index
    %77 = vector.load %arg10[%c0_39, %c0_40] : memref<1x256xf32, #tpu.memory_space<vmem>>, vector<1x256xf32>
    %78 = vector.broadcast %77 : vector<1x256xf32> to vector<6x256xf32>
    %79 = arith.addf %76, %78 : vector<6x256xf32>
    %cst_41 = arith.constant 0.000000e+00 : f32
    %80 = vector.broadcast %cst_41 : f32 to vector<6x256xf32>
    %81 = arith.maximumf %79, %80 : vector<6x256xf32>
    %82 = arith.truncf %81 : vector<6x256xf32> to vector<6x256xbf16>
    %c0_42 = arith.constant 0 : index
    %c0_43 = arith.constant 0 : index
    %83 = vector.load %arg11[%c0_42, %c0_43] : memref<256x128xbf16, #tpu.memory_space<vmem>>, vector<256x128xbf16>
    %cst_44 = arith.constant dense<0.000000e+00> : vector<6x128xf32>
    %84 = tpu.matmul %82, %83, %cst_44 {dimension_numbers = #tpu.dot_dimension_numbers<[1], [0], [0], [1], [0, 0, 1, 1], [], []>} : vector<6x256xbf16>, vector<256x128xbf16>, vector<6x128xf32> -> vector<6x128xf32>
    %c0_45 = arith.constant 0 : index
    %c0_46 = arith.constant 0 : index
    %85 = vector.load %arg12[%c0_45, %c0_46] : memref<1x128xf32, #tpu.memory_space<vmem>>, vector<1x128xf32>
    %86 = vector.broadcast %85 : vector<1x128xf32> to vector<6x128xf32>
    %87 = arith.addf %84, %86 : vector<6x128xf32>
    %88 = arith.addf %73, %87 : vector<6x128xf32>
    %cst_47 = arith.constant dense<0.000000e+00> : vector<6xf32>
    %89 = vector.multi_reduction <add>, %88, %cst_47 [1] : vector<6x128xf32> to vector<6xf32>
    %90 = vector.shape_cast %89 : vector<6xf32> to vector<6x1xf32>
    %cst_48 = arith.constant 1.280000e+02 : f32
    %91 = vector.broadcast %cst_48 : f32 to vector<6x1xf32>
    %92 = arith.divf %90, %91 : vector<6x1xf32>
    %93 = vector.broadcast %92 : vector<6x1xf32> to vector<6x128xf32>
    %94 = arith.subf %88, %93 : vector<6x128xf32>
    %95 = arith.mulf %94, %94 : vector<6x128xf32>
    %cst_49 = arith.constant dense<0.000000e+00> : vector<6xf32>
    %96 = vector.multi_reduction <add>, %95, %cst_49 [1] : vector<6x128xf32> to vector<6xf32>
    %97 = vector.shape_cast %96 : vector<6xf32> to vector<6x1xf32>
    %cst_50 = arith.constant 1.280000e+02 : f32
    %98 = vector.broadcast %cst_50 : f32 to vector<6x1xf32>
    %99 = arith.divf %97, %98 : vector<6x1xf32>
    %100 = vector.broadcast %92 : vector<6x1xf32> to vector<6x128xf32>
    %101 = arith.subf %88, %100 : vector<6x128xf32>
    %cst_51 = arith.constant 9.99999974E-6 : f32
    %102 = vector.broadcast %cst_51 : f32 to vector<6x1xf32>
    %103 = arith.addf %99, %102 : vector<6x1xf32>
    %104 = math.rsqrt %103 : vector<6x1xf32>
    %105 = vector.broadcast %104 : vector<6x1xf32> to vector<6x128xf32>
    %106 = arith.mulf %101, %105 : vector<6x128xf32>
    %107 = vector.broadcast %15 : vector<1x128xf32> to vector<6x128xf32>
    %108 = arith.mulf %106, %107 : vector<6x128xf32>
    %109 = vector.broadcast %17 : vector<1x128xf32> to vector<6x128xf32>
    %110 = arith.addf %108, %109 : vector<6x128xf32>
    %111 = vector.shape_cast %110 : vector<6x128xf32> to vector<2x384xf32>
    %112 = arith.truncf %111 : vector<2x384xf32> to vector<2x384xbf16>
    %c0_52 = arith.constant 0 : index
    %c0_53 = arith.constant 0 : index
    %113 = vector.load %arg13[%c0_52, %c0_53] : memref<384x6xbf16, #tpu.memory_space<vmem>>, vector<384x6xbf16>
    %cst_54 = arith.constant dense<0.000000e+00> : vector<2x6xf32>
    %114 = tpu.matmul %112, %113, %cst_54 {dimension_numbers = #tpu.dot_dimension_numbers<[1], [0], [0], [1], [0, 0, 1, 1], [], []>} : vector<2x384xbf16>, vector<384x6xbf16>, vector<2x6xf32> -> vector<2x6xf32>
    %c0_55 = arith.constant 0 : index
    %c0_56 = arith.constant 0 : index
    %115 = vector.load %arg14[%c0_55, %c0_56] : memref<1x6xf32, #tpu.memory_space<vmem>>, vector<1x6xf32>
    %116 = vector.broadcast %115 : vector<1x6xf32> to vector<2x6xf32>
    %117 = arith.addf %114, %116 : vector<2x6xf32>
    %c0_57 = arith.constant 0 : index
    %c0_58 = arith.constant 0 : index
    %118 = vector.load %arg15[%c0_57, %c0_58] : memref<2x6xf32, #tpu.memory_space<vmem>>, vector<2x6xf32>
    tpu.vector_store %arg15[%c0_57, %c0_58], %117 {strides = array<i32>} : memref<2x6xf32, #tpu.memory_space<vmem>>, vector<2x6xf32>,
    return
  }
  func.func @transform_0(%arg0: i32) -> (i32, i32, i32) {
    %c0_i32 = arith.constant 0 : i32
    %c0_i32_0 = arith.constant 0 : i32
    %c0_i32_1 = arith.constant 0 : i32
    return %arg0, %c0_i32, %c0_i32_0 : i32, i32, i32
  }
  func.func @transform_1(%arg0: i32) -> (i32, i32) {
    %c0_i32 = arith.constant 0 : i32
    %c0_i32_0 = arith.constant 0 : i32
    %c0_i32_1 = arith.constant 0 : i32
    return %c0_i32, %c0_i32_0 : i32, i32
  }
  func.func @transform_2(%arg0: i32) -> (i32, i32) {
    %c0_i32 = arith.constant 0 : i32
    %c0_i32_0 = arith.constant 0 : i32
    %c0_i32_1 = arith.constant 0 : i32
    return %c0_i32, %c0_i32_0 : i32, i32
  }
  func.func @transform_3(%arg0: i32) -> (i32, i32) {
    %c0_i32 = arith.constant 0 : i32
    %c0_i32_0 = arith.constant 0 : i32
    %c0_i32_1 = arith.constant 0 : i32
    return %c0_i32, %c0_i32_0 : i32, i32
  }
  func.func @transform_4(%arg0: i32) -> (i32, i32) {
    %c0_i32 = arith.constant 0 : i32
    %c0_i32_0 = arith.constant 0 : i32
    %c0_i32_1 = arith.constant 0 : i32
    return %c0_i32, %c0_i32_0 : i32, i32
  }
  func.func @transform_5(%arg0: i32) -> (i32, i32) {
    %c0_i32 = arith.constant 0 : i32
    %c0_i32_0 = arith.constant 0 : i32
    %c0_i32_1 = arith.constant 0 : i32
    return %c0_i32, %c0_i32_0 : i32, i32
  }
  func.func @transform_6(%arg0: i32) -> (i32, i32) {
    %c0_i32 = arith.constant 0 : i32
    %c0_i32_0 = arith.constant 0 : i32
    %c0_i32_1 = arith.constant 0 : i32
    return %c0_i32, %c0_i32_0 : i32, i32
  }
  func.func @transform_7(%arg0: i32) -> (i32, i32, i32) {
    %c0_i32 = arith.constant 0 : i32
    %c0_i32_0 = arith.constant 0 : i32
    %c0_i32_1 = arith.constant 0 : i32
    %c0_i32_2 = arith.constant 0 : i32
    return %c0_i32, %c0_i32_0, %c0_i32_1 : i32, i32, i32
  }
  func.func @transform_8(%arg0: i32) -> (i32, i32) {
    %c0_i32 = arith.constant 0 : i32
    %c0_i32_0 = arith.constant 0 : i32
    %c0_i32_1 = arith.constant 0 : i32
    return %c0_i32, %c0_i32_0 : i32, i32
  }
  func.func @transform_9(%arg0: i32) -> (i32, i32) {
    %c0_i32 = arith.constant 0 : i32
    %c0_i32_0 = arith.constant 0 : i32
    %c0_i32_1 = arith.constant 0 : i32
    return %c0_i32, %c0_i32_0 : i32, i32
  }
  func.func @transform_10(%arg0: i32) -> (i32, i32) {
    %c0_i32 = arith.constant 0 : i32
    %c0_i32_0 = arith.constant 0 : i32
    %c0_i32_1 = arith.constant 0 : i32
    return %c0_i32, %c0_i32_0 : i32, i32
  }
  func.func @transform_11(%arg0: i32) -> (i32, i32) {
    %c0_i32 = arith.constant 0 : i32
    %c0_i32_0 = arith.constant 0 : i32
    %c0_i32_1 = arith.constant 0 : i32
    return %c0_i32, %c0_i32_0 : i32, i32
  }
  func.func @transform_12(%arg0: i32) -> (i32, i32) {
    %c0_i32 = arith.constant 0 : i32
    %c0_i32_0 = arith.constant 0 : i32
    %c0_i32_1 = arith.constant 0 : i32
    return %c0_i32, %c0_i32_0 : i32, i32
  }
  func.func @transform_13(%arg0: i32) -> (i32, i32) {
    %c0_i32 = arith.constant 0 : i32
    %c0_i32_0 = arith.constant 0 : i32
    %c0_i32_1 = arith.constant 0 : i32
    return %c0_i32, %c0_i32_0 : i32, i32
  }
  func.func @transform_14(%arg0: i32) -> (i32, i32) {
    %c0_i32 = arith.constant 0 : i32
    %c0_i32_0 = arith.constant 0 : i32
    return %arg0, %c0_i32 : i32, i32
  }
}

</mosaic_0001>

<llo_original>
// kernel: vcopn_attention_forward.1
$region0: #{vcopn_attention_forward.1}
  #allocation0 [shape = 'u32[]', space=smem, size = 0x4, offset = 0x4, fixed_abs, tag = 'smem constant byte address 0x4 - core index']
  #allocation1 [shape = 'u32[144,128]{1,0:T(1,128)}', space=vmem, size = 0x12000, scoped, tag = 'internal scratch']
  %s0 = inlined_call_operand.vmem [shape: f32[2,3,3072], index: 0, kind: input, shape index: {}]
  %s1 = inlined_call_operand.vmem [shape: bf16[3072,128], index: 1, kind: input, shape index: {}]
  %s2 = inlined_call_operand.vmem [shape: f32[1,128], index: 2, kind: input, shape index: {}]
  %s3 = inlined_call_operand.hbm [shape: bf16[128,384], index: 3, kind: input, shape index: {}]
  %s4 = inlined_call_operand.vmem [shape: f32[1,384], index: 4, kind: input, shape index: {}]
  %s5 = inlined_call_operand.hbm [shape: bf16[128,128], index: 5, kind: input, shape index: {}]
  %s6 = inlined_call_operand.vmem [shape: f32[1,128], index: 6, kind: input, shape index: {}]
  %s7 = inlined_call_operand.vmem [shape: f32[4,1,128], index: 7, kind: input, shape index: {}]
  %s8 = inlined_call_operand.hbm [shape: bf16[128,256], index: 8, kind: input, shape index: {}]
  %s9 = inlined_call_operand.vmem [shape: f32[1,256], index: 9, kind: input, shape index: {}]
  %s10 = inlined_call_operand.hbm [shape: bf16[256,128], index: 10, kind: input, shape index: {}]
  %s11 = inlined_call_operand.vmem [shape: f32[1,128], index: 11, kind: input, shape index: {}]
  %s12 = inlined_call_operand.vmem [shape: bf16[384,6], index: 12, kind: input, shape index: {}]
  %s13 = inlined_call_operand.vmem [shape: f32[1,6], index: 13, kind: input, shape index: {}]
  %s14 = inlined_call_operand.hbm [shape: f32[2,6], index: 14, kind: output, shape index: {}]
  %s15 = sld [smem:[#allocation0]]
  $region82: #{vcopn_attention_forward.1} parent=0
    _
  %s17 = ssub.s32 1, %s15
  %s18 = scalar_select 0, %s17, %s15
  $region1: #{vcopn_attention_forward.1} parent=0
    #allocation2 [shape = 'u8[98304]{0}', space=vmem, size = 0x18000, scoped, tag = 'input window, operand 3, single buffered']
    #allocation3 [shape = 's32[1]{0}', space=sflag, size = 0x4, scoped, tag = 'scoped memory for vcopn_attention_forward.1']
    #allocation4 [shape = 's32[1]{0}', space=sflag, size = 0x4, scoped, tag = 'scoped memory for vcopn_attention_forward.1']
    #allocation5 [shape = 'u8[32768]{0}', space=vmem, size = 0x8000, scoped, tag = 'input window, operand 5, single buffered']
    #allocation6 [shape = 's32[1]{0}', space=sflag, size = 0x4, scoped, tag = 'scoped memory for vcopn_attention_forward.1']
    #allocation7 [shape = 'u8[65536]{0}', space=vmem, size = 0x10000, scoped, tag = 'input window, operand 8, single buffered']
    #allocation8 [shape = 'u8[65536]{0}', space=vmem, size = 0x10000, scoped, tag = 'input window, operand 10, single buffered']
    #allocation9 [shape = 's32[1]{0}', space=sflag, size = 0x4, scoped, tag = 'scoped memory for vcopn_attention_forward.1']
    #allocation10 [shape = 'u8[1024]{0}', space=vmem, size = 0x400, scoped, tag = 'output window, operand 0, single buffered']
    %19 = vsyncpa [#allocation3], 0
    %20 = vsyncpa [#allocation6], 0
    %21 = vsyncpa [#allocation9], 0
    %22 = vsyncpa [#allocation4], 0
    // Predicated region
    $region2: #{vcopn_attention_forward.1} parent=1 // pred_check
      _
    $region3: #{vcopn_attention_forward.1} parent=1 // pred_check_branch
      %24 = sbr.rel (0) target = $region5
    $region4: #{vcopn_attention_forward.1} parent=1 // pred_region
      _
    $region5: #{vcopn_attention_forward.1} parent=1 // pred_fallthru
      _
    // Predicated region
    $region6: #{vcopn_attention_forward.1} parent=1 // pred_check
      _
    $region7: #{vcopn_attention_forward.1} parent=1 // pred_check_branch
      %26 = sbr.rel (0) target = $region9
    $region8: #{vcopn_attention_forward.1} parent=1 // pred_region
      _
    $region9: #{vcopn_attention_forward.1} parent=1 // pred_fallthru
      _
    // Predicated region
    $region10: #{vcopn_attention_forward.1} parent=1 // pred_check
      _
    $region11: #{vcopn_attention_forward.1} parent=1 // pred_check_branch
      %28 = sbr.rel (0) target = $region13
    $region12: #{vcopn_attention_forward.1} parent=1 // pred_region
      _
    $region13: #{vcopn_attention_forward.1} parent=1 // pred_fallthru
      _
    // Predicated region
    $region14: #{vcopn_attention_forward.1} parent=1 // pred_check
      _
    $region15: #{vcopn_attention_forward.1} parent=1 // pred_check_branch
      %30 = sbr.rel (0) target = $region17
    $region16: #{vcopn_attention_forward.1} parent=1 // pred_region
      %s32 = ssub.s32 3072, 3072
      %33 = vsyncadd [#allocation3], %s32
      %s34 = sshll.u32 [#allocation2], 4
      %s35 = int_to_ptr.vmem [resolvable:$true] %s34
      %40 = dma.hbm_to_vmem [thread:$0]  %s3, 3072, %s35, [#allocation3], 192, 192, 12
    $region17: #{vcopn_attention_forward.1} parent=1 // pred_fallthru
      _
    // Predicated region
    $region18: #{vcopn_attention_forward.1} parent=1 // pred_check
      _
    $region19: #{vcopn_attention_forward.1} parent=1 // pred_check_branch
      %42 = sbr.rel (0) target = $region21
    $region20: #{vcopn_attention_forward.1} parent=1 // pred_region
      _
    $region21: #{vcopn_attention_forward.1} parent=1 // pred_fallthru
      _
    // Predicated region
    $region22: #{vcopn_attention_forward.1} parent=1 // pred_check
      _
    $region23: #{vcopn_attention_forward.1} parent=1 // pred_check_branch
      %44 = sbr.rel (0) target = $region25
    $region24: #{vcopn_attention_forward.1} parent=1 // pred_region
      %s46 = ssub.s32 1024, 1024
      %47 = vsyncadd [#allocation6], %s46
      %s48 = sshll.u32 [#allocation5], 4
      %s49 = int_to_ptr.vmem [resolvable:$true] %s48
      %54 = dma.hbm_to_vmem [thread:$0]  %s5, 1024, %s49, [#allocation6], 64, 64, 4
    $region25: #{vcopn_attention_forward.1} parent=1 // pred_fallthru
      _
    // Predicated region
    $region26: #{vcopn_attention_forward.1} parent=1 // pred_check
      _
    $region27: #{vcopn_attention_forward.1} parent=1 // pred_check_branch
      %56 = sbr.rel (0) target = $region29
    $region28: #{vcopn_attention_forward.1} parent=1 // pred_region
      _
    $region29: #{vcopn_attention_forward.1} parent=1 // pred_fallthru
      _
    // Predicated region
    $region30: #{vcopn_attention_forward.1} parent=1 // pred_check
      _
    $region31: #{vcopn_attention_forward.1} parent=1 // pred_check_branch
      %58 = sbr.rel (0) target = $region33
    $region32: #{vcopn_attention_forward.1} parent=1 // pred_region
      _
    $region33: #{vcopn_attention_forward.1} parent=1 // pred_fallthru
      _
    // Predicated region
    $region34: #{vcopn_attention_forward.1} parent=1 // pred_check
      _
    $region35: #{vcopn_attention_forward.1} parent=1 // pred_check_branch
      %60 = sbr.rel (0) target = $region37
    $region36: #{vcopn_attention_forward.1} parent=1 // pred_region
      %s62 = ssub.s32 2048, 2048
      %63 = vsyncadd [#allocation6], %s62
      %s64 = sshll.u32 [#allocation7], 4
      %s65 = int_to_ptr.vmem [resolvable:$true] %s64
      %70 = dma.hbm_to_vmem [thread:$0]  %s8, 2048, %s65, [#allocation6], 128, 128, 8
    $region37: #{vcopn_attention_forward.1} parent=1 // pred_fallthru
      _
    // Predicated region
    $region38: #{vcopn_attention_forward.1} parent=1 // pred_check
      _
    $region39: #{vcopn_attention_forward.1} parent=1 // pred_check_branch
      %72 = sbr.rel (0) target = $region41
    $region40: #{vcopn_attention_forward.1} parent=1 // pred_region
      _
    $region41: #{vcopn_attention_forward.1} parent=1 // pred_fallthru
      _
    // Predicated region
    $region42: #{vcopn_attention_forward.1} parent=1 // pred_check
      _
    $region43: #{vcopn_attention_forward.1} parent=1 // pred_check_branch
      %74 = sbr.rel (0) target = $region45
    $region44: #{vcopn_attention_forward.1} parent=1 // pred_region
      %s76 = ssub.s32 2048, 2048
      %77 = vsyncadd [#allocation9], %s76
      %s78 = sshll.u32 [#allocation8], 4
      %s79 = int_to_ptr.vmem [resolvable:$true] %s78
      %84 = dma.hbm_to_vmem [thread:$0]  %s10, 2048, %s79, [#allocation9], 64, 64, 4
    $region45: #{vcopn_attention_forward.1} parent=1 // pred_fallthru
      _
    // Predicated region
    $region46: #{vcopn_attention_forward.1} parent=1 // pred_check
      _
    $region47: #{vcopn_attention_forward.1} parent=1 // pred_check_branch
      %86 = sbr.rel (0) target = $region49
    $region48: #{vcopn_attention_forward.1} parent=1 // pred_region
      _
    $region49: #{vcopn_attention_forward.1} parent=1 // pred_fallthru
      _
    // Predicated region
    $region50: #{vcopn_attention_forward.1} parent=1 // pred_check
      _
    $region51: #{vcopn_attention_forward.1} parent=1 // pred_check_branch
      %88 = sbr.rel (0) target = $region53
    $region52: #{vcopn_attention_forward.1} parent=1 // pred_region
      _
    $region53: #{vcopn_attention_forward.1} parent=1 // pred_fallthru
      _
    // Predicated region
    $region54: #{vcopn_attention_forward.1} parent=1 // pred_check
      _
    $region55: #{vcopn_attention_forward.1} parent=1 // pred_check_branch
      %90 = sbr.rel (0) target = $region57
    $region56: #{vcopn_attention_forward.1} parent=1 // pred_region
      _
    $region57: #{vcopn_attention_forward.1} parent=1 // pred_fallthru
      _
    // Predicated region
    $region58: #{vcopn_attention_forward.1} parent=1 // pred_check
      _
    $region59: #{vcopn_attention_forward.1} parent=1 // pred_check_branch
      %92 = sbr.rel (0) target = $region61
    $region60: #{vcopn_attention_forward.1} parent=1 // pred_region
      %93 = dma.done [#allocation3], 3072
    $region61: #{vcopn_attention_forward.1} parent=1 // pred_fallthru
      _
    // Predicated region
    $region62: #{vcopn_attention_forward.1} parent=1 // pred_check
      _
    $region63: #{vcopn_attention_forward.1} parent=1 // pred_check_branch
      %95 = sbr.rel (0) target = $region65
    $region64: #{vcopn_attention_forward.1} parent=1 // pred_region
      %96 = dma.done [#allocation6], 1024
    $region65: #{vcopn_attention_forward.1} parent=1 // pred_fallthru
      _
    // Predicated region
    $region66: #{vcopn_attention_forward.1} parent=1 // pred_check
      _
    $region67: #{vcopn_attention_forward.1} parent=1 // pred_check_branch
      %98 = sbr.rel (0) target = $region69
    $region68: #{vcopn_attention_forward.1} parent=1 // pred_region
      %99 = dma.done [#allocation6], 2048
    $region69: #{vcopn_attention_forward.1} parent=1 // pred_fallthru
      _
    // Predicated region
    $region70: #{vcopn_attention_forward.1} parent=1 // pred_check
      _
    $region71: #{vcopn_attention_forward.1} parent=1 // pred_check_branch
      %101 = sbr.rel (0) target = $region73
    $region72: #{vcopn_attention_forward.1} parent=1 // pred_region
      %102 = dma.done [#allocation9], 2048
    $region73: #{vcopn_attention_forward.1} parent=1 // pred_fallthru
      _
    %v104 = vld [vmem:[%s0] sm:$0x77]
    %v105 = vld [vmem:[%s0 + $0x8] sm:$0x77]
    %v106 = vld [vmem:[%s0 + $0x10] sm:$0x77]
    %v107 = vld [vmem:[%s0 + $0x18] sm:$0x77]
    %v108 = vld [vmem:[%s0 + $0x20] sm:$0x77]
    %v109 = vld [vmem:[%s0 + $0x28] sm:$0x77]
    %v110 = vld [vmem:[%s0 + $0x30] sm:$0x77]
    %v111 = vld [vmem:[%s0 + $0x38] sm:$0x77]
    %v112 = vld [vmem:[%s0 + $0x40] sm:$0x77]
    %v113 = vld [vmem:[%s0 + $0x48] sm:$0x77]
    %v114 = vld [vmem:[%s0 + $0x50] sm:$0x77]
    %v115 = vld [vmem:[%s0 + $0x58] sm:$0x77]
    %v116 = vld [vmem:[%s0 + $0x60] sm:$0x77]
    %v117 = vld [vmem:[%s0 + $0x68] sm:$0x77]
    %v118 = vld [vmem:[%s0 + $0x70] sm:$0x77]
    %v119 = vld [vmem:[%s0 + $0x78] sm:$0x77]
    %v120 = vld [vmem:[%s0 + $0x80] sm:$0x77]
    %v121 = vld [vmem:[%s0 + $0x88] sm:$0x77]
    %v122 = vld [vmem:[%s0 + $0x90] sm:$0x77]
    %v123 = vld [vmem:[%s0 + $0x98] sm:$0x77]
    %v124 = vld [vmem:[%s0 + $0xa0] sm:$0x77]
    %v125 = vld [vmem:[%s0 + $0xa8] sm:$0x77]
    %v126 = vld [vmem:[%s0 + $0xb0] sm:$0x77]
    %v127 = vld [vmem:[%s0 + $0xb8] sm:$0x77]
    %v153 = vunpack.c.l.s4 1966171168
    %v154 = vunpack.c.0.s8 %v153
    %v155 = vlaneseq
    %v156 = vshrl.u32 %v155, 7
    %v157 = vsub.s32 %v154, %v156
    %v158 = vrot.slane %v104, %v157
    %v160 = vunpack.c.l.s4 1966171168
    %v161 = vunpack.c.0.s8 %v160
    %v162 = vlaneseq
    %v163 = vshrl.u32 %v162, 7
    %v164 = vsub.s32 %v161, %v163
    %v165 = vrot.slane %v105, %v164
    %v167 = vunpack.c.l.s4 1966171168
    %v168 = vunpack.c.0.s8 %v167
    %v169 = vlaneseq
    %v170 = vshrl.u32 %v169, 7
    %v171 = vsub.s32 %v168, %v170
    %v172 = vrot.slane %v106, %v171
    %v174 = vunpack.c.l.s4 1966171168
    %v175 = vunpack.c.0.s8 %v174
    %v176 = vlaneseq
    %v177 = vshrl.u32 %v176, 7
    %v178 = vsub.s32 %v175, %v177
    %v179 = vrot.slane %v107, %v178
    %v180 = vcombine.low %v158, %v165
    %v181 = vcombine.high %v158, %v165
    %v182 = vcombine.low %v172, %v179
    %v183 = vcombine.high %v172, %v179
    %v185 = vunpack.c.l.s4 1966171168
    %v186 = vunpack.c.0.s8 %v185
    %v187 = vlaneseq
    %v188 = vshrl.u32 %v187, 7
    %v189 = vsub.s32 %v186, %v188
    %v190 = vrot.slane %v180, %v189
    %v192 = vunpack.c.l.s4 1966171168
    %v193 = vunpack.c.0.s8 %v192
    %v194 = vlaneseq
    %v195 = vshrl.u32 %v194, 7
    %v196 = vsub.s32 %v193, %v195
    %v197 = vrot.slane %v181, %v196
    %v199 = vunpack.c.l.s4 1966171168
    %v200 = vunpack.c.0.s8 %v199
    %v201 = vlaneseq
    %v202 = vshrl.u32 %v201, 7
    %v203 = vsub.s32 %v200, %v202
    %v204 = vrot.slane %v182, %v203
    %v206 = vunpack.c.l.s4 1966171168
    %v207 = vunpack.c.0.s8 %v206
    %v208 = vlaneseq
    %v209 = vshrl.u32 %v208, 7
    %v210 = vsub.s32 %v207, %v209
    %v211 = vrot.slane %v183, %v210
    %v212 = vcombine.low %v190, %v204
    %v213 = vcombine.high %v190, %v204
    %v214 = vcombine.low %v197, %v211
    %v216 = vunpack.c.l.s4 1966171168
    %v217 = vunpack.c.0.s8 %v216
    %v218 = vlaneseq
    %v219 = vshrl.u32 %v218, 7
    %v220 = vsub.s32 %v217, %v219
    %v221 = vrot.slane %v108, %v220
    %v223 = vunpack.c.l.s4 1966171168
    %v224 = vunpack.c.0.s8 %v223
    %v225 = vlaneseq
    %v226 = vshrl.u32 %v225, 7
    %v227 = vsub.s32 %v224, %v226
    %v228 = vrot.slane %v109, %v227
    %v230 = vunpack.c.l.s4 1966171168
    %v231 = vunpack.c.0.s8 %v230
    %v232 = vlaneseq
    %v233 = vshrl.u32 %v232, 7
    %v234 = vsub.s32 %v231, %v233
    %v235 = vrot.slane %v110, %v234
    %v237 = vunpack.c.l.s4 1966171168
    %v238 = vunpack.c.0.s8 %v237
    %v239 = vlaneseq
    %v240 = vshrl.u32 %v239, 7
    %v241 = vsub.s32 %v238, %v240
    %v242 = vrot.slane %v111, %v241
    %v243 = vcombine.low %v221, %v228
    %v244 = vcombine.high %v221, %v228
    %v245 = vcombine.low %v235, %v242
    %v246 = vcombine.high %v235, %v242
    %v248 = vunpack.c.l.s4 1966171168
    %v249 = vunpack.c.0.s8 %v248
    %v250 = vlaneseq
    %v251 = vshrl.u32 %v250, 7
    %v252 = vsub.s32 %v249, %v251
    %v253 = vrot.slane %v243, %v252
    %v255 = vunpack.c.l.s4 1966171168
    %v256 = vunpack.c.0.s8 %v255
    %v257 = vlaneseq
    %v258 = vshrl.u32 %v257, 7
    %v259 = vsub.s32 %v256, %v258
    %v260 = vrot.slane %v244, %v259
    %v262 = vunpack.c.l.s4 1966171168
    %v263 = vunpack.c.0.s8 %v262
    %v264 = vlaneseq
    %v265 = vshrl.u32 %v264, 7
    %v266 = vsub.s32 %v263, %v265
    %v267 = vrot.slane %v245, %v266
    %v269 = vunpack.c.l.s4 1966171168
    %v270 = vunpack.c.0.s8 %v269
    %v271 = vlaneseq
    %v272 = vshrl.u32 %v271, 7
    %v273 = vsub.s32 %v270, %v272
    %v274 = vrot.slane %v246, %v273
    %v275 = vcombine.low %v253, %v267
    %v276 = vcombine.high %v253, %v267
    %v277 = vcombine.low %v260, %v274
    %v279 = vunpack.c.l.s4 1966171168
    %v280 = vunpack.c.0.s8 %v279
    %v281 = vlaneseq
    %v282 = vshrl.u32 %v281, 7
    %v283 = vsub.s32 %v280, %v282
    %v284 = vrot.slane %v112, %v283
    %v286 = vunpack.c.l.s4 1966171168
    %v287 = vunpack.c.0.s8 %v286
    %v288 = vlaneseq
    %v289 = vshrl.u32 %v288, 7
    %v290 = vsub.s32 %v287, %v289
    %v291 = vrot.slane %v113, %v290
    %v293 = vunpack.c.l.s4 1966171168
    %v294 = vunpack.c.0.s8 %v293
    %v295 = vlaneseq
    %v296 = vshrl.u32 %v295, 7
    %v297 = vsub.s32 %v294, %v296
    %v298 = vrot.slane %v114, %v297
    %v300 = vunpack.c.l.s4 1966171168
    %v301 = vunpack.c.0.s8 %v300
    %v302 = vlaneseq
    %v303 = vshrl.u32 %v302, 7
    %v304 = vsub.s32 %v301, %v303
    %v305 = vrot.slane %v115, %v304
    %v306 = vcombine.low %v284, %v291
    %v307 = vcombine.high %v284, %v291
    %v308 = vcombine.low %v298, %v305
    %v309 = vcombine.high %v298, %v305
    %v311 = vunpack.c.l.s4 1966171168
    %v312 = vunpack.c.0.s8 %v311
    %v313 = vlaneseq
    %v314 = vshrl.u32 %v313, 7
    %v315 = vsub.s32 %v312, %v314
    %v316 = vrot.slane %v306, %v315
    %v318 = vunpack.c.l.s4 1966171168
    %v319 = vunpack.c.0.s8 %v318
    %v320 = vlaneseq
    %v321 = vshrl.u32 %v320, 7
    %v322 = vsub.s32 %v319, %v321
    %v323 = vrot.slane %v307, %v322
    %v325 = vunpack.c.l.s4 1966171168
    %v326 = vunpack.c.0.s8 %v325
    %v327 = vlaneseq
    %v328 = vshrl.u32 %v327, 7
    %v329 = vsub.s32 %v326, %v328
    %v330 = vrot.slane %v308, %v329
    %v332 = vunpack.c.l.s4 1966171168
    %v333 = vunpack.c.0.s8 %v332
    %v334 = vlaneseq
    %v335 = vshrl.u32 %v334, 7
    %v336 = vsub.s32 %v333, %v335
    %v337 = vrot.slane %v309, %v336
    %v338 = vcombine.low %v316, %v330
    %v339 = vcombine.high %v316, %v330
    %v340 = vcombine.low %v323, %v337
    %v342 = vunpack.c.l.s4 1966171168
    %v343 = vunpack.c.0.s8 %v342
    %v344 = vlaneseq
    %v345 = vshrl.u32 %v344, 7
    %v346 = vsub.s32 %v343, %v345
    %v347 = vrot.slane %v116, %v346
    %v349 = vunpack.c.l.s4 1966171168
    %v350 = vunpack.c.0.s8 %v349
    %v351 = vlaneseq
    %v352 = vshrl.u32 %v351, 7
    %v353 = vsub.s32 %v350, %v352
    %v354 = vrot.slane %v117, %v353
    %v356 = vunpack.c.l.s4 1966171168
    %v357 = vunpack.c.0.s8 %v356
    %v358 = vlaneseq
    %v359 = vshrl.u32 %v358, 7
    %v360 = vsub.s32 %v357, %v359
    %v361 = vrot.slane %v118, %v360
    %v363 = vunpack.c.l.s4 1966171168
    %v364 = vunpack.c.0.s8 %v363
    %v365 = vlaneseq
    %v366 = vshrl.u32 %v365, 7
    %v367 = vsub.s32 %v364, %v366
    %v368 = vrot.slane %v119, %v367
    %v369 = vcombine.low %v347, %v354
    %v370 = vcombine.high %v347, %v354
    %v371 = vcombine.low %v361, %v368
    %v372 = vcombine.high %v361, %v368
    %v374 = vunpack.c.l.s4 1966171168
    %v375 = vunpack.c.0.s8 %v374
    %v376 = vlaneseq
    %v377 = vshrl.u32 %v376, 7
    %v378 = vsub.s32 %v375, %v377
    %v379 = vrot.slane %v369, %v378
    %v381 = vunpack.c.l.s4 1966171168
    %v382 = vunpack.c.0.s8 %v381
    %v383 = vlaneseq
    %v384 = vshrl.u32 %v383, 7
    %v385 = vsub.s32 %v382, %v384
    %v386 = vrot.slane %v370, %v385
    %v388 = vunpack.c.l.s4 1966171168
    %v389 = vunpack.c.0.s8 %v388
    %v390 = vlaneseq
    %v391 = vshrl.u32 %v390, 7
    %v392 = vsub.s32 %v389, %v391
    %v393 = vrot.slane %v371, %v392
    %v395 = vunpack.c.l.s4 1966171168
    %v396 = vunpack.c.0.s8 %v395
    %v397 = vlaneseq
    %v398 = vshrl.u32 %v397, 7
    %v399 = vsub.s32 %v396, %v398
    %v400 = vrot.slane %v372, %v399
    %v401 = vcombine.low %v379, %v393
    %v402 = vcombine.high %v379, %v393
    %v403 = vcombine.low %v386, %v400
    %v405 = vunpack.c.l.s4 1966171168
    %v406 = vunpack.c.0.s8 %v405
    %v407 = vlaneseq
    %v408 = vshrl.u32 %v407, 7
    %v409 = vsub.s32 %v406, %v408
    %v410 = vrot.slane %v120, %v409
    %v412 = vunpack.c.l.s4 1966171168
    %v413 = vunpack.c.0.s8 %v412
    %v414 = vlaneseq
    %v415 = vshrl.u32 %v414, 7
    %v416 = vsub.s32 %v413, %v415
    %v417 = vrot.slane %v121, %v416
    %v419 = vunpack.c.l.s4 1966171168
    %v420 = vunpack.c.0.s8 %v419
    %v421 = vlaneseq
    %v422 = vshrl.u32 %v421, 7
    %v423 = vsub.s32 %v420, %v422
    %v424 = vrot.slane %v122, %v423
    %v426 = vunpack.c.l.s4 1966171168
    %v427 = vunpack.c.0.s8 %v426
    %v428 = vlaneseq
    %v429 = vshrl.u32 %v428, 7
    %v430 = vsub.s32 %v427, %v429
    %v431 = vrot.slane %v123, %v430
    %v432 = vcombine.low %v410, %v417
    %v433 = vcombine.high %v410, %v417
    %v434 = vcombine.low %v424, %v431
    %v435 = vcombine.high %v424, %v431
    %v437 = vunpack.c.l.s4 1966171168
    %v438 = vunpack.c.0.s8 %v437
    %v439 = vlaneseq
    %v440 = vshrl.u32 %v439, 7
    %v441 = vsub.s32 %v438, %v440
    %v442 = vrot.slane %v432, %v441
    %v444 = vunpack.c.l.s4 1966171168
    %v445 = vunpack.c.0.s8 %v444
    %v446 = vlaneseq
    %v447 = vshrl.u32 %v446, 7
    %v448 = vsub.s32 %v445, %v447
    %v449 = vrot.slane %v433, %v448
    %v451 = vunpack.c.l.s4 1966171168
    %v452 = vunpack.c.0.s8 %v451
    %v453 = vlaneseq
    %v454 = vshrl.u32 %v453, 7
    %v455 = vsub.s32 %v452, %v454
    %v456 = vrot.slane %v434, %v455
    %v458 = vunpack.c.l.s4 1966171168
    %v459 = vunpack.c.0.s8 %v458
    %v460 = vlaneseq
    %v461 = vshrl.u32 %v460, 7
    %v462 = vsub.s32 %v459, %v461
    %v463 = vrot.slane %v435, %v462
    %v464 = vcombine.low %v442, %v456
    %v465 = vcombine.high %v442, %v456
    %v466 = vcombine.low %v449, %v463
    %v468 = vunpack.c.l.s4 1966171168
    %v469 = vunpack.c.0.s8 %v468
    %v470 = vlaneseq
    %v471 = vshrl.u32 %v470, 7
    %v472 = vsub.s32 %v469, %v471
    %v473 = vrot.slane %v124, %v472
    %v475 = vunpack.c.l.s4 1966171168
    %v476 = vunpack.c.0.s8 %v475
    %v477 = vlaneseq
    %v478 = vshrl.u32 %v477, 7
    %v479 = vsub.s32 %v476, %v478
    %v480 = vrot.slane %v125, %v479
    %v482 = vunpack.c.l.s4 1966171168
    %v483 = vunpack.c.0.s8 %v482
    %v484 = vlaneseq
    %v485 = vshrl.u32 %v484, 7
    %v486 = vsub.s32 %v483, %v485
    %v487 = vrot.slane %v126, %v486
    %v489 = vunpack.c.l.s4 1966171168
    %v490 = vunpack.c.0.s8 %v489
    %v491 = vlaneseq
    %v492 = vshrl.u32 %v491, 7
    %v493 = vsub.s32 %v490, %v492
    %v494 = vrot.slane %v127, %v493
    %v495 = vcombine.low %v473, %v480
    %v496 = vcombine.high %v473, %v480
    %v497 = vcombine.low %v487, %v494
    %v498 = vcombine.high %v487, %v494
    %v500 = vunpack.c.l.s4 1966171168
    %v501 = vunpack.c.0.s8 %v500
    %v502 = vlaneseq
    %v503 = vshrl.u32 %v502, 7
    %v504 = vsub.s32 %v501, %v503
    %v505 = vrot.slane %v495, %v504
    %v507 = vunpack.c.l.s4 1966171168
    %v508 = vunpack.c.0.s8 %v507
    %v509 = vlaneseq
    %v510 = vshrl.u32 %v509, 7
    %v511 = vsub.s32 %v508, %v510
    %v512 = vrot.slane %v496, %v511
    %v514 = vunpack.c.l.s4 1966171168
    %v515 = vunpack.c.0.s8 %v514
    %v516 = vlaneseq
    %v517 = vshrl.u32 %v516, 7
    %v518 = vsub.s32 %v515, %v517
    %v519 = vrot.slane %v497, %v518
    %v521 = vunpack.c.l.s4 1966171168
    %v522 = vunpack.c.0.s8 %v521
    %v523 = vlaneseq
    %v524 = vshrl.u32 %v523, 7
    %v525 = vsub.s32 %v522, %v524
    %v526 = vrot.slane %v498, %v525
    %v527 = vcombine.low %v505, %v519
    %v528 = vcombine.high %v505, %v519
    %v529 = vcombine.low %v512, %v526
    %v530 = vcombine.low %v212, %v214
    %v531 = vcombine.high %v212, %v214
    %v532 = vcombine.low %v213, %v401
    %v533 = vcombine.high %v213, %v401
    %v534 = vcombine.low %v403, %v402
    %v535 = vcombine.high %v403, %v402
    %v537 = vunpack.c.l.s4 1966171168
    %v538 = vunpack.c.0.s8 %v537
    %v539 = vlaneseq
    %v540 = vshrl.u32 %v539, 7
    %v541 = vsub.s32 %v538, %v540
    %v542 = vrot.slane %v530, %v541
    %v544 = vunpack.c.l.s4 1966171168
    %v545 = vunpack.c.0.s8 %v544
    %v546 = vlaneseq
    %v547 = vshrl.u32 %v546, 7
    %v548 = vsub.s32 %v545, %v547
    %v549 = vrot.slane %v531, %v548
    %v551 = vunpack.c.l.s4 1966171168
    %v552 = vunpack.c.0.s8 %v551
    %v553 = vlaneseq
    %v554 = vshrl.u32 %v553, 7
    %v555 = vsub.s32 %v552, %v554
    %v556 = vrot.slane %v532, %v555
    %v558 = vunpack.c.l.s4 1966171168
    %v559 = vunpack.c.0.s8 %v558
    %v560 = vlaneseq
    %v561 = vshrl.u32 %v560, 7
    %v562 = vsub.s32 %v559, %v561
    %v563 = vrot.slane %v533, %v562
    %v565 = vunpack.c.l.s4 1966171168
    %v566 = vunpack.c.0.s8 %v565
    %v567 = vlaneseq
    %v568 = vshrl.u32 %v567, 7
    %v569 = vsub.s32 %v566, %v568
    %v570 = vrot.slane %v534, %v569
    %v572 = vunpack.c.l.s4 1966171168
    %v573 = vunpack.c.0.s8 %v572
    %v574 = vlaneseq
    %v575 = vshrl.u32 %v574, 7
    %v576 = vsub.s32 %v573, %v575
    %v577 = vrot.slane %v535, %v576
    %v578 = vcombine.low %v542, %v556
    %v579 = vcombine.high %v542, %v556
    %v580 = vcombine.low %v549, %v563
    %v581 = vcombine.high %v549, %v563
    %v582 = vcombine.high %v570, %v570
    %v583 = vcombine.high %v577, %v577
    %v585 = vunpack.c.l.s4 1966171168
    %v586 = vunpack.c.0.s8 %v585
    %v587 = vlaneseq
    %v588 = vshrl.u32 %v587, 7
    %v589 = vsub.s32 %v586, %v588
    %v590 = vrot.slane %v578, %v589
    %v592 = vunpack.c.l.s4 1966171168
    %v593 = vunpack.c.0.s8 %v592
    %v594 = vlaneseq
    %v595 = vshrl.u32 %v594, 7
    %v596 = vsub.s32 %v593, %v595
    %v597 = vrot.slane %v580, %v596
    %v599 = vunpack.c.l.s4 1966171168
    %v600 = vunpack.c.0.s8 %v599
    %v601 = vlaneseq
    %v602 = vshrl.u32 %v601, 7
    %v603 = vsub.s32 %v600, %v602
    %v604 = vrot.slane %v579, %v603
    %v606 = vunpack.c.l.s4 1966171168
    %v607 = vunpack.c.0.s8 %v606
    %v608 = vlaneseq
    %v609 = vshrl.u32 %v608, 7
    %v610 = vsub.s32 %v607, %v609
    %v611 = vrot.slane %v581, %v610
    %v613 = vunpack.c.l.s4 1966171168
    %v614 = vunpack.c.0.s8 %v613
    %v615 = vlaneseq
    %v616 = vshrl.u32 %v615, 7
    %v617 = vsub.s32 %v614, %v616
    %v618 = vrot.slane %v570, %v617
    %v620 = vunpack.c.l.s4 1966171168
    %v621 = vunpack.c.0.s8 %v620
    %v622 = vlaneseq
    %v623 = vshrl.u32 %v622, 7
    %v624 = vsub.s32 %v621, %v623
    %v625 = vrot.slane %v577, %v624
    %v627 = vunpack.c.l.s4 1966171168
    %v628 = vunpack.c.0.s8 %v627
    %v629 = vlaneseq
    %v630 = vshrl.u32 %v629, 7
    %v631 = vsub.s32 %v628, %v630
    %v632 = vrot.slane %v582, %v631
    %v634 = vunpack.c.l.s4 1966171168
    %v635 = vunpack.c.0.s8 %v634
    %v636 = vlaneseq
    %v637 = vshrl.u32 %v636, 7
    %v638 = vsub.s32 %v635, %v637
    %v639 = vrot.slane %v583, %v638
    %v640 = vcombine.low %v590, %v618
    %v641 = vcombine.high %v590, %v618
    %v642 = vcombine.low %v597, %v625
    %v643 = vcombine.high %v597, %v625
    %v644 = vcombine.low %v604, %v632
    %v645 = vcombine.high %v604, %v632
    %v646 = vcombine.low %v611, %v639
    %v647 = vcombine.high %v611, %v639
    %v648 = vcombine.low %v275, %v277
    %v649 = vcombine.high %v275, %v277
    %v650 = vcombine.low %v276, %v464
    %v651 = vcombine.high %v276, %v464
    %v652 = vcombine.low %v466, %v465
    %v653 = vcombine.high %v466, %v465
    %v655 = vunpack.c.l.s4 1966171168
    %v656 = vunpack.c.0.s8 %v655
    %v657 = vlaneseq
    %v658 = vshrl.u32 %v657, 7
    %v659 = vsub.s32 %v656, %v658
    %v660 = vrot.slane %v648, %v659
    %v662 = vunpack.c.l.s4 1966171168
    %v663 = vunpack.c.0.s8 %v662
    %v664 = vlaneseq
    %v665 = vshrl.u32 %v664, 7
    %v666 = vsub.s32 %v663, %v665
    %v667 = vrot.slane %v649, %v666
    %v669 = vunpack.c.l.s4 1966171168
    %v670 = vunpack.c.0.s8 %v669
    %v671 = vlaneseq
    %v672 = vshrl.u32 %v671, 7
    %v673 = vsub.s32 %v670, %v672
    %v674 = vrot.slane %v650, %v673
    %v676 = vunpack.c.l.s4 1966171168
    %v677 = vunpack.c.0.s8 %v676
    %v678 = vlaneseq
    %v679 = vshrl.u32 %v678, 7
    %v680 = vsub.s32 %v677, %v679
    %v681 = vrot.slane %v651, %v680
    %v683 = vunpack.c.l.s4 1966171168
    %v684 = vunpack.c.0.s8 %v683
    %v685 = vlaneseq
    %v686 = vshrl.u32 %v685, 7
    %v687 = vsub.s32 %v684, %v686
    %v688 = vrot.slane %v652, %v687
    %v690 = vunpack.c.l.s4 1966171168
    %v691 = vunpack.c.0.s8 %v690
    %v692 = vlaneseq
    %v693 = vshrl.u32 %v692, 7
    %v694 = vsub.s32 %v691, %v693
    %v695 = vrot.slane %v653, %v694
    %v696 = vcombine.low %v660, %v674
    %v697 = vcombine.high %v660, %v674
    %v698 = vcombine.low %v667, %v681
    %v699 = vcombine.high %v667, %v681
    %v700 = vcombine.high %v688, %v688
    %v701 = vcombine.high %v695, %v695
    %v703 = vunpack.c.l.s4 1966171168
    %v704 = vunpack.c.0.s8 %v703
    %v705 = vlaneseq
    %v706 = vshrl.u32 %v705, 7
    %v707 = vsub.s32 %v704, %v706
    %v708 = vrot.slane %v696, %v707
    %v710 = vunpack.c.l.s4 1966171168
    %v711 = vunpack.c.0.s8 %v710
    %v712 = vlaneseq
    %v713 = vshrl.u32 %v712, 7
    %v714 = vsub.s32 %v711, %v713
    %v715 = vrot.slane %v698, %v714
    %v717 = vunpack.c.l.s4 1966171168
    %v718 = vunpack.c.0.s8 %v717
    %v719 = vlaneseq
    %v720 = vshrl.u32 %v719, 7
    %v721 = vsub.s32 %v718, %v720
    %v722 = vrot.slane %v697, %v721
    %v724 = vunpack.c.l.s4 1966171168
    %v725 = vunpack.c.0.s8 %v724
    %v726 = vlaneseq
    %v727 = vshrl.u32 %v726, 7
    %v728 = vsub.s32 %v725, %v727
    %v729 = vrot.slane %v699, %v728
    %v731 = vunpack.c.l.s4 1966171168
    %v732 = vunpack.c.0.s8 %v731
    %v733 = vlaneseq
    %v734 = vshrl.u32 %v733, 7
    %v735 = vsub.s32 %v732, %v734
    %v736 = vrot.slane %v688, %v735
    %v738 = vunpack.c.l.s4 1966171168
    %v739 = vunpack.c.0.s8 %v738
    %v740 = vlaneseq
    %v741 = vshrl.u32 %v740, 7
    %v742 = vsub.s32 %v739, %v741
    %v743 = vrot.slane %v695, %v742
    %v745 = vunpack.c.l.s4 1966171168
    %v746 = vunpack.c.0.s8 %v745
    %v747 = vlaneseq
    %v748 = vshrl.u32 %v747, 7
    %v749 = vsub.s32 %v746, %v748
    %v750 = vrot.slane %v700, %v749
    %v752 = vunpack.c.l.s4 1966171168
    %v753 = vunpack.c.0.s8 %v752
    %v754 = vlaneseq
    %v755 = vshrl.u32 %v754, 7
    %v756 = vsub.s32 %v753, %v755
    %v757 = vrot.slane %v701, %v756
    %v758 = vcombine.low %v708, %v736
    %v759 = vcombine.high %v708, %v736
    %v760 = vcombine.low %v715, %v743
    %v761 = vcombine.high %v715, %v743
    %v762 = vcombine.low %v722, %v750
    %v763 = vcombine.high %v722, %v750
    %v764 = vcombine.low %v729, %v757
    %v765 = vcombine.high %v729, %v757
    %v766 = vcombine.low %v338, %v340
    %v767 = vcombine.high %v338, %v340
    %v768 = vcombine.low %v339, %v527
    %v769 = vcombine.high %v339, %v527
    %v770 = vcombine.low %v529, %v528
    %v771 = vcombine.high %v529, %v528
    %v773 = vunpack.c.l.s4 1966171168
    %v774 = vunpack.c.0.s8 %v773
    %v775 = vlaneseq
    %v776 = vshrl.u32 %v775, 7
    %v777 = vsub.s32 %v774, %v776
    %v778 = vrot.slane %v766, %v777
    %v780 = vunpack.c.l.s4 1966171168
    %v781 = vunpack.c.0.s8 %v780
    %v782 = vlaneseq
    %v783 = vshrl.u32 %v782, 7
    %v784 = vsub.s32 %v781, %v783
    %v785 = vrot.slane %v767, %v784
    %v787 = vunpack.c.l.s4 1966171168
    %v788 = vunpack.c.0.s8 %v787
    %v789 = vlaneseq
    %v790 = vshrl.u32 %v789, 7
    %v791 = vsub.s32 %v788, %v790
    %v792 = vrot.slane %v768, %v791
    %v794 = vunpack.c.l.s4 1966171168
    %v795 = vunpack.c.0.s8 %v794
    %v796 = vlaneseq
    %v797 = vshrl.u32 %v796, 7
    %v798 = vsub.s32 %v795, %v797
    %v799 = vrot.slane %v769, %v798
    %v801 = vunpack.c.l.s4 1966171168
    %v802 = vunpack.c.0.s8 %v801
    %v803 = vlaneseq
    %v804 = vshrl.u32 %v803, 7
    %v805 = vsub.s32 %v802, %v804
    %v806 = vrot.slane %v770, %v805
    %v808 = vunpack.c.l.s4 1966171168
    %v809 = vunpack.c.0.s8 %v808
    %v810 = vlaneseq
    %v811 = vshrl.u32 %v810, 7
    %v812 = vsub.s32 %v809, %v811
    %v813 = vrot.slane %v771, %v812
    %v814 = vcombine.low %v778, %v792
    %v815 = vcombine.high %v778, %v792
    %v816 = vcombine.low %v785, %v799
    %v817 = vcombine.high %v785, %v799
    %v818 = vcombine.high %v806, %v806
    %v819 = vcombine.high %v813, %v813
    %v821 = vunpack.c.l.s4 1966171168
    %v822 = vunpack.c.0.s8 %v821
    %v823 = vlaneseq
    %v824 = vshrl.u32 %v823, 7
    %v825 = vsub.s32 %v822, %v824
    %v826 = vrot.slane %v814, %v825
    %v828 = vunpack.c.l.s4 1966171168
    %v829 = vunpack.c.0.s8 %v828
    %v830 = vlaneseq
    %v831 = vshrl.u32 %v830, 7
    %v832 = vsub.s32 %v829, %v831
    %v833 = vrot.slane %v816, %v832
    %v835 = vunpack.c.l.s4 1966171168
    %v836 = vunpack.c.0.s8 %v835
    %v837 = vlaneseq
    %v838 = vshrl.u32 %v837, 7
    %v839 = vsub.s32 %v836, %v838
    %v840 = vrot.slane %v815, %v839
    %v842 = vunpack.c.l.s4 1966171168
    %v843 = vunpack.c.0.s8 %v842
    %v844 = vlaneseq
    %v845 = vshrl.u32 %v844, 7
    %v846 = vsub.s32 %v843, %v845
    %v847 = vrot.slane %v817, %v846
    %v849 = vunpack.c.l.s4 1966171168
    %v850 = vunpack.c.0.s8 %v849
    %v851 = vlaneseq
    %v852 = vshrl.u32 %v851, 7
    %v853 = vsub.s32 %v850, %v852
    %v854 = vrot.slane %v806, %v853
    %v856 = vunpack.c.l.s4 1966171168
    %v857 = vunpack.c.0.s8 %v856
    %v858 = vlaneseq
    %v859 = vshrl.u32 %v858, 7
    %v860 = vsub.s32 %v857, %v859
    %v861 = vrot.slane %v813, %v860
    %v863 = vunpack.c.l.s4 1966171168
    %v864 = vunpack.c.0.s8 %v863
    %v865 = vlaneseq
    %v866 = vshrl.u32 %v865, 7
    %v867 = vsub.s32 %v864, %v866
    %v868 = vrot.slane %v818, %v867
    %v870 = vunpack.c.l.s4 1966171168
    %v871 = vunpack.c.0.s8 %v870
    %v872 = vlaneseq
    %v873 = vshrl.u32 %v872, 7
    %v874 = vsub.s32 %v871, %v873
    %v875 = vrot.slane %v819, %v874
    %v876 = vcombine.low %v826, %v854
    %v877 = vcombine.high %v826, %v854
    %v878 = vcombine.low %v833, %v861
    %v879 = vcombine.high %v833, %v861
    %v880 = vcombine.low %v840, %v868
    %v881 = vcombine.high %v840, %v868
    %v882 = vcombine.low %v847, %v875
    %v883 = vcombine.high %v847, %v875
    %v908 = vpack.c.bf16 %v640, %v640
    %v909 = vpack.c.bf16 %v644, %v644
    %v910 = vpack.c.bf16 %v641, %v641
    %v911 = vpack.c.bf16 %v645, %v645
    %v912 = vpack.c.bf16 %v642, %v642
    %v913 = vpack.c.bf16 %v646, %v646
    %v914 = vpack.c.bf16 %v643, %v643
    %v915 = vpack.c.bf16 %v647, %v647
    %v916 = vpack.c.bf16 %v758, %v758
    %v917 = vpack.c.bf16 %v762, %v762
    %v918 = vpack.c.bf16 %v759, %v759
    %v919 = vpack.c.bf16 %v763, %v763
    %v920 = vpack.c.bf16 %v760, %v760
    %v921 = vpack.c.bf16 %v764, %v764
    %v922 = vpack.c.bf16 %v761, %v761
    %v923 = vpack.c.bf16 %v765, %v765
    %v924 = vpack.c.bf16 %v876, %v876
    %v925 = vpack.c.bf16 %v880, %v880
    %v926 = vpack.c.bf16 %v877, %v877
    %v927 = vpack.c.bf16 %v881, %v881
    %v928 = vpack.c.bf16 %v878, %v878
    %v929 = vpack.c.bf16 %v882, %v882
    %v930 = vpack.c.bf16 %v879, %v879
    %v931 = vpack.c.bf16 %v883, %v883
    %v932 = vld [vmem:[%s1] sm:$0xf]
    %v933 = vld [vmem:[%s1 + $0x4] sm:$0xf]
    %v934 = vld [vmem:[%s1 + $0x8] sm:$0xf]
    %v935 = vld [vmem:[%s1 + $0xc] sm:$0xf]
    %v936 = vld [vmem:[%s1 + $0x10] sm:$0xf]
    %v937 = vld [vmem:[%s1 + $0x14] sm:$0xf]
    %v938 = vld [vmem:[%s1 + $0x18] sm:$0xf]
    %v939 = vld [vmem:[%s1 + $0x1c] sm:$0xf]
    %v940 = vld [vmem:[%s1 + $0x20] sm:$0xf]
    %v941 = vld [vmem:[%s1 + $0x24] sm:$0xf]
    %v942 = vld [vmem:[%s1 + $0x28] sm:$0xf]
    %v943 = vld [vmem:[%s1 + $0x2c] sm:$0xf]
    %v944 = vld [vmem:[%s1 + $0x30] sm:$0xf]
    %v945 = vld [vmem:[%s1 + $0x34] sm:$0xf]
    %v946 = vld [vmem:[%s1 + $0x38] sm:$0xf]
    %v947 = vld [vmem:[%s1 + $0x3c] sm:$0xf]
    %v948 = vld [vmem:[%s1 + $0x40] sm:$0xf]
    %v949 = vld [vmem:[%s1 + $0x44] sm:$0xf]
    %v950 = vld [vmem:[%s1 + $0x48] sm:$0xf]
    %v951 = vld [vmem:[%s1 + $0x4c] sm:$0xf]
    %v952 = vld [vmem:[%s1 + $0x50] sm:$0xf]
    %v953 = vld [vmem:[%s1 + $0x54] sm:$0xf]
    %v954 = vld [vmem:[%s1 + $0x58] sm:$0xf]
    %v955 = vld [vmem:[%s1 + $0x5c] sm:$0xf]
    %v956 = vld [vmem:[%s1 + $0x60] sm:$0xf]
    %v957 = vld [vmem:[%s1 + $0x64] sm:$0xf]
    %v958 = vld [vmem:[%s1 + $0x68] sm:$0xf]
    %v959 = vld [vmem:[%s1 + $0x6c] sm:$0xf]
    %v960 = vld [vmem:[%s1 + $0x70] sm:$0xf]
    %v961 = vld [vmem:[%s1 + $0x74] sm:$0xf]
    %v962 = vld [vmem:[%s1 + $0x78] sm:$0xf]
    %v963 = vld [vmem:[%s1 + $0x7c] sm:$0xf]
    %v964 = vld [vmem:[%s1 + $0x80] sm:$0xf]
    %v965 = vld [vmem:[%s1 + $0x84] sm:$0xf]
    %v966 = vld [vmem:[%s1 + $0x88] sm:$0xf]
    %v967 = vld [vmem:[%s1 + $0x8c] sm:$0xf]
    %v968 = vld [vmem:[%s1 + $0x90] sm:$0xf]
    %v969 = vld [vmem:[%s1 + $0x94] sm:$0xf]
    %v970 = vld [vmem:[%s1 + $0x98] sm:$0xf]
    %v971 = vld [vmem:[%s1 + $0x9c] sm:$0xf]
    %v972 = vld [vmem:[%s1 + $0xa0] sm:$0xf]
    %v973 = vld [vmem:[%s1 + $0xa4] sm:$0xf]
    %v974 = vld [vmem:[%s1 + $0xa8] sm:$0xf]
    %v975 = vld [vmem:[%s1 + $0xac] sm:$0xf]
    %v976 = vld [vmem:[%s1 + $0xb0] sm:$0xf]
    %v977 = vld [vmem:[%s1 + $0xb4] sm:$0xf]
    %v978 = vld [vmem:[%s1 + $0xb8] sm:$0xf]
    %v979 = vld [vmem:[%s1 + $0xbc] sm:$0xf]
    %v980 = vld [vmem:[%s1 + $0xc0] sm:$0xf]
    %v981 = vld [vmem:[%s1 + $0xc4] sm:$0xf]
    %v982 = vld [vmem:[%s1 + $0xc8] sm:$0xf]
    %v983 = vld [vmem:[%s1 + $0xcc] sm:$0xf]
    %v984 = vld [vmem:[%s1 + $0xd0] sm:$0xf]
    %v985 = vld [vmem:[%s1 + $0xd4] sm:$0xf]
    %v986 = vld [vmem:[%s1 + $0xd8] sm:$0xf]
    %v987 = vld [vmem:[%s1 + $0xdc] sm:$0xf]
    %v988 = vld [vmem:[%s1 + $0xe0] sm:$0xf]
    %v989 = vld [vmem:[%s1 + $0xe4] sm:$0xf]
    %v990 = vld [vmem:[%s1 + $0xe8] sm:$0xf]
    %v991 = vld [vmem:[%s1 + $0xec] sm:$0xf]
    %v992 = vld [vmem:[%s1 + $0xf0] sm:$0xf]
    %v993 = vld [vmem:[%s1 + $0xf4] sm:$0xf]
    %v994 = vld [vmem:[%s1 + $0xf8] sm:$0xf]
    %v995 = vld [vmem:[%s1 + $0xfc] sm:$0xf]
    %v996 = vld [vmem:[%s1 + $0x100] sm:$0xf]
    %v997 = vld [vmem:[%s1 + $0x104] sm:$0xf]
    %v998 = vld [vmem:[%s1 + $0x108] sm:$0xf]
    %v999 = vld [vmem:[%s1 + $0x10c] sm:$0xf]
    %v1000 = vld [vmem:[%s1 + $0x110] sm:$0xf]
    %v1001 = vld [vmem:[%s1 + $0x114] sm:$0xf]
    %v1002 = vld [vmem:[%s1 + $0x118] sm:$0xf]
    %v1003 = vld [vmem:[%s1 + $0x11c] sm:$0xf]
    %v1004 = vld [vmem:[%s1 + $0x120] sm:$0xf]
    %v1005 = vld [vmem:[%s1 + $0x124] sm:$0xf]
    %v1006 = vld [vmem:[%s1 + $0x128] sm:$0xf]
    %v1007 = vld [vmem:[%s1 + $0x12c] sm:$0xf]
    %v1008 = vld [vmem:[%s1 + $0x130] sm:$0xf]
    %v1009 = vld [vmem:[%s1 + $0x134] sm:$0xf]
    %v1010 = vld [vmem:[%s1 + $0x138] sm:$0xf]
    %v1011 = vld [vmem:[%s1 + $0x13c] sm:$0xf]
    %v1012 = vld [vmem:[%s1 + $0x140] sm:$0xf]
    %v1013 = vld [vmem:[%s1 + $0x144] sm:$0xf]
    %v1014 = vld [vmem:[%s1 + $0x148] sm:$0xf]
    %v1015 = vld [vmem:[%s1 + $0x14c] sm:$0xf]
    %v1016 = vld [vmem:[%s1 + $0x150] sm:$0xf]
    %v1017 = vld [vmem:[%s1 + $0x154] sm:$0xf]
    %v1018 = vld [vmem:[%s1 + $0x158] sm:$0xf]
    %v1019 = vld [vmem:[%s1 + $0x15c] sm:$0xf]
    %v1020 = vld [vmem:[%s1 + $0x160] sm:$0xf]
    %v1021 = vld [vmem:[%s1 + $0x164] sm:$0xf]
    %v1022 = vld [vmem:[%s1 + $0x168] sm:$0xf]
    %v1023 = vld [vmem:[%s1 + $0x16c] sm:$0xf]
    %v1024 = vld [vmem:[%s1 + $0x170] sm:$0xf]
    %v1025 = vld [vmem:[%s1 + $0x174] sm:$0xf]
    %v1026 = vld [vmem:[%s1 + $0x178] sm:$0xf]
    %v1027 = vld [vmem:[%s1 + $0x17c] sm:$0xf]
    %v1028 = vld [vmem:[%s1 + $0x180] sm:$0xf]
    %v1029 = vld [vmem:[%s1 + $0x184] sm:$0xf]
    %v1030 = vld [vmem:[%s1 + $0x188] sm:$0xf]
    %v1031 = vld [vmem:[%s1 + $0x18c] sm:$0xf]
    %v1032 = vld [vmem:[%s1 + $0x190] sm:$0xf]
    %v1033 = vld [vmem:[%s1 + $0x194] sm:$0xf]
    %v1034 = vld [vmem:[%s1 + $0x198] sm:$0xf]
    %v1035 = vld [vmem:[%s1 + $0x19c] sm:$0xf]
    %v1036 = vld [vmem:[%s1 + $0x1a0] sm:$0xf]
    %v1037 = vld [vmem:[%s1 + $0x1a4] sm:$0xf]
    %v1038 = vld [vmem:[%s1 + $0x1a8] sm:$0xf]
    %v1039 = vld [vmem:[%s1 + $0x1ac] sm:$0xf]
    %v1040 = vld [vmem:[%s1 + $0x1b0] sm:$0xf]
    %v1041 = vld [vmem:[%s1 + $0x1b4] sm:$0xf]
    %v1042 = vld [vmem:[%s1 + $0x1b8] sm:$0xf]
    %v1043 = vld [vmem:[%s1 + $0x1bc] sm:$0xf]
    %v1044 = vld [vmem:[%s1 + $0x1c0] sm:$0xf]
    %v1045 = vld [vmem:[%s1 + $0x1c4] sm:$0xf]
    %v1046 = vld [vmem:[%s1 + $0x1c8] sm:$0xf]
    %v1047 = vld [vmem:[%s1 + $0x1cc] sm:$0xf]
    %v1048 = vld [vmem:[%s1 + $0x1d0] sm:$0xf]
    %v1049 = vld [vmem:[%s1 + $0x1d4] sm:$0xf]
    %v1050 = vld [vmem:[%s1 + $0x1d8] sm:$0xf]
    %v1051 = vld [vmem:[%s1 + $0x1dc] sm:$0xf]
    %v1052 = vld [vmem:[%s1 + $0x1e0] sm:$0xf]
    %v1053 = vld [vmem:[%s1 + $0x1e4] sm:$0xf]
    %v1054 = vld [vmem:[%s1 + $0x1e8] sm:$0xf]
    %v1055 = vld [vmem:[%s1 + $0x1ec] sm:$0xf]
    %v1056 = vld [vmem:[%s1 + $0x1f0] sm:$0xf]
    %v1057 = vld [vmem:[%s1 + $0x1f4] sm:$0xf]
    %v1058 = vld [vmem:[%s1 + $0x1f8] sm:$0xf]
    %v1059 = vld [vmem:[%s1 + $0x1fc] sm:$0xf]
    %v1060 = vld [vmem:[%s1 + $0x200] sm:$0xf]
    %v1061 = vld [vmem:[%s1 + $0x204] sm:$0xf]
    %v1062 = vld [vmem:[%s1 + $0x208] sm:$0xf]
    %v1063 = vld [vmem:[%s1 + $0x20c] sm:$0xf]
    %v1064 = vld [vmem:[%s1 + $0x210] sm:$0xf]
    %v1065 = vld [vmem:[%s1 + $0x214] sm:$0xf]
    %v1066 = vld [vmem:[%s1 + $0x218] sm:$0xf]
    %v1067 = vld [vmem:[%s1 + $0x21c] sm:$0xf]
    %v1068 = vld [vmem:[%s1 + $0x220] sm:$0xf]
    %v1069 = vld [vmem:[%s1 + $0x224] sm:$0xf]
    %v1070 = vld [vmem:[%s1 + $0x228] sm:$0xf]
    %v1071 = vld [vmem:[%s1 + $0x22c] sm:$0xf]
    %v1072 = vld [vmem:[%s1 + $0x230] sm:$0xf]
    %v1073 = vld [vmem:[%s1 + $0x234] sm:$0xf]
    %v1074 = vld [vmem:[%s1 + $0x238] sm:$0xf]
    %v1075 = vld [vmem:[%s1 + $0x23c] sm:$0xf]
    %v1076 = vld [vmem:[%s1 + $0x240] sm:$0xf]
    %v1077 = vld [vmem:[%s1 + $0x244] sm:$0xf]
    %v1078 = vld [vmem:[%s1 + $0x248] sm:$0xf]
    %v1079 = vld [vmem:[%s1 + $0x24c] sm:$0xf]
    %v1080 = vld [vmem:[%s1 + $0x250] sm:$0xf]
    %v1081 = vld [vmem:[%s1 + $0x254] sm:$0xf]
    %v1082 = vld [vmem:[%s1 + $0x258] sm:$0xf]
    %v1083 = vld [vmem:[%s1 + $0x25c] sm:$0xf]
    %v1084 = vld [vmem:[%s1 + $0x260] sm:$0xf]
    %v1085 = vld [vmem:[%s1 + $0x264] sm:$0xf]
    %v1086 = vld [vmem:[%s1 + $0x268] sm:$0xf]
    %v1087 = vld [vmem:[%s1 + $0x26c] sm:$0xf]
    %v1088 = vld [vmem:[%s1 + $0x270] sm:$0xf]
    %v1089 = vld [vmem:[%s1 + $0x274] sm:$0xf]
    %v1090 = vld [vmem:[%s1 + $0x278] sm:$0xf]
    %v1091 = vld [vmem:[%s1 + $0x27c] sm:$0xf]
    %v1092 = vld [vmem:[%s1 + $0x280] sm:$0xf]
    %v1093 = vld [vmem:[%s1 + $0x284] sm:$0xf]
    %v1094 = vld [vmem:[%s1 + $0x288] sm:$0xf]
    %v1095 = vld [vmem:[%s1 + $0x28c] sm:$0xf]
    %v1096 = vld [vmem:[%s1 + $0x290] sm:$0xf]
    %v1097 = vld [vmem:[%s1 + $0x294] sm:$0xf]
    %v1098 = vld [vmem:[%s1 + $0x298] sm:$0xf]
    %v1099 = vld [vmem:[%s1 + $0x29c] sm:$0xf]
    %v1100 = vld [vmem:[%s1 + $0x2a0] sm:$0xf]
    %v1101 = vld [vmem:[%s1 + $0x2a4] sm:$0xf]
    %v1102 = vld [vmem:[%s1 + $0x2a8] sm:$0xf]
    %v1103 = vld [vmem:[%s1 + $0x2ac] sm:$0xf]
    %v1104 = vld [vmem:[%s1 + $0x2b0] sm:$0xf]
    %v1105 = vld [vmem:[%s1 + $0x2b4] sm:$0xf]
    %v1106 = vld [vmem:[%s1 + $0x2b8] sm:$0xf]
    %v1107 = vld [vmem:[%s1 + $0x2bc] sm:$0xf]
    %v1108 = vld [vmem:[%s1 + $0x2c0] sm:$0xf]
    %v1109 = vld [vmem:[%s1 + $0x2c4] sm:$0xf]
    %v1110 = vld [vmem:[%s1 + $0x2c8] sm:$0xf]
    %v1111 = vld [vmem:[%s1 + $0x2cc] sm:$0xf]
    %v1112 = vld [vmem:[%s1 + $0x2d0] sm:$0xf]
    %v1113 = vld [vmem:[%s1 + $0x2d4] sm:$0xf]
    %v1114 = vld [vmem:[%s1 + $0x2d8] sm:$0xf]
    %v1115 = vld [vmem:[%s1 + $0x2dc] sm:$0xf]
    %v1116 = vld [vmem:[%s1 + $0x2e0] sm:$0xf]
    %v1117 = vld [vmem:[%s1 + $0x2e4] sm:$0xf]
    %v1118 = vld [vmem:[%s1 + $0x2e8] sm:$0xf]
    %v1119 = vld [vmem:[%s1 + $0x2ec] sm:$0xf]
    %v1120 = vld [vmem:[%s1 + $0x2f0] sm:$0xf]
    %v1121 = vld [vmem:[%s1 + $0x2f4] sm:$0xf]
    %v1122 = vld [vmem:[%s1 + $0x2f8] sm:$0xf]
    %v1123 = vld [vmem:[%s1 + $0x2fc] sm:$0xf]
    %v1124 = vld [vmem:[%s1 + $0x300] sm:$0xf]
    %v1125 = vld [vmem:[%s1 + $0x304] sm:$0xf]
    %v1126 = vld [vmem:[%s1 + $0x308] sm:$0xf]
    %v1127 = vld [vmem:[%s1 + $0x30c] sm:$0xf]
    %v1128 = vld [vmem:[%s1 + $0x310] sm:$0xf]
    %v1129 = vld [vmem:[%s1 + $0x314] sm:$0xf]
    %v1130 = vld [vmem:[%s1 + $0x318] sm:$0xf]
    %v1131 = vld [vmem:[%s1 + $0x31c] sm:$0xf]
    %v1132 = vld [vmem:[%s1 + $0x320] sm:$0xf]
    %v1133 = vld [vmem:[%s1 + $0x324] sm:$0xf]
    %v1134 = vld [vmem:[%s1 + $0x328] sm:$0xf]
    %v1135 = vld [vmem:[%s1 + $0x32c] sm:$0xf]
    %v1136 = vld [vmem:[%s1 + $0x330] sm:$0xf]
    %v1137 = vld [vmem:[%s1 + $0x334] sm:$0xf]
    %v1138 = vld [vmem:[%s1 + $0x338] sm:$0xf]
    %v1139 = vld [vmem:[%s1 + $0x33c] sm:$0xf]
    %v1140 = vld [vmem:[%s1 + $0x340] sm:$0xf]
    %v1141 = vld [vmem:[%s1 + $0x344] sm:$0xf]
    %v1142 = vld [vmem:[%s1 + $0x348] sm:$0xf]
    %v1143 = vld [vmem:[%s1 + $0x34c] sm:$0xf]
    %v1144 = vld [vmem:[%s1 + $0x350] sm:$0xf]
    %v1145 = vld [vmem:[%s1 + $0x354] sm:$0xf]
    %v1146 = vld [vmem:[%s1 + $0x358] sm:$0xf]
    %v1147 = vld [vmem:[%s1 + $0x35c] sm:$0xf]
    %v1148 = vld [vmem:[%s1 + $0x360] sm:$0xf]
    %v1149 = vld [vmem:[%s1 + $0x364] sm:$0xf]
    %v1150 = vld [vmem:[%s1 + $0x368] sm:$0xf]
    %v1151 = vld [vmem:[%s1 + $0x36c] sm:$0xf]
    %v1152 = vld [vmem:[%s1 + $0x370] sm:$0xf]
    %v1153 = vld [vmem:[%s1 + $0x374] sm:$0xf]
    %v1154 = vld [vmem:[%s1 + $0x378] sm:$0xf]
    %v1155 = vld [vmem:[%s1 + $0x37c] sm:$0xf]
    %v1156 = vld [vmem:[%s1 + $0x380] sm:$0xf]
    %v1157 = vld [vmem:[%s1 + $0x384] sm:$0xf]
    %v1158 = vld [vmem:[%s1 + $0x388] sm:$0xf]
    %v1159 = vld [vmem:[%s1 + $0x38c] sm:$0xf]
    %v1160 = vld [vmem:[%s1 + $0x390] sm:$0xf]
    %v1161 = vld [vmem:[%s1 + $0x394] sm:$0xf]
    %v1162 = vld [vmem:[%s1 + $0x398] sm:$0xf]
    %v1163 = vld [vmem:[%s1 + $0x39c] sm:$0xf]
    %v1164 = vld [vmem:[%s1 + $0x3a0] sm:$0xf]
    %v1165 = vld [vmem:[%s1 + $0x3a4] sm:$0xf]
    %v1166 = vld [vmem:[%s1 + $0x3a8] sm:$0xf]
    %v1167 = vld [vmem:[%s1 + $0x3ac] sm:$0xf]
    %v1168 = vld [vmem:[%s1 + $0x3b0] sm:$0xf]
    %v1169 = vld [vmem:[%s1 + $0x3b4] sm:$0xf]
    %v1170 = vld [vmem:[%s1 + $0x3b8] sm:$0xf]
    %v1171 = vld [vmem:[%s1 + $0x3bc] sm:$0xf]
    %v1172 = vld [vmem:[%s1 + $0x3c0] sm:$0xf]
    %v1173 = vld [vmem:[%s1 + $0x3c4] sm:$0xf]
    %v1174 = vld [vmem:[%s1 + $0x3c8] sm:$0xf]
    %v1175 = vld [vmem:[%s1 + $0x3cc] sm:$0xf]
    %v1176 = vld [vmem:[%s1 + $0x3d0] sm:$0xf]
    %v1177 = vld [vmem:[%s1 + $0x3d4] sm:$0xf]
    %v1178 = vld [vmem:[%s1 + $0x3d8] sm:$0xf]
    %v1179 = vld [vmem:[%s1 + $0x3dc] sm:$0xf]
    %v1180 = vld [vmem:[%s1 + $0x3e0] sm:$0xf]
    %v1181 = vld [vmem:[%s1 + $0x3e4] sm:$0xf]
    %v1182 = vld [vmem:[%s1 + $0x3e8] sm:$0xf]
    %v1183 = vld [vmem:[%s1 + $0x3ec] sm:$0xf]
    %v1184 = vld [vmem:[%s1 + $0x3f0] sm:$0xf]
    %v1185 = vld [vmem:[%s1 + $0x3f4] sm:$0xf]
    %v1186 = vld [vmem:[%s1 + $0x3f8] sm:$0xf]
    %v1187 = vld [vmem:[%s1 + $0x3fc] sm:$0xf]
    %v1188 = vld [vmem:[%s1 + $0x400] sm:$0xf]
    %v1189 = vld [vmem:[%s1 + $0x404] sm:$0xf]
    %v1190 = vld [vmem:[%s1 + $0x408] sm:$0xf]
    %v1191 = vld [vmem:[%s1 + $0x40c] sm:$0xf]
    %v1192 = vld [vmem:[%s1 + $0x410] sm:$0xf]
    %v1193 = vld [vmem:[%s1 + $0x414] sm:$0xf]
    %v1194 = vld [vmem:[%s1 + $0x418] sm:$0xf]
    %v1195 = vld [vmem:[%s1 + $0x41c] sm:$0xf]
    %v1196 = vld [vmem:[%s1 + $0x420] sm:$0xf]
    %v1197 = vld [vmem:[%s1 + $0x424] sm:$0xf]
    %v1198 = vld [vmem:[%s1 + $0x428] sm:$0xf]
    %v1199 = vld [vmem:[%s1 + $0x42c] sm:$0xf]
    %v1200 = vld [vmem:[%s1 + $0x430] sm:$0xf]
    %v1201 = vld [vmem:[%s1 + $0x434] sm:$0xf]
    %v1202 = vld [vmem:[%s1 + $0x438] sm:$0xf]
    %v1203 = vld [vmem:[%s1 + $0x43c] sm:$0xf]
    %v1204 = vld [vmem:[%s1 + $0x440] sm:$0xf]
    %v1205 = vld [vmem:[%s1 + $0x444] sm:$0xf]
    %v1206 = vld [vmem:[%s1 + $0x448] sm:$0xf]
    %v1207 = vld [vmem:[%s1 + $0x44c] sm:$0xf]
    %v1208 = vld [vmem:[%s1 + $0x450] sm:$0xf]
    %v1209 = vld [vmem:[%s1 + $0x454] sm:$0xf]
    %v1210 = vld [vmem:[%s1 + $0x458] sm:$0xf]
    %v1211 = vld [vmem:[%s1 + $0x45c] sm:$0xf]
    %v1212 = vld [vmem:[%s1 + $0x460] sm:$0xf]
    %v1213 = vld [vmem:[%s1 + $0x464] sm:$0xf]
    %v1214 = vld [vmem:[%s1 + $0x468] sm:$0xf]
    %v1215 = vld [vmem:[%s1 + $0x46c] sm:$0xf]
    %v1216 = vld [vmem:[%s1 + $0x470] sm:$0xf]
    %v1217 = vld [vmem:[%s1 + $0x474] sm:$0xf]
    %v1218 = vld [vmem:[%s1 + $0x478] sm:$0xf]
    %v1219 = vld [vmem:[%s1 + $0x47c] sm:$0xf]
    %v1220 = vld [vmem:[%s1 + $0x480] sm:$0xf]
    %v1221 = vld [vmem:[%s1 + $0x484] sm:$0xf]
    %v1222 = vld [vmem:[%s1 + $0x488] sm:$0xf]
    %v1223 = vld [vmem:[%s1 + $0x48c] sm:$0xf]
    %v1224 = vld [vmem:[%s1 + $0x490] sm:$0xf]
    %v1225 = vld [vmem:[%s1 + $0x494] sm:$0xf]
    %v1226 = vld [vmem:[%s1 + $0x498] sm:$0xf]
    %v1227 = vld [vmem:[%s1 + $0x49c] sm:$0xf]
    %v1228 = vld [vmem:[%s1 + $0x4a0] sm:$0xf]
    %v1229 = vld [vmem:[%s1 + $0x4a4] sm:$0xf]
    %v1230 = vld [vmem:[%s1 + $0x4a8] sm:$0xf]
    %v1231 = vld [vmem:[%s1 + $0x4ac] sm:$0xf]
    %v1232 = vld [vmem:[%s1 + $0x4b0] sm:$0xf]
    %v1233 = vld [vmem:[%s1 + $0x4b4] sm:$0xf]
    %v1234 = vld [vmem:[%s1 + $0x4b8] sm:$0xf]
    %v1235 = vld [vmem:[%s1 + $0x4bc] sm:$0xf]
    %v1236 = vld [vmem:[%s1 + $0x4c0] sm:$0xf]
    %v1237 = vld [vmem:[%s1 + $0x4c4] sm:$0xf]
    %v1238 = vld [vmem:[%s1 + $0x4c8] sm:$0xf]
    %v1239 = vld [vmem:[%s1 + $0x4cc] sm:$0xf]
    %v1240 = vld [vmem:[%s1 + $0x4d0] sm:$0xf]
    %v1241 = vld [vmem:[%s1 + $0x4d4] sm:$0xf]
    %v1242 = vld [vmem:[%s1 + $0x4d8] sm:$0xf]
    %v1243 = vld [vmem:[%s1 + $0x4dc] sm:$0xf]
    %v1244 = vld [vmem:[%s1 + $0x4e0] sm:$0xf]
    %v1245 = vld [vmem:[%s1 + $0x4e4] sm:$0xf]
    %v1246 = vld [vmem:[%s1 + $0x4e8] sm:$0xf]
    %v1247 = vld [vmem:[%s1 + $0x4ec] sm:$0xf]
    %v1248 = vld [vmem:[%s1 + $0x4f0] sm:$0xf]
    %v1249 = vld [vmem:[%s1 + $0x4f4] sm:$0xf]
    %v1250 = vld [vmem:[%s1 + $0x4f8] sm:$0xf]
    %v1251 = vld [vmem:[%s1 + $0x4fc] sm:$0xf]
    %v1252 = vld [vmem:[%s1 + $0x500] sm:$0xf]
    %v1253 = vld [vmem:[%s1 + $0x504] sm:$0xf]
    %v1254 = vld [vmem:[%s1 + $0x508] sm:$0xf]
    %v1255 = vld [vmem:[%s1 + $0x50c] sm:$0xf]
    %v1256 = vld [vmem:[%s1 + $0x510] sm:$0xf]
    %v1257 = vld [vmem:[%s1 + $0x514] sm:$0xf]
    %v1258 = vld [vmem:[%s1 + $0x518] sm:$0xf]
    %v1259 = vld [vmem:[%s1 + $0x51c] sm:$0xf]
    %v1260 = vld [vmem:[%s1 + $0x520] sm:$0xf]
    %v1261 = vld [vmem:[%s1 + $0x524] sm:$0xf]
    %v1262 = vld [vmem:[%s1 + $0x528] sm:$0xf]
    %v1263 = vld [vmem:[%s1 + $0x52c] sm:$0xf]
    %v1264 = vld [vmem:[%s1 + $0x530] sm:$0xf]
    %v1265 = vld [vmem:[%s1 + $0x534] sm:$0xf]
    %v1266 = vld [vmem:[%s1 + $0x538] sm:$0xf]
    %v1267 = vld [vmem:[%s1 + $0x53c] sm:$0xf]
    %v1268 = vld [vmem:[%s1 + $0x540] sm:$0xf]
    %v1269 = vld [vmem:[%s1 + $0x544] sm:$0xf]
    %v1270 = vld [vmem:[%s1 + $0x548] sm:$0xf]
    %v1271 = vld [vmem:[%s1 + $0x54c] sm:$0xf]
    %v1272 = vld [vmem:[%s1 + $0x550] sm:$0xf]
    %v1273 = vld [vmem:[%s1 + $0x554] sm:$0xf]
    %v1274 = vld [vmem:[%s1 + $0x558] sm:$0xf]
    %v1275 = vld [vmem:[%s1 + $0x55c] sm:$0xf]
    %v1276 = vld [vmem:[%s1 + $0x560] sm:$0xf]
    %v1277 = vld [vmem:[%s1 + $0x564] sm:$0xf]
    %v1278 = vld [vmem:[%s1 + $0x568] sm:$0xf]
    %v1279 = vld [vmem:[%s1 + $0x56c] sm:$0xf]
    %v1280 = vld [vmem:[%s1 + $0x570] sm:$0xf]
    %v1281 = vld [vmem:[%s1 + $0x574] sm:$0xf]
    %v1282 = vld [vmem:[%s1 + $0x578] sm:$0xf]
    %v1283 = vld [vmem:[%s1 + $0x57c] sm:$0xf]
    %v1284 = vld [vmem:[%s1 + $0x580] sm:$0xf]
    %v1285 = vld [vmem:[%s1 + $0x584] sm:$0xf]
    %v1286 = vld [vmem:[%s1 + $0x588] sm:$0xf]
    %v1287 = vld [vmem:[%s1 + $0x58c] sm:$0xf]
    %v1288 = vld [vmem:[%s1 + $0x590] sm:$0xf]
    %v1289 = vld [vmem:[%s1 + $0x594] sm:$0xf]
    %v1290 = vld [vmem:[%s1 + $0x598] sm:$0xf]
    %v1291 = vld [vmem:[%s1 + $0x59c] sm:$0xf]
    %v1292 = vld [vmem:[%s1 + $0x5a0] sm:$0xf]
    %v1293 = vld [vmem:[%s1 + $0x5a4] sm:$0xf]
    %v1294 = vld [vmem:[%s1 + $0x5a8] sm:$0xf]
    %v1295 = vld [vmem:[%s1 + $0x5ac] sm:$0xf]
    %v1296 = vld [vmem:[%s1 + $0x5b0] sm:$0xf]
    %v1297 = vld [vmem:[%s1 + $0x5b4] sm:$0xf]
    %v1298 = vld [vmem:[%s1 + $0x5b8] sm:$0xf]
    %v1299 = vld [vmem:[%s1 + $0x5bc] sm:$0xf]
    %v1300 = vld [vmem:[%s1 + $0x5c0] sm:$0xf]
    %v1301 = vld [vmem:[%s1 + $0x5c4] sm:$0xf]
    %v1302 = vld [vmem:[%s1 + $0x5c8] sm:$0xf]
    %v1303 = vld [vmem:[%s1 + $0x5cc] sm:$0xf]
    %v1304 = vld [vmem:[%s1 + $0x5d0] sm:$0xf]
    %v1305 = vld [vmem:[%s1 + $0x5d4] sm:$0xf]
    %v1306 = vld [vmem:[%s1 + $0x5d8] sm:$0xf]
    %v1307 = vld [vmem:[%s1 + $0x5dc] sm:$0xf]
    %v1308 = vld [vmem:[%s1 + $0x5e0] sm:$0xf]
    %v1309 = vld [vmem:[%s1 + $0x5e4] sm:$0xf]
    %v1310 = vld [vmem:[%s1 + $0x5e8] sm:$0xf]
    %v1311 = vld [vmem:[%s1 + $0x5ec] sm:$0xf]
    %v1312 = vld [vmem:[%s1 + $0x5f0] sm:$0xf]
    %v1313 = vld [vmem:[%s1 + $0x5f4] sm:$0xf]
    %v1314 = vld [vmem:[%s1 + $0x5f8] sm:$0xf]
    %v1315 = vld [vmem:[%s1 + $0x5fc] sm:$0xf]
    %v1316 = vld [vmem:[%s2] sm:$0x1]
    %v1318 = vlaneseq
    %v1319 = vshrl.u32 %v1318, 7
    %v1320 = vsub.s32 0, %v1319
    %v1321 = vrot.slane %v1316, %v1320
    %v1707 = vunpack.c.l.b16 %v932
    %v1708 = vunpack.c.l.b16 %v933
    %v1709 = vunpack.c.l.b16 %v934
    %v1710 = vunpack.c.l.b16 %v935
    %v1711 = vunpack.c.l.b16 %v936
    %v1712 = vunpack.c.l.b16 %v937
    %v1713 = vunpack.c.l.b16 %v938
    %v1714 = vunpack.c.l.b16 %v939
    %v1715 = vunpack.c.l.b16 %v940
    %v1716 = vunpack.c.l.b16 %v941
    %v1717 = vunpack.c.l.b16 %v942
    %v1718 = vunpack.c.l.b16 %v943
    %v1719 = vunpack.c.l.b16 %v944
    %v1720 = vunpack.c.l.b16 %v945
    %v1721 = vunpack.c.l.b16 %v946
    %v1722 = vunpack.c.l.b16 %v947
    %v1723 = vunpack.c.l.b16 %v948
    %v1724 = vunpack.c.l.b16 %v949
    %v1725 = vunpack.c.l.b16 %v950
    %v1726 = vunpack.c.l.b16 %v951
    %v1727 = vunpack.c.l.b16 %v952
    %v1728 = vunpack.c.l.b16 %v953
    %v1729 = vunpack.c.l.b16 %v954
    %v1730 = vunpack.c.l.b16 %v955
    %v1731 = vunpack.c.l.b16 %v956
    %v1732 = vunpack.c.l.b16 %v957
    %v1733 = vunpack.c.l.b16 %v958
    %v1734 = vunpack.c.l.b16 %v959
    %v1735 = vunpack.c.l.b16 %v960
    %v1736 = vunpack.c.l.b16 %v961
    %v1737 = vunpack.c.l.b16 %v962
    %v1738 = vunpack.c.l.b16 %v963
    %v1739 = vunpack.c.l.b16 %v964
    %v1740 = vunpack.c.l.b16 %v965
    %v1741 = vunpack.c.l.b16 %v966
    %v1742 = vunpack.c.l.b16 %v967
    %v1743 = vunpack.c.l.b16 %v968
    %v1744 = vunpack.c.l.b16 %v969
    %v1745 = vunpack.c.l.b16 %v970
    %v1746 = vunpack.c.l.b16 %v971
    %v1747 = vunpack.c.l.b16 %v972
    %v1748 = vunpack.c.l.b16 %v973
    %v1749 = vunpack.c.l.b16 %v974
    %v1750 = vunpack.c.l.b16 %v975
    %v1751 = vunpack.c.l.b16 %v976
    %v1752 = vunpack.c.l.b16 %v977
    %v1753 = vunpack.c.l.b16 %v978
    %v1754 = vunpack.c.l.b16 %v979
    %v1755 = vunpack.c.l.b16 %v980
    %v1756 = vunpack.c.l.b16 %v981
    %v1757 = vunpack.c.l.b16 %v982
    %v1758 = vunpack.c.l.b16 %v983
    %v1759 = vunpack.c.l.b16 %v984
    %v1760 = vunpack.c.l.b16 %v985
    %v1761 = vunpack.c.l.b16 %v986
    %v1762 = vunpack.c.l.b16 %v987
    %v1763 = vunpack.c.l.b16 %v988
    %v1764 = vunpack.c.l.b16 %v989
    %v1765 = vunpack.c.l.b16 %v990
    %v1766 = vunpack.c.l.b16 %v991
    %v1767 = vunpack.c.l.b16 %v992
    %v1768 = vunpack.c.l.b16 %v993
    %v1769 = vunpack.c.l.b16 %v994
    %v1770 = vunpack.c.l.b16 %v995
    %v1771 = vunpack.c.l.b16 %v996
    %v1772 = vunpack.c.l.b16 %v997
    %v1773 = vunpack.c.l.b16 %v998
    %v1774 = vunpack.c.l.b16 %v999
    %v1775 = vunpack.c.l.b16 %v1000
    %v1776 = vunpack.c.l.b16 %v1001
    %v1777 = vunpack.c.l.b16 %v1002
    %v1778 = vunpack.c.l.b16 %v1003
    %v1779 = vunpack.c.l.b16 %v1004
    %v1780 = vunpack.c.l.b16 %v1005
    %v1781 = vunpack.c.l.b16 %v1006
    %v1782 = vunpack.c.l.b16 %v1007
    %v1783 = vunpack.c.l.b16 %v1008
    %v1784 = vunpack.c.l.b16 %v1009
    %v1785 = vunpack.c.l.b16 %v1010
    %v1786 = vunpack.c.l.b16 %v1011
    %v1787 = vunpack.c.l.b16 %v1012
    %v1788 = vunpack.c.l.b16 %v1013
    %v1789 = vunpack.c.l.b16 %v1014
    %v1790 = vunpack.c.l.b16 %v1015
    %v1791 = vunpack.c.l.b16 %v1016
    %v1792 = vunpack.c.l.b16 %v1017
    %v1793 = vunpack.c.l.b16 %v1018
    %v1794 = vunpack.c.l.b16 %v1019
    %v1795 = vunpack.c.l.b16 %v1020
    %v1796 = vunpack.c.l.b16 %v1021
    %v1797 = vunpack.c.l.b16 %v1022
    %v1798 = vunpack.c.l.b16 %v1023
    %v1799 = vunpack.c.l.b16 %v1024
    %v1800 = vunpack.c.l.b16 %v1025
    %v1801 = vunpack.c.l.b16 %v1026
    %v1802 = vunpack.c.l.b16 %v1027
    %v1803 = vunpack.c.l.b16 %v1028
    %v1804 = vunpack.c.l.b16 %v1029
    %v1805 = vunpack.c.l.b16 %v1030
    %v1806 = vunpack.c.l.b16 %v1031
    %v1807 = vunpack.c.l.b16 %v1032
    %v1808 = vunpack.c.l.b16 %v1033
    %v1809 = vunpack.c.l.b16 %v1034
    %v1810 = vunpack.c.l.b16 %v1035
    %v1811 = vunpack.c.l.b16 %v1036
    %v1812 = vunpack.c.l.b16 %v1037
    %v1813 = vunpack.c.l.b16 %v1038
    %v1814 = vunpack.c.l.b16 %v1039
    %v1815 = vunpack.c.l.b16 %v1040
    %v1816 = vunpack.c.l.b16 %v1041
    %v1817 = vunpack.c.l.b16 %v1042
    %v1818 = vunpack.c.l.b16 %v1043
    %v1819 = vunpack.c.l.b16 %v1044
    %v1820 = vunpack.c.l.b16 %v1045
    %v1821 = vunpack.c.l.b16 %v1046
    %v1822 = vunpack.c.l.b16 %v1047
    %v1823 = vunpack.c.l.b16 %v1048
    %v1824 = vunpack.c.l.b16 %v1049
    %v1825 = vunpack.c.l.b16 %v1050
    %v1826 = vunpack.c.l.b16 %v1051
    %v1827 = vunpack.c.l.b16 %v1052
    %v1828 = vunpack.c.l.b16 %v1053
    %v1829 = vunpack.c.l.b16 %v1054
    %v1830 = vunpack.c.l.b16 %v1055
    %v1831 = vunpack.c.l.b16 %v1056
    %v1832 = vunpack.c.l.b16 %v1057
    %v1833 = vunpack.c.l.b16 %v1058
    %v1834 = vunpack.c.l.b16 %v1059
    %v1835 = vunpack.c.l.b16 %v1060
    %v1836 = vunpack.c.l.b16 %v1061
    %v1837 = vunpack.c.l.b16 %v1062
    %v1838 = vunpack.c.l.b16 %v1063
    %v1839 = vunpack.c.l.b16 %v1064
    %v1840 = vunpack.c.l.b16 %v1065
    %v1841 = vunpack.c.l.b16 %v1066
    %v1842 = vunpack.c.l.b16 %v1067
    %v1843 = vunpack.c.l.b16 %v1068
    %v1844 = vunpack.c.l.b16 %v1069
    %v1845 = vunpack.c.l.b16 %v1070
    %v1846 = vunpack.c.l.b16 %v1071
    %v1847 = vunpack.c.l.b16 %v1072
    %v1848 = vunpack.c.l.b16 %v1073
    %v1849 = vunpack.c.l.b16 %v1074
    %v1850 = vunpack.c.l.b16 %v1075
    %v1851 = vunpack.c.l.b16 %v1076
    %v1852 = vunpack.c.l.b16 %v1077
    %v1853 = vunpack.c.l.b16 %v1078
    %v1854 = vunpack.c.l.b16 %v1079
    %v1855 = vunpack.c.l.b16 %v1080
    %v1856 = vunpack.c.l.b16 %v1081
    %v1857 = vunpack.c.l.b16 %v1082
    %v1858 = vunpack.c.l.b16 %v1083
    %v1859 = vunpack.c.l.b16 %v1084
    %v1860 = vunpack.c.l.b16 %v1085
    %v1861 = vunpack.c.l.b16 %v1086
    %v1862 = vunpack.c.l.b16 %v1087
    %v1863 = vunpack.c.l.b16 %v1088
    %v1864 = vunpack.c.l.b16 %v1089
    %v1865 = vunpack.c.l.b16 %v1090
    %v1866 = vunpack.c.l.b16 %v1091
    %v1867 = vunpack.c.l.b16 %v1092
    %v1868 = vunpack.c.l.b16 %v1093
    %v1869 = vunpack.c.l.b16 %v1094
    %v1870 = vunpack.c.l.b16 %v1095
    %v1871 = vunpack.c.l.b16 %v1096
    %v1872 = vunpack.c.l.b16 %v1097
    %v1873 = vunpack.c.l.b16 %v1098
    %v1874 = vunpack.c.l.b16 %v1099
    %v1875 = vunpack.c.l.b16 %v1100
    %v1876 = vunpack.c.l.b16 %v1101
    %v1877 = vunpack.c.l.b16 %v1102
    %v1878 = vunpack.c.l.b16 %v1103
    %v1879 = vunpack.c.l.b16 %v1104
    %v1880 = vunpack.c.l.b16 %v1105
    %v1881 = vunpack.c.l.b16 %v1106
    %v1882 = vunpack.c.l.b16 %v1107
    %v1883 = vunpack.c.l.b16 %v1108
    %v1884 = vunpack.c.l.b16 %v1109
    %v1885 = vunpack.c.l.b16 %v1110
    %v1886 = vunpack.c.l.b16 %v1111
    %v1887 = vunpack.c.l.b16 %v1112
    %v1888 = vunpack.c.l.b16 %v1113
    %v1889 = vunpack.c.l.b16 %v1114
    %v1890 = vunpack.c.l.b16 %v1115
    %v1891 = vunpack.c.l.b16 %v1116
    %v1892 = vunpack.c.l.b16 %v1117
    %v1893 = vunpack.c.l.b16 %v1118
    %v1894 = vunpack.c.l.b16 %v1119
    %v1895 = vunpack.c.l.b16 %v1120
    %v1896 = vunpack.c.l.b16 %v1121
    %v1897 = vunpack.c.l.b16 %v1122
    %v1898 = vunpack.c.l.b16 %v1123
    %v1899 = vunpack.c.l.b16 %v1124
    %v1900 = vunpack.c.l.b16 %v1125
    %v1901 = vunpack.c.l.b16 %v1126
    %v1902 = vunpack.c.l.b16 %v1127
    %v1903 = vunpack.c.l.b16 %v1128
    %v1904 = vunpack.c.l.b16 %v1129
    %v1905 = vunpack.c.l.b16 %v1130
    %v1906 = vunpack.c.l.b16 %v1131
    %v1907 = vunpack.c.l.b16 %v1132
    %v1908 = vunpack.c.l.b16 %v1133
    %v1909 = vunpack.c.l.b16 %v1134
    %v1910 = vunpack.c.l.b16 %v1135
    %v1911 = vunpack.c.l.b16 %v1136
    %v1912 = vunpack.c.l.b16 %v1137
    %v1913 = vunpack.c.l.b16 %v1138
    %v1914 = vunpack.c.l.b16 %v1139
    %v1915 = vunpack.c.l.b16 %v1140
    %v1916 = vunpack.c.l.b16 %v1141
    %v1917 = vunpack.c.l.b16 %v1142
    %v1918 = vunpack.c.l.b16 %v1143
    %v1919 = vunpack.c.l.b16 %v1144
    %v1920 = vunpack.c.l.b16 %v1145
    %v1921 = vunpack.c.l.b16 %v1146
    %v1922 = vunpack.c.l.b16 %v1147
    %v1923 = vunpack.c.l.b16 %v1148
    %v1924 = vunpack.c.l.b16 %v1149
    %v1925 = vunpack.c.l.b16 %v1150
    %v1926 = vunpack.c.l.b16 %v1151
    %v1927 = vunpack.c.l.b16 %v1152
    %v1928 = vunpack.c.l.b16 %v1153
    %v1929 = vunpack.c.l.b16 %v1154
    %v1930 = vunpack.c.l.b16 %v1155
    %v1931 = vunpack.c.l.b16 %v1156
    %v1932 = vunpack.c.l.b16 %v1157
    %v1933 = vunpack.c.l.b16 %v1158
    %v1934 = vunpack.c.l.b16 %v1159
    %v1935 = vunpack.c.l.b16 %v1160
    %v1936 = vunpack.c.l.b16 %v1161
    %v1937 = vunpack.c.l.b16 %v1162
    %v1938 = vunpack.c.l.b16 %v1163
    %v1939 = vunpack.c.l.b16 %v1164
    %v1940 = vunpack.c.l.b16 %v1165
    %v1941 = vunpack.c.l.b16 %v1166
    %v1942 = vunpack.c.l.b16 %v1167
    %v1943 = vunpack.c.l.b16 %v1168
    %v1944 = vunpack.c.l.b16 %v1169
    %v1945 = vunpack.c.l.b16 %v1170
    %v1946 = vunpack.c.l.b16 %v1171
    %v1947 = vunpack.c.l.b16 %v1172
    %v1948 = vunpack.c.l.b16 %v1173
    %v1949 = vunpack.c.l.b16 %v1174
    %v1950 = vunpack.c.l.b16 %v1175
    %v1951 = vunpack.c.l.b16 %v1176
    %v1952 = vunpack.c.l.b16 %v1177
    %v1953 = vunpack.c.l.b16 %v1178
    %v1954 = vunpack.c.l.b16 %v1179
    %v1955 = vunpack.c.l.b16 %v1180
    %v1956 = vunpack.c.l.b16 %v1181
    %v1957 = vunpack.c.l.b16 %v1182
    %v1958 = vunpack.c.l.b16 %v1183
    %v1959 = vunpack.c.l.b16 %v1184
    %v1960 = vunpack.c.l.b16 %v1185
    %v1961 = vunpack.c.l.b16 %v1186
    %v1962 = vunpack.c.l.b16 %v1187
    %v1963 = vunpack.c.l.b16 %v1188
    %v1964 = vunpack.c.l.b16 %v1189
    %v1965 = vunpack.c.l.b16 %v1190
    %v1966 = vunpack.c.l.b16 %v1191
    %v1967 = vunpack.c.l.b16 %v1192
    %v1968 = vunpack.c.l.b16 %v1193
    %v1969 = vunpack.c.l.b16 %v1194
    %v1970 = vunpack.c.l.b16 %v1195
    %v1971 = vunpack.c.l.b16 %v1196
    %v1972 = vunpack.c.l.b16 %v1197
    %v1973 = vunpack.c.l.b16 %v1198
    %v1974 = vunpack.c.l.b16 %v1199
    %v1975 = vunpack.c.l.b16 %v1200
    %v1976 = vunpack.c.l.b16 %v1201
    %v1977 = vunpack.c.l.b16 %v1202
    %v1978 = vunpack.c.l.b16 %v1203
    %v1979 = vunpack.c.l.b16 %v1204
    %v1980 = vunpack.c.l.b16 %v1205
    %v1981 = vunpack.c.l.b16 %v1206
    %v1982 = vunpack.c.l.b16 %v1207
    %v1983 = vunpack.c.l.b16 %v1208
    %v1984 = vunpack.c.l.b16 %v1209
    %v1985 = vunpack.c.l.b16 %v1210
    %v1986 = vunpack.c.l.b16 %v1211
    %v1987 = vunpack.c.l.b16 %v1212
    %v1988 = vunpack.c.l.b16 %v1213
    %v1989 = vunpack.c.l.b16 %v1214
    %v1990 = vunpack.c.l.b16 %v1215
    %v1991 = vunpack.c.l.b16 %v1216
    %v1992 = vunpack.c.l.b16 %v1217
    %v1993 = vunpack.c.l.b16 %v1218
    %v1994 = vunpack.c.l.b16 %v1219
    %v1995 = vunpack.c.l.b16 %v1220
    %v1996 = vunpack.c.l.b16 %v1221
    %v1997 = vunpack.c.l.b16 %v1222
    %v1998 = vunpack.c.l.b16 %v1223
    %v1999 = vunpack.c.l.b16 %v1224
    %v2000 = vunpack.c.l.b16 %v1225
    %v2001 = vunpack.c.l.b16 %v1226
    %v2002 = vunpack.c.l.b16 %v1227
    %v2003 = vunpack.c.l.b16 %v1228
    %v2004 = vunpack.c.l.b16 %v1229
    %v2005 = vunpack.c.l.b16 %v1230
    %v2006 = vunpack.c.l.b16 %v1231
    %v2007 = vunpack.c.l.b16 %v1232
    %v2008 = vunpack.c.l.b16 %v1233
    %v2009 = vunpack.c.l.b16 %v1234
    %v2010 = vunpack.c.l.b16 %v1235
    %v2011 = vunpack.c.l.b16 %v1236
    %v2012 = vunpack.c.l.b16 %v1237
    %v2013 = vunpack.c.l.b16 %v1238
    %v2014 = vunpack.c.l.b16 %v1239
    %v2015 = vunpack.c.l.b16 %v1240
    %v2016 = vunpack.c.l.b16 %v1241
    %v2017 = vunpack.c.l.b16 %v1242
    %v2018 = vunpack.c.l.b16 %v1243
    %v2019 = vunpack.c.l.b16 %v1244
    %v2020 = vunpack.c.l.b16 %v1245
    %v2021 = vunpack.c.l.b16 %v1246
    %v2022 = vunpack.c.l.b16 %v1247
    %v2023 = vunpack.c.l.b16 %v1248
    %v2024 = vunpack.c.l.b16 %v1249
    %v2025 = vunpack.c.l.b16 %v1250
    %v2026 = vunpack.c.l.b16 %v1251
    %v2027 = vunpack.c.l.b16 %v1252
    %v2028 = vunpack.c.l.b16 %v1253
    %v2029 = vunpack.c.l.b16 %v1254
    %v2030 = vunpack.c.l.b16 %v1255
    %v2031 = vunpack.c.l.b16 %v1256
    %v2032 = vunpack.c.l.b16 %v1257
    %v2033 = vunpack.c.l.b16 %v1258
    %v2034 = vunpack.c.l.b16 %v1259
    %v2035 = vunpack.c.l.b16 %v1260
    %v2036 = vunpack.c.l.b16 %v1261
    %v2037 = vunpack.c.l.b16 %v1262
    %v2038 = vunpack.c.l.b16 %v1263
    %v2039 = vunpack.c.l.b16 %v1264
    %v2040 = vunpack.c.l.b16 %v1265
    %v2041 = vunpack.c.l.b16 %v1266
    %v2042 = vunpack.c.l.b16 %v1267
    %v2043 = vunpack.c.l.b16 %v1268
    %v2044 = vunpack.c.l.b16 %v1269
    %v2045 = vunpack.c.l.b16 %v1270
    %v2046 = vunpack.c.l.b16 %v1271
    %v2047 = vunpack.c.l.b16 %v1272
    %v2048 = vunpack.c.l.b16 %v1273
    %v2049 = vunpack.c.l.b16 %v1274
    %v2050 = vunpack.c.l.b16 %v1275
    %v2051 = vunpack.c.l.b16 %v1276
    %v2052 = vunpack.c.l.b16 %v1277
    %v2053 = vunpack.c.l.b16 %v1278
    %v2054 = vunpack.c.l.b16 %v1279
    %v2055 = vunpack.c.l.b16 %v1280
    %v2056 = vunpack.c.l.b16 %v1281
    %v2057 = vunpack.c.l.b16 %v1282
    %v2058 = vunpack.c.l.b16 %v1283
    %v2059 = vunpack.c.l.b16 %v1284
    %v2060 = vunpack.c.l.b16 %v1285
    %v2061 = vunpack.c.l.b16 %v1286
    %v2062 = vunpack.c.l.b16 %v1287
    %v2063 = vunpack.c.l.b16 %v1288
    %v2064 = vunpack.c.l.b16 %v1289
    %v2065 = vunpack.c.l.b16 %v1290
    %v2066 = vunpack.c.l.b16 %v1291
    %v2067 = vunpack.c.l.b16 %v1292
    %v2068 = vunpack.c.l.b16 %v1293
    %v2069 = vunpack.c.l.b16 %v1294
    %v2070 = vunpack.c.l.b16 %v1295
    %v2071 = vunpack.c.l.b16 %v1296
    %v2072 = vunpack.c.l.b16 %v1297
    %v2073 = vunpack.c.l.b16 %v1298
    %v2074 = vunpack.c.l.b16 %v1299
    %v2075 = vunpack.c.l.b16 %v1300
    %v2076 = vunpack.c.l.b16 %v1301
    %v2077 = vunpack.c.l.b16 %v1302
    %v2078 = vunpack.c.l.b16 %v1303
    %v2079 = vunpack.c.l.b16 %v1304
    %v2080 = vunpack.c.l.b16 %v1305
    %v2081 = vunpack.c.l.b16 %v1306
    %v2082 = vunpack.c.l.b16 %v1307
    %v2083 = vunpack.c.l.b16 %v1308
    %v2084 = vunpack.c.l.b16 %v1309
    %v2085 = vunpack.c.l.b16 %v1310
    %v2086 = vunpack.c.l.b16 %v1311
    %v2087 = vunpack.c.l.b16 %v1312
    %v2088 = vunpack.c.l.b16 %v1313
    %v2089 = vunpack.c.l.b16 %v1314
    %v2090 = vunpack.c.l.b16 %v1315
    %v2091 = vpack.c.b16 %v1708, %v1707
    %v2092 = vpack.c.b16 %v1710, %v1709
    %v2093 = vpack.c.b16 %v1712, %v1711
    %v2094 = vpack.c.b16 %v1714, %v1713
    %v2095 = vpack.c.b16 %v1716, %v1715
    %v2096 = vpack.c.b16 %v1718, %v1717
    %v2097 = vpack.c.b16 %v1720, %v1719
    %v2098 = vpack.c.b16 %v1722, %v1721
    %v2099 = vpack.c.b16 %v1724, %v1723
    %v2100 = vpack.c.b16 %v1726, %v1725
    %v2101 = vpack.c.b16 %v1728, %v1727
    %v2102 = vpack.c.b16 %v1730, %v1729
    %v2103 = vpack.c.b16 %v1732, %v1731
    %v2104 = vpack.c.b16 %v1734, %v1733
    %v2105 = vpack.c.b16 %v1736, %v1735
    %v2106 = vpack.c.b16 %v1738, %v1737
    %v2107 = vpack.c.b16 %v1740, %v1739
    %v2108 = vpack.c.b16 %v1742, %v1741
    %v2109 = vpack.c.b16 %v1744, %v1743
    %v2110 = vpack.c.b16 %v1746, %v1745
    %v2111 = vpack.c.b16 %v1748, %v1747
    %v2112 = vpack.c.b16 %v1750, %v1749
    %v2113 = vpack.c.b16 %v1752, %v1751
    %v2114 = vpack.c.b16 %v1754, %v1753
    %v2115 = vpack.c.b16 %v1756, %v1755
    %v2116 = vpack.c.b16 %v1758, %v1757
    %v2117 = vpack.c.b16 %v1760, %v1759
    %v2118 = vpack.c.b16 %v1762, %v1761
    %v2119 = vpack.c.b16 %v1764, %v1763
    %v2120 = vpack.c.b16 %v1766, %v1765
    %v2121 = vpack.c.b16 %v1768, %v1767
    %v2122 = vpack.c.b16 %v1770, %v1769
    %v2123 = vpack.c.b16 %v1772, %v1771
    %v2124 = vpack.c.b16 %v1774, %v1773
    %v2125 = vpack.c.b16 %v1776, %v1775
    %v2126 = vpack.c.b16 %v1778, %v1777
    %v2127 = vpack.c.b16 %v1780, %v1779
    %v2128 = vpack.c.b16 %v1782, %v1781
    %v2129 = vpack.c.b16 %v1784, %v1783
    %v2130 = vpack.c.b16 %v1786, %v1785
    %v2131 = vpack.c.b16 %v1788, %v1787
    %v2132 = vpack.c.b16 %v1790, %v1789
    %v2133 = vpack.c.b16 %v1792, %v1791
    %v2134 = vpack.c.b16 %v1794, %v1793
    %v2135 = vpack.c.b16 %v1796, %v1795
    %v2136 = vpack.c.b16 %v1798, %v1797
    %v2137 = vpack.c.b16 %v1800, %v1799
    %v2138 = vpack.c.b16 %v1802, %v1801
    %v2139 = vpack.c.b16 %v1804, %v1803
    %v2140 = vpack.c.b16 %v1806, %v1805
    %v2141 = vpack.c.b16 %v1808, %v1807
    %v2142 = vpack.c.b16 %v1810, %v1809
    %v2143 = vpack.c.b16 %v1812, %v1811
    %v2144 = vpack.c.b16 %v1814, %v1813
    %v2145 = vpack.c.b16 %v1816, %v1815
    %v2146 = vpack.c.b16 %v1818, %v1817
    %v2147 = vpack.c.b16 %v1820, %v1819
    %v2148 = vpack.c.b16 %v1822, %v1821
    %v2149 = vpack.c.b16 %v1824, %v1823
    %v2150 = vpack.c.b16 %v1826, %v1825
    %v2151 = vpack.c.b16 %v1828, %v1827
    %v2152 = vpack.c.b16 %v1830, %v1829
    %v2153 = vpack.c.b16 %v1832, %v1831
    %v2154 = vpack.c.b16 %v1834, %v1833
    %v2155 = vpack.c.b16 %v1836, %v1835
    %v2156 = vpack.c.b16 %v1838, %v1837
    %v2157 = vpack.c.b16 %v1840, %v1839
    %v2158 = vpack.c.b16 %v1842, %v1841
    %v2159 = vpack.c.b16 %v1844, %v1843
    %v2160 = vpack.c.b16 %v1846, %v1845
    %v2161 = vpack.c.b16 %v1848, %v1847
    %v2162 = vpack.c.b16 %v1850, %v1849
    %v2163 = vpack.c.b16 %v1852, %v1851
    %v2164 = vpack.c.b16 %v1854, %v1853
    %v2165 = vpack.c.b16 %v1856, %v1855
    %v2166 = vpack.c.b16 %v1858, %v1857
    %v2167 = vpack.c.b16 %v1860, %v1859
    %v2168 = vpack.c.b16 %v1862, %v1861
    %v2169 = vpack.c.b16 %v1864, %v1863
    %v2170 = vpack.c.b16 %v1866, %v1865
    %v2171 = vpack.c.b16 %v1868, %v1867
    %v2172 = vpack.c.b16 %v1870, %v1869
    %v2173 = vpack.c.b16 %v1872, %v1871
    %v2174 = vpack.c.b16 %v1874, %v1873
    %v2175 = vpack.c.b16 %v1876, %v1875
    %v2176 = vpack.c.b16 %v1878, %v1877
    %v2177 = vpack.c.b16 %v1880, %v1879
    %v2178 = vpack.c.b16 %v1882, %v1881
    %v2179 = vpack.c.b16 %v1884, %v1883
    %v2180 = vpack.c.b16 %v1886, %v1885
    %v2181 = vpack.c.b16 %v1888, %v1887
    %v2182 = vpack.c.b16 %v1890, %v1889
    %v2183 = vpack.c.b16 %v1892, %v1891
    %v2184 = vpack.c.b16 %v1894, %v1893
    %v2185 = vpack.c.b16 %v1896, %v1895
    %v2186 = vpack.c.b16 %v1898, %v1897
    %v2187 = vpack.c.b16 %v1900, %v1899
    %v2188 = vpack.c.b16 %v1902, %v1901
    %v2189 = vpack.c.b16 %v1904, %v1903
    %v2190 = vpack.c.b16 %v1906, %v1905
    %v2191 = vpack.c.b16 %v1908, %v1907
    %v2192 = vpack.c.b16 %v1910, %v1909
    %v2193 = vpack.c.b16 %v1912, %v1911
    %v2194 = vpack.c.b16 %v1914, %v1913
    %v2195 = vpack.c.b16 %v1916, %v1915
    %v2196 = vpack.c.b16 %v1918, %v1917
    %v2197 = vpack.c.b16 %v1920, %v1919
    %v2198 = vpack.c.b16 %v1922, %v1921
    %v2199 = vpack.c.b16 %v1924, %v1923
    %v2200 = vpack.c.b16 %v1926, %v1925
    %v2201 = vpack.c.b16 %v1928, %v1927
    %v2202 = vpack.c.b16 %v1930, %v1929
    %v2203 = vpack.c.b16 %v1932, %v1931
    %v2204 = vpack.c.b16 %v1934, %v1933
    %v2205 = vpack.c.b16 %v1936, %v1935
    %v2206 = vpack.c.b16 %v1938, %v1937
    %v2207 = vpack.c.b16 %v1940, %v1939
    %v2208 = vpack.c.b16 %v1942, %v1941
    %v2209 = vpack.c.b16 %v1944, %v1943
    %v2210 = vpack.c.b16 %v1946, %v1945
    %v2211 = vpack.c.b16 %v1948, %v1947
    %v2212 = vpack.c.b16 %v1950, %v1949
    %v2213 = vpack.c.b16 %v1952, %v1951
    %v2214 = vpack.c.b16 %v1954, %v1953
    %v2215 = vpack.c.b16 %v1956, %v1955
    %v2216 = vpack.c.b16 %v1958, %v1957
    %v2217 = vpack.c.b16 %v1960, %v1959
    %v2218 = vpack.c.b16 %v1962, %v1961
    %v2219 = vpack.c.b16 %v1964, %v1963
    %v2220 = vpack.c.b16 %v1966, %v1965
    %v2221 = vpack.c.b16 %v1968, %v1967
    %v2222 = vpack.c.b16 %v1970, %v1969
    %v2223 = vpack.c.b16 %v1972, %v1971
    %v2224 = vpack.c.b16 %v1974, %v1973
    %v2225 = vpack.c.b16 %v1976, %v1975
    %v2226 = vpack.c.b16 %v1978, %v1977
    %v2227 = vpack.c.b16 %v1980, %v1979
    %v2228 = vpack.c.b16 %v1982, %v1981
    %v2229 = vpack.c.b16 %v1984, %v1983
    %v2230 = vpack.c.b16 %v1986, %v1985
    %v2231 = vpack.c.b16 %v1988, %v1987
    %v2232 = vpack.c.b16 %v1990, %v1989
    %v2233 = vpack.c.b16 %v1992, %v1991
    %v2234 = vpack.c.b16 %v1994, %v1993
    %v2235 = vpack.c.b16 %v1996, %v1995
    %v2236 = vpack.c.b16 %v1998, %v1997
    %v2237 = vpack.c.b16 %v2000, %v1999
    %v2238 = vpack.c.b16 %v2002, %v2001
    %v2239 = vpack.c.b16 %v2004, %v2003
    %v2240 = vpack.c.b16 %v2006, %v2005
    %v2241 = vpack.c.b16 %v2008, %v2007
    %v2242 = vpack.c.b16 %v2010, %v2009
    %v2243 = vpack.c.b16 %v2012, %v2011
    %v2244 = vpack.c.b16 %v2014, %v2013
    %v2245 = vpack.c.b16 %v2016, %v2015
    %v2246 = vpack.c.b16 %v2018, %v2017
    %v2247 = vpack.c.b16 %v2020, %v2019
    %v2248 = vpack.c.b16 %v2022, %v2021
    %v2249 = vpack.c.b16 %v2024, %v2023
    %v2250 = vpack.c.b16 %v2026, %v2025
    %v2251 = vpack.c.b16 %v2028, %v2027
    %v2252 = vpack.c.b16 %v2030, %v2029
    %v2253 = vpack.c.b16 %v2032, %v2031
    %v2254 = vpack.c.b16 %v2034, %v2033
    %v2255 = vpack.c.b16 %v2036, %v2035
    %v2256 = vpack.c.b16 %v2038, %v2037
    %v2257 = vpack.c.b16 %v2040, %v2039
    %v2258 = vpack.c.b16 %v2042, %v2041
    %v2259 = vpack.c.b16 %v2044, %v2043
    %v2260 = vpack.c.b16 %v2046, %v2045
    %v2261 = vpack.c.b16 %v2048, %v2047
    %v2262 = vpack.c.b16 %v2050, %v2049
    %v2263 = vpack.c.b16 %v2052, %v2051
    %v2264 = vpack.c.b16 %v2054, %v2053
    %v2265 = vpack.c.b16 %v2056, %v2055
    %v2266 = vpack.c.b16 %v2058, %v2057
    %v2267 = vpack.c.b16 %v2060, %v2059
    %v2268 = vpack.c.b16 %v2062, %v2061
    %v2269 = vpack.c.b16 %v2064, %v2063
    %v2270 = vpack.c.b16 %v2066, %v2065
    %v2271 = vpack.c.b16 %v2068, %v2067
    %v2272 = vpack.c.b16 %v2070, %v2069
    %v2273 = vpack.c.b16 %v2072, %v2071
    %v2274 = vpack.c.b16 %v2074, %v2073
    %v2275 = vpack.c.b16 %v2076, %v2075
    %v2276 = vpack.c.b16 %v2078, %v2077
    %v2277 = vpack.c.b16 %v2080, %v2079
    %v2278 = vpack.c.b16 %v2082, %v2081
    %v2279 = vpack.c.b16 %v2084, %v2083
    %v2280 = vpack.c.b16 %v2086, %v2085
    %v2281 = vpack.c.b16 %v2088, %v2087
    %v2282 = vpack.c.b16 %v2090, %v2089
    %2475 = vmatprep.subr.bf16.mxu0 0
    %2476 = vmatpush1.bf16.msra.mxu0 %v2098
    %2477 = vmatprep.subr.bf16.mxu0 0
    %2478 = vmatpush1.bf16.msra.mxu0 %v2097
    %2479 = vmatprep.subr.bf16.mxu0 0
    %2480 = vmatpush1.bf16.msra.mxu0 %v2096
    %2481 = vmatprep.subr.bf16.mxu0 0
    %2482 = vmatpush1.bf16.msra.mxu0 %v2095
    %2483 = vmatprep.subr.bf16.mxu0 0
    %2484 = vmatpush1.bf16.msra.mxu0 %v2094
    %2485 = vmatprep.subr.bf16.mxu0 0
    %2486 = vmatpush1.bf16.msra.mxu0 %v2093
    %2487 = vmatprep.subr.bf16.mxu0 0
    %2488 = vmatpush1.bf16.msra.mxu0 %v2092
    %2489 = vmatprep.subr.bf16.mxu0 0
    %2490 = vmatpush1.bf16.msra.mxu0 %v2091
    %2491 = vmatprep.subr.bf16.mxu0 0
    %2492 = vmatpush2.bf16.msra.mxu0 %v2106
    %2493 = vmatprep.subr.bf16.mxu0 0
    %2494 = vmatpush2.bf16.msra.mxu0 %v2105
    %2495 = vmatprep.subr.bf16.mxu0 0
    %2496 = vmatpush2.bf16.msra.mxu0 %v2104
    %2497 = vmatprep.subr.bf16.mxu0 0
    %2498 = vmatpush2.bf16.msra.mxu0 %v2103
    %2499 = vmatprep.subr.bf16.mxu0 0
    %2500 = vmatpush2.bf16.msra.mxu0 %v2102
    %2501 = vmatprep.subr.bf16.mxu0 0
    %2502 = vmatpush2.bf16.msra.mxu0 %v2101
    %2503 = vmatprep.subr.bf16.mxu0 0
    %2504 = vmatpush2.bf16.msra.mxu0 %v2100
    %2505 = vmatprep.subr.bf16.mxu0 0
    %2506 = vmatpush2.bf16.msra.mxu0 %v2099
    %2507 = vmatprep.mubr.bf16.mxu0 %v909
    %2508 = vmatmul.mubr.bf16.gmra.mxu0 %v908
    %v2509 = vpop.f32.mrf.mxu0
    %v2510 = vadd.f32 %v1321, %v2509
    %v2511 = vpop.f32.mrf.mxu0
    %v2512 = vpop.f32.mrf.mxu0
    %v2513 = vpop.f32.mrf.mxu0
    %2514 = vdwg.mxu0
    %2515 = vmatprep.subr.bf16.mxu0 0
    %2516 = vmatpush1.bf16.msra.mxu0 %v2114
    %2517 = vmatprep.subr.bf16.mxu0 0
    %2518 = vmatpush1.bf16.msra.mxu0 %v2113
    %2519 = vmatprep.subr.bf16.mxu0 0
    %2520 = vmatpush1.bf16.msra.mxu0 %v2112
    %2521 = vmatprep.subr.bf16.mxu0 0
    %2522 = vmatpush1.bf16.msra.mxu0 %v2111
    %2523 = vmatprep.subr.bf16.mxu0 0
    %2524 = vmatpush1.bf16.msra.mxu0 %v2110
    %2525 = vmatprep.subr.bf16.mxu0 0
    %2526 = vmatpush1.bf16.msra.mxu0 %v2109
    %2527 = vmatprep.subr.bf16.mxu0 0
    %2528 = vmatpush1.bf16.msra.mxu0 %v2108
    %2529 = vmatprep.subr.bf16.mxu0 0
    %2530 = vmatpush1.bf16.msra.mxu0 %v2107
    %2531 = vmatprep.subr.bf16.mxu0 0
    %2532 = vmatpush2.bf16.msra.mxu0 %v2122
    %2533 = vmatprep.subr.bf16.mxu0 0
    %2534 = vmatpush2.bf16.msra.mxu0 %v2121
    %2535 = vmatprep.subr.bf16.mxu0 0
    %2536 = vmatpush2.bf16.msra.mxu0 %v2120
    %2537 = vmatprep.subr.bf16.mxu0 0
    %2538 = vmatpush2.bf16.msra.mxu0 %v2119
    %2539 = vmatprep.subr.bf16.mxu0 0
    %2540 = vmatpush2.bf16.msra.mxu0 %v2118
    %2541 = vmatprep.subr.bf16.mxu0 0
    %2542 = vmatpush2.bf16.msra.mxu0 %v2117
    %2543 = vmatprep.subr.bf16.mxu0 0
    %2544 = vmatpush2.bf16.msra.mxu0 %v2116
    %2545 = vmatprep.subr.bf16.mxu0 0
    %2546 = vmatpush2.bf16.msra.mxu0 %v2115
    %2547 = vmatprep.mubr.bf16.mxu0 %v911
    %2548 = vmatmul.mubr.bf16.gmra.mxu0 %v910
    %v2549 = vpop.f32.mrf.mxu0
    %v2550 = vadd.f32 %v2510, %v2549
    %v2551 = vpop.f32.mrf.mxu0
    %v2552 = vpop.f32.mrf.mxu0
    %v2553 = vpop.f32.mrf.mxu0
    %2554 = vdwg.mxu0
    %2555 = vmatprep.subr.bf16.mxu0 0
    %2556 = vmatpush1.bf16.msra.mxu0 %v2130
    %2557 = vmatprep.subr.bf16.mxu0 0
    %2558 = vmatpush1.bf16.msra.mxu0 %v2129
    %2559 = vmatprep.subr.bf16.mxu0 0
    %2560 = vmatpush1.bf16.msra.mxu0 %v2128
    %2561 = vmatprep.subr.bf16.mxu0 0
    %2562 = vmatpush1.bf16.msra.mxu0 %v2127
    %2563 = vmatprep.subr.bf16.mxu0 0
    %2564 = vmatpush1.bf16.msra.mxu0 %v2126
    %2565 = vmatprep.subr.bf16.mxu0 0
    %2566 = vmatpush1.bf16.msra.mxu0 %v2125
    %2567 = vmatprep.subr.bf16.mxu0 0
    %2568 = vmatpush1.bf16.msra.mxu0 %v2124
    %2569 = vmatprep.subr.bf16.mxu0 0
    %2570 = vmatpush1.bf16.msra.mxu0 %v2123
    %2571 = vmatprep.subr.bf16.mxu0 0
    %2572 = vmatpush2.bf16.msra.mxu0 %v2138
    %2573 = vmatprep.subr.bf16.mxu0 0
    %2574 = vmatpush2.bf16.msra.mxu0 %v2137
    %2575 = vmatprep.subr.bf16.mxu0 0
    %2576 = vmatpush2.bf16.msra.mxu0 %v2136
    %2577 = vmatprep.subr.bf16.mxu0 0
    %2578 = vmatpush2.bf16.msra.mxu0 %v2135
    %2579 = vmatprep.subr.bf16.mxu0 0
    %2580 = vmatpush2.bf16.msra.mxu0 %v2134
    %2581 = vmatprep.subr.bf16.mxu0 0
    %2582 = vmatpush2.bf16.msra.mxu0 %v2133
    %2583 = vmatprep.subr.bf16.mxu0 0
    %2584 = vmatpush2.bf16.msra.mxu0 %v2132
    %2585 = vmatprep.subr.bf16.mxu0 0
    %2586 = vmatpush2.bf16.msra.mxu0 %v2131
    %2587 = vmatprep.mubr.bf16.mxu0 %v913
    %2588 = vmatmul.mubr.bf16.gmra.mxu0 %v912
    %v2589 = vpop.f32.mrf.mxu0
    %v2590 = vadd.f32 %v2550, %v2589
    %v2591 = vpop.f32.mrf.mxu0
    %v2592 = vpop.f32.mrf.mxu0
    %v2593 = vpop.f32.mrf.mxu0
    %2594 = vdwg.mxu0
    %2595 = vmatprep.subr.bf16.mxu0 0
    %2596 = vmatpush1.bf16.msra.mxu0 %v2146
    %2597 = vmatprep.subr.bf16.mxu0 0
    %2598 = vmatpush1.bf16.msra.mxu0 %v2145
    %2599 = vmatprep.subr.bf16.mxu0 0
    %2600 = vmatpush1.bf16.msra.mxu0 %v2144
    %2601 = vmatprep.subr.bf16.mxu0 0
    %2602 = vmatpush1.bf16.msra.mxu0 %v2143
    %2603 = vmatprep.subr.bf16.mxu0 0
    %2604 = vmatpush1.bf16.msra.mxu0 %v2142
    %2605 = vmatprep.subr.bf16.mxu0 0
    %2606 = vmatpush1.bf16.msra.mxu0 %v2141
    %2607 = vmatprep.subr.bf16.mxu0 0
    %2608 = vmatpush1.bf16.msra.mxu0 %v2140
    %2609 = vmatprep.subr.bf16.mxu0 0
    %2610 = vmatpush1.bf16.msra.mxu0 %v2139
    %2611 = vmatprep.subr.bf16.mxu0 0
    %2612 = vmatpush2.bf16.msra.mxu0 %v2154
    %2613 = vmatprep.subr.bf16.mxu0 0
    %2614 = vmatpush2.bf16.msra.mxu0 %v2153
    %2615 = vmatprep.subr.bf16.mxu0 0
    %2616 = vmatpush2.bf16.msra.mxu0 %v2152
    %2617 = vmatprep.subr.bf16.mxu0 0
    %2618 = vmatpush2.bf16.msra.mxu0 %v2151
    %2619 = vmatprep.subr.bf16.mxu0 0
    %2620 = vmatpush2.bf16.msra.mxu0 %v2150
    %2621 = vmatprep.subr.bf16.mxu0 0
    %2622 = vmatpush2.bf16.msra.mxu0 %v2149
    %2623 = vmatprep.subr.bf16.mxu0 0
    %2624 = vmatpush2.bf16.msra.mxu0 %v2148
    %2625 = vmatprep.subr.bf16.mxu0 0
    %2626 = vmatpush2.bf16.msra.mxu0 %v2147
    %2627 = vmatprep.mubr.bf16.mxu0 %v915
    %2628 = vmatmul.mubr.bf16.gmra.mxu0 %v914
    %v2629 = vpop.f32.mrf.mxu0
    %v2630 = vadd.f32 %v2590, %v2629
    %v2631 = vpop.f32.mrf.mxu0
    %v2632 = vpop.f32.mrf.mxu0
    %v2633 = vpop.f32.mrf.mxu0
    %2634 = vdwg.mxu0
    %2635 = vmatprep.subr.bf16.mxu0 0
    %2636 = vmatpush1.bf16.msra.mxu0 %v2162
    %2637 = vmatprep.subr.bf16.mxu0 0
    %2638 = vmatpush1.bf16.msra.mxu0 %v2161
    %2639 = vmatprep.subr.bf16.mxu0 0
    %2640 = vmatpush1.bf16.msra.mxu0 %v2160
    %2641 = vmatprep.subr.bf16.mxu0 0
    %2642 = vmatpush1.bf16.msra.mxu0 %v2159
    %2643 = vmatprep.subr.bf16.mxu0 0
    %2644 = vmatpush1.bf16.msra.mxu0 %v2158
    %2645 = vmatprep.subr.bf16.mxu0 0
    %2646 = vmatpush1.bf16.msra.mxu0 %v2157
    %2647 = vmatprep.subr.bf16.mxu0 0
    %2648 = vmatpush1.bf16.msra.mxu0 %v2156
    %2649 = vmatprep.subr.bf16.mxu0 0
    %2650 = vmatpush1.bf16.msra.mxu0 %v2155
    %2651 = vmatprep.subr.bf16.mxu0 0
    %2652 = vmatpush2.bf16.msra.mxu0 %v2170
    %2653 = vmatprep.subr.bf16.mxu0 0
    %2654 = vmatpush2.bf16.msra.mxu0 %v2169
    %2655 = vmatprep.subr.bf16.mxu0 0
    %2656 = vmatpush2.bf16.msra.mxu0 %v2168
    %2657 = vmatprep.subr.bf16.mxu0 0
    %2658 = vmatpush2.bf16.msra.mxu0 %v2167
    %2659 = vmatprep.subr.bf16.mxu0 0
    %2660 = vmatpush2.bf16.msra.mxu0 %v2166
    %2661 = vmatprep.subr.bf16.mxu0 0
    %2662 = vmatpush2.bf16.msra.mxu0 %v2165
    %2663 = vmatprep.subr.bf16.mxu0 0
    %2664 = vmatpush2.bf16.msra.mxu0 %v2164
    %2665 = vmatprep.subr.bf16.mxu0 0
    %2666 = vmatpush2.bf16.msra.mxu0 %v2163
    %2667 = vmatprep.mubr.bf16.mxu0 %v917
    %2668 = vmatmul.mubr.bf16.gmra.mxu0 %v916
    %v2669 = vpop.f32.mrf.mxu0
    %v2670 = vadd.f32 %v2630, %v2669
    %v2671 = vpop.f32.mrf.mxu0
    %v2672 = vpop.f32.mrf.mxu0
    %v2673 = vpop.f32.mrf.mxu0
    %2674 = vdwg.mxu0
    %2675 = vmatprep.subr.bf16.mxu0 0
    %2676 = vmatpush1.bf16.msra.mxu0 %v2178
    %2677 = vmatprep.subr.bf16.mxu0 0
    %2678 = vmatpush1.bf16.msra.mxu0 %v2177
    %2679 = vmatprep.subr.bf16.mxu0 0
    %2680 = vmatpush1.bf16.msra.mxu0 %v2176
    %2681 = vmatprep.subr.bf16.mxu0 0
    %2682 = vmatpush1.bf16.msra.mxu0 %v2175
    %2683 = vmatprep.subr.bf16.mxu0 0
    %2684 = vmatpush1.bf16.msra.mxu0 %v2174
    %2685 = vmatprep.subr.bf16.mxu0 0
    %2686 = vmatpush1.bf16.msra.mxu0 %v2173
    %2687 = vmatprep.subr.bf16.mxu0 0
    %2688 = vmatpush1.bf16.msra.mxu0 %v2172
    %2689 = vmatprep.subr.bf16.mxu0 0
    %2690 = vmatpush1.bf16.msra.mxu0 %v2171
    %2691 = vmatprep.subr.bf16.mxu0 0
    %2692 = vmatpush2.bf16.msra.mxu0 %v2186
    %2693 = vmatprep.subr.bf16.mxu0 0
    %2694 = vmatpush2.bf16.msra.mxu0 %v2185
    %2695 = vmatprep.subr.bf16.mxu0 0
    %2696 = vmatpush2.bf16.msra.mxu0 %v2184
    %2697 = vmatprep.subr.bf16.mxu0 0
    %2698 = vmatpush2.bf16.msra.mxu0 %v2183
    %2699 = vmatprep.subr.bf16.mxu0 0
    %2700 = vmatpush2.bf16.msra.mxu0 %v2182
    %2701 = vmatprep.subr.bf16.mxu0 0
    %2702 = vmatpush2.bf16.msra.mxu0 %v2181
    %2703 = vmatprep.subr.bf16.mxu0 0
    %2704 = vmatpush2.bf16.msra.mxu0 %v2180
    %2705 = vmatprep.subr.bf16.mxu0 0
    %2706 = vmatpush2.bf16.msra.mxu0 %v2179
    %2707 = vmatprep.mubr.bf16.mxu0 %v919
    %2708 = vmatmul.mubr.bf16.gmra.mxu0 %v918
    %v2709 = vpop.f32.mrf.mxu0
    %v2710 = vadd.f32 %v2670, %v2709
    %v2711 = vpop.f32.mrf.mxu0
    %v2712 = vpop.f32.mrf.mxu0
    %v2713 = vpop.f32.mrf.mxu0
    %2714 = vdwg.mxu0
    %2715 = vmatprep.subr.bf16.mxu0 0
    %2716 = vmatpush1.bf16.msra.mxu0 %v2194
    %2717 = vmatprep.subr.bf16.mxu0 0
    %2718 = vmatpush1.bf16.msra.mxu0 %v2193
    %2719 = vmatprep.subr.bf16.mxu0 0
    %2720 = vmatpush1.bf16.msra.mxu0 %v2192
    %2721 = vmatprep.subr.bf16.mxu0 0
    %2722 = vmatpush1.bf16.msra.mxu0 %v2191
    %2723 = vmatprep.subr.bf16.mxu0 0
    %2724 = vmatpush1.bf16.msra.mxu0 %v2190
    %2725 = vmatprep.subr.bf16.mxu0 0
    %2726 = vmatpush1.bf16.msra.mxu0 %v2189
    %2727 = vmatprep.subr.bf16.mxu0 0
    %2728 = vmatpush1.bf16.msra.mxu0 %v2188
    %2729 = vmatprep.subr.bf16.mxu0 0
    %2730 = vmatpush1.bf16.msra.mxu0 %v2187
    %2731 = vmatprep.subr.bf16.mxu0 0
    %2732 = vmatpush2.bf16.msra.mxu0 %v2202
    %2733 = vmatprep.subr.bf16.mxu0 0
    %2734 = vmatpush2.bf16.msra.mxu0 %v2201
    %2735 = vmatprep.subr.bf16.mxu0 0
    %2736 = vmatpush2.bf16.msra.mxu0 %v2200
    %2737 = vmatprep.subr.bf16.mxu0 0
    %2738 = vmatpush2.bf16.msra.mxu0 %v2199
    %2739 = vmatprep.subr.bf16.mxu0 0
    %2740 = vmatpush2.bf16.msra.mxu0 %v2198
    %2741 = vmatprep.subr.bf16.mxu0 0
    %2742 = vmatpush2.bf16.msra.mxu0 %v2197
    %2743 = vmatprep.subr.bf16.mxu0 0
    %2744 = vmatpush2.bf16.msra.mxu0 %v2196
    %2745 = vmatprep.subr.bf16.mxu0 0
    %2746 = vmatpush2.bf16.msra.mxu0 %v2195
    %2747 = vmatprep.mubr.bf16.mxu0 %v921
    %2748 = vmatmul.mubr.bf16.gmra.mxu0 %v920
    %v2749 = vpop.f32.mrf.mxu0
    %v2750 = vadd.f32 %v2710, %v2749
    %v2751 = vpop.f32.mrf.mxu0
    %v2752 = vpop.f32.mrf.mxu0
    %v2753 = vpop.f32.mrf.mxu0
    %2754 = vdwg.mxu0
    %2755 = vmatprep.subr.bf16.mxu0 0
    %2756 = vmatpush1.bf16.msra.mxu0 %v2210
    %2757 = vmatprep.subr.bf16.mxu0 0
    %2758 = vmatpush1.bf16.msra.mxu0 %v2209
    %2759 = vmatprep.subr.bf16.mxu0 0
    %2760 = vmatpush1.bf16.msra.mxu0 %v2208
    %2761 = vmatprep.subr.bf16.mxu0 0
    %2762 = vmatpush1.bf16.msra.mxu0 %v2207
    %2763 = vmatprep.subr.bf16.mxu0 0
    %2764 = vmatpush1.bf16.msra.mxu0 %v2206
    %2765 = vmatprep.subr.bf16.mxu0 0
    %2766 = vmatpush1.bf16.msra.mxu0 %v2205
    %2767 = vmatprep.subr.bf16.mxu0 0
    %2768 = vmatpush1.bf16.msra.mxu0 %v2204
    %2769 = vmatprep.subr.bf16.mxu0 0
    %2770 = vmatpush1.bf16.msra.mxu0 %v2203
    %2771 = vmatprep.subr.bf16.mxu0 0
    %2772 = vmatpush2.bf16.msra.mxu0 %v2218
    %2773 = vmatprep.subr.bf16.mxu0 0
    %2774 = vmatpush2.bf16.msra.mxu0 %v2217
    %2775 = vmatprep.subr.bf16.mxu0 0
    %2776 = vmatpush2.bf16.msra.mxu0 %v2216
    %2777 = vmatprep.subr.bf16.mxu0 0
    %2778 = vmatpush2.bf16.msra.mxu0 %v2215
    %2779 = vmatprep.subr.bf16.mxu0 0
    %2780 = vmatpush2.bf16.msra.mxu0 %v2214
    %2781 = vmatprep.subr.bf16.mxu0 0
    %2782 = vmatpush2.bf16.msra.mxu0 %v2213
    %2783 = vmatprep.subr.bf16.mxu0 0
    %2784 = vmatpush2.bf16.msra.mxu0 %v2212
    %2785 = vmatprep.subr.bf16.mxu0 0
    %2786 = vmatpush2.bf16.msra.mxu0 %v2211
    %2787 = vmatprep.mubr.bf16.mxu0 %v923
    %2788 = vmatmul.mubr.bf16.gmra.mxu0 %v922
    %v2789 = vpop.f32.mrf.mxu0
    %v2790 = vadd.f32 %v2750, %v2789
    %v2791 = vpop.f32.mrf.mxu0
    %v2792 = vpop.f32.mrf.mxu0
    %v2793 = vpop.f32.mrf.mxu0
    %2794 = vdwg.mxu0
    %2795 = vmatprep.subr.bf16.mxu0 0
    %2796 = vmatpush1.bf16.msra.mxu0 %v2226
    %2797 = vmatprep.subr.bf16.mxu0 0
    %2798 = vmatpush1.bf16.msra.mxu0 %v2225
    %2799 = vmatprep.subr.bf16.mxu0 0
    %2800 = vmatpush1.bf16.msra.mxu0 %v2224
    %2801 = vmatprep.subr.bf16.mxu0 0
    %2802 = vmatpush1.bf16.msra.mxu0 %v2223
    %2803 = vmatprep.subr.bf16.mxu0 0
    %2804 = vmatpush1.bf16.msra.mxu0 %v2222
    %2805 = vmatprep.subr.bf16.mxu0 0
    %2806 = vmatpush1.bf16.msra.mxu0 %v2221
    %2807 = vmatprep.subr.bf16.mxu0 0
    %2808 = vmatpush1.bf16.msra.mxu0 %v2220
    %2809 = vmatprep.subr.bf16.mxu0 0
    %2810 = vmatpush1.bf16.msra.mxu0 %v2219
    %2811 = vmatprep.subr.bf16.mxu0 0
    %2812 = vmatpush2.bf16.msra.mxu0 %v2234
    %2813 = vmatprep.subr.bf16.mxu0 0
    %2814 = vmatpush2.bf16.msra.mxu0 %v2233
    %2815 = vmatprep.subr.bf16.mxu0 0
    %2816 = vmatpush2.bf16.msra.mxu0 %v2232
    %2817 = vmatprep.subr.bf16.mxu0 0
    %2818 = vmatpush2.bf16.msra.mxu0 %v2231
    %2819 = vmatprep.subr.bf16.mxu0 0
    %2820 = vmatpush2.bf16.msra.mxu0 %v2230
    %2821 = vmatprep.subr.bf16.mxu0 0
    %2822 = vmatpush2.bf16.msra.mxu0 %v2229
    %2823 = vmatprep.subr.bf16.mxu0 0
    %2824 = vmatpush2.bf16.msra.mxu0 %v2228
    %2825 = vmatprep.subr.bf16.mxu0 0
    %2826 = vmatpush2.bf16.msra.mxu0 %v2227
    %2827 = vmatprep.mubr.bf16.mxu0 %v925
    %2828 = vmatmul.mubr.bf16.gmra.mxu0 %v924
    %v2829 = vpop.f32.mrf.mxu0
    %v2830 = vadd.f32 %v2790, %v2829
    %v2831 = vpop.f32.mrf.mxu0
    %v2832 = vpop.f32.mrf.mxu0
    %v2833 = vpop.f32.mrf.mxu0
    %2834 = vdwg.mxu0
    %2835 = vmatprep.subr.bf16.mxu0 0
    %2836 = vmatpush1.bf16.msra.mxu0 %v2242
    %2837 = vmatprep.subr.bf16.mxu0 0
    %2838 = vmatpush1.bf16.msra.mxu0 %v2241
    %2839 = vmatprep.subr.bf16.mxu0 0
    %2840 = vmatpush1.bf16.msra.mxu0 %v2240
    %2841 = vmatprep.subr.bf16.mxu0 0
    %2842 = vmatpush1.bf16.msra.mxu0 %v2239
    %2843 = vmatprep.subr.bf16.mxu0 0
    %2844 = vmatpush1.bf16.msra.mxu0 %v2238
    %2845 = vmatprep.subr.bf16.mxu0 0
    %2846 = vmatpush1.bf16.msra.mxu0 %v2237
    %2847 = vmatprep.subr.bf16.mxu0 0
    %2848 = vmatpush1.bf16.msra.mxu0 %v2236
    %2849 = vmatprep.subr.bf16.mxu0 0
    %2850 = vmatpush1.bf16.msra.mxu0 %v2235
    %2851 = vmatprep.subr.bf16.mxu0 0
    %2852 = vmatpush2.bf16.msra.mxu0 %v2250
    %2853 = vmatprep.subr.bf16.mxu0 0
    %2854 = vmatpush2.bf16.msra.mxu0 %v2249
    %2855 = vmatprep.subr.bf16.mxu0 0
    %2856 = vmatpush2.bf16.msra.mxu0 %v2248
    %2857 = vmatprep.subr.bf16.mxu0 0
    %2858 = vmatpush2.bf16.msra.mxu0 %v2247
    %2859 = vmatprep.subr.bf16.mxu0 0
    %2860 = vmatpush2.bf16.msra.mxu0 %v2246
    %2861 = vmatprep.subr.bf16.mxu0 0
    %2862 = vmatpush2.bf16.msra.mxu0 %v2245
    %2863 = vmatprep.subr.bf16.mxu0 0
    %2864 = vmatpush2.bf16.msra.mxu0 %v2244
    %2865 = vmatprep.subr.bf16.mxu0 0
    %2866 = vmatpush2.bf16.msra.mxu0 %v2243
    %2867 = vmatprep.mubr.bf16.mxu0 %v927
    %2868 = vmatmul.mubr.bf16.gmra.mxu0 %v926
    %v2869 = vpop.f32.mrf.mxu0
    %v2870 = vadd.f32 %v2830, %v2869
    %v2871 = vpop.f32.mrf.mxu0
    %v2872 = vpop.f32.mrf.mxu0
    %v2873 = vpop.f32.mrf.mxu0
    %2874 = vdwg.mxu0
    %2875 = vmatprep.subr.bf16.mxu0 0
    %2876 = vmatpush1.bf16.msra.mxu0 %v2258
    %2877 = vmatprep.subr.bf16.mxu0 0
    %2878 = vmatpush1.bf16.msra.mxu0 %v2257
    %2879 = vmatprep.subr.bf16.mxu0 0
    %2880 = vmatpush1.bf16.msra.mxu0 %v2256
    %2881 = vmatprep.subr.bf16.mxu0 0
    %2882 = vmatpush1.bf16.msra.mxu0 %v2255
    %2883 = vmatprep.subr.bf16.mxu0 0
    %2884 = vmatpush1.bf16.msra.mxu0 %v2254
    %2885 = vmatprep.subr.bf16.mxu0 0
    %2886 = vmatpush1.bf16.msra.mxu0 %v2253
    %2887 = vmatprep.subr.bf16.mxu0 0
    %2888 = vmatpush1.bf16.msra.mxu0 %v2252
    %2889 = vmatprep.subr.bf16.mxu0 0
    %2890 = vmatpush1.bf16.msra.mxu0 %v2251
    %2891 = vmatprep.subr.bf16.mxu0 0
    %2892 = vmatpush2.bf16.msra.mxu0 %v2266
    %2893 = vmatprep.subr.bf16.mxu0 0
    %2894 = vmatpush2.bf16.msra.mxu0 %v2265
    %2895 = vmatprep.subr.bf16.mxu0 0
    %2896 = vmatpush2.bf16.msra.mxu0 %v2264
    %2897 = vmatprep.subr.bf16.mxu0 0
    %2898 = vmatpush2.bf16.msra.mxu0 %v2263
    %2899 = vmatprep.subr.bf16.mxu0 0
    %2900 = vmatpush2.bf16.msra.mxu0 %v2262
    %2901 = vmatprep.subr.bf16.mxu0 0
    %2902 = vmatpush2.bf16.msra.mxu0 %v2261
    %2903 = vmatprep.subr.bf16.mxu0 0
    %2904 = vmatpush2.bf16.msra.mxu0 %v2260
    %2905 = vmatprep.subr.bf16.mxu0 0
    %2906 = vmatpush2.bf16.msra.mxu0 %v2259
    %2907 = vmatprep.mubr.bf16.mxu0 %v929
    %2908 = vmatmul.mubr.bf16.gmra.mxu0 %v928
    %v2909 = vpop.f32.mrf.mxu0
    %v2910 = vadd.f32 %v2870, %v2909
    %v2911 = vpop.f32.mrf.mxu0
    %v2912 = vpop.f32.mrf.mxu0
    %v2913 = vpop.f32.mrf.mxu0
    %2914 = vdwg.mxu0
    %2915 = vmatprep.subr.bf16.mxu0 0
    %2916 = vmatpush1.bf16.msra.mxu0 %v2274
    %2917 = vmatprep.subr.bf16.mxu0 0
    %2918 = vmatpush1.bf16.msra.mxu0 %v2273
    %2919 = vmatprep.subr.bf16.mxu0 0
    %2920 = vmatpush1.bf16.msra.mxu0 %v2272
    %2921 = vmatprep.subr.bf16.mxu0 0
    %2922 = vmatpush1.bf16.msra.mxu0 %v2271
    %2923 = vmatprep.subr.bf16.mxu0 0
    %2924 = vmatpush1.bf16.msra.mxu0 %v2270
    %2925 = vmatprep.subr.bf16.mxu0 0
    %2926 = vmatpush1.bf16.msra.mxu0 %v2269
    %2927 = vmatprep.subr.bf16.mxu0 0
    %2928 = vmatpush1.bf16.msra.mxu0 %v2268
    %2929 = vmatprep.subr.bf16.mxu0 0
    %2930 = vmatpush1.bf16.msra.mxu0 %v2267
    %2931 = vmatprep.subr.bf16.mxu0 0
    %2932 = vmatpush2.bf16.msra.mxu0 %v2282
    %2933 = vmatprep.subr.bf16.mxu0 0
    %2934 = vmatpush2.bf16.msra.mxu0 %v2281
    %2935 = vmatprep.subr.bf16.mxu0 0
    %2936 = vmatpush2.bf16.msra.mxu0 %v2280
    %2937 = vmatprep.subr.bf16.mxu0 0
    %2938 = vmatpush2.bf16.msra.mxu0 %v2279
    %2939 = vmatprep.subr.bf16.mxu0 0
    %2940 = vmatpush2.bf16.msra.mxu0 %v2278
    %2941 = vmatprep.subr.bf16.mxu0 0
    %2942 = vmatpush2.bf16.msra.mxu0 %v2277
    %2943 = vmatprep.subr.bf16.mxu0 0
    %2944 = vmatpush2.bf16.msra.mxu0 %v2276
    %2945 = vmatprep.subr.bf16.mxu0 0
    %2946 = vmatpush2.bf16.msra.mxu0 %v2275
    %2947 = vmatprep.mubr.bf16.mxu0 %v931
    %2948 = vmatmul.mubr.bf16.gmra.mxu0 %v930
    %v2949 = vpop.f32.mrf.mxu0
    %v2950 = vadd.f32 %v2910, %v2949
    %v2951 = vpop.f32.mrf.mxu0
    %v2952 = vpop.f32.mrf.mxu0
    %v2953 = vpop.f32.mrf.mxu0
    %2954 = vdwg.mxu0
    %v2955 = vmax.f32 %v2950, 0.0
    %v2956 = vld [vmem:[%s7] sm:$0x1]
    %s2957 = scalar_lea.vmem %s7, 1
    %v2958 = vld [vmem:[%s2957] sm:$0x1]
    %s2959 = scalar_lea.vmem %s7, 2
    %v2960 = vld [vmem:[%s2959] sm:$0x1]
    %s2961 = scalar_lea.vmem %s7, 3
    %v2962 = vld [vmem:[%s2961] sm:$0x1]
    %v2963 = vpack.c.bf16 %v2955, %v2955
    %v2964 = vld [vmem:[#allocation2] sm:$0xff]
    %v2965 = vld [vmem:[#allocation2 + $0x8] sm:$0xf]
    %v2966 = vld [vmem:[#allocation2 + $0xc] sm:$0xff]
    %v2967 = vld [vmem:[#allocation2 + $0x14] sm:$0xf]
    %v2968 = vld [vmem:[#allocation2 + $0x18] sm:$0xff]
    %v2969 = vld [vmem:[#allocation2 + $0x20] sm:$0xf]
    %v2970 = vld [vmem:[#allocation2 + $0x24] sm:$0xff]
    %v2971 = vld [vmem:[#allocation2 + $0x2c] sm:$0xf]
    %v2972 = vld [vmem:[#allocation2 + $0x30] sm:$0xff]
    %v2973 = vld [vmem:[#allocation2 + $0x38] sm:$0xf]
    %v2974 = vld [vmem:[#allocation2 + $0x3c] sm:$0xff]
    %v2975 = vld [vmem:[#allocation2 + $0x44] sm:$0xf]
    %v2976 = vld [vmem:[#allocation2 + $0x48] sm:$0xff]
    %v2977 = vld [vmem:[#allocation2 + $0x50] sm:$0xf]
    %v2978 = vld [vmem:[#allocation2 + $0x54] sm:$0xff]
    %v2979 = vld [vmem:[#allocation2 + $0x5c] sm:$0xf]
    %v2980 = vld [vmem:[#allocation2 + $0x60] sm:$0xff]
    %v2981 = vld [vmem:[#allocation2 + $0x68] sm:$0xf]
    %v2982 = vld [vmem:[#allocation2 + $0x6c] sm:$0xff]
    %v2983 = vld [vmem:[#allocation2 + $0x74] sm:$0xf]
    %v2984 = vld [vmem:[#allocation2 + $0x78] sm:$0xff]
    %v2985 = vld [vmem:[#allocation2 + $0x80] sm:$0xf]
    %v2986 = vld [vmem:[#allocation2 + $0x84] sm:$0xff]
    %v2987 = vld [vmem:[#allocation2 + $0x8c] sm:$0xf]
    %v2988 = vld [vmem:[#allocation2 + $0x90] sm:$0xff]
    %v2989 = vld [vmem:[#allocation2 + $0x98] sm:$0xf]
    %v2990 = vld [vmem:[#allocation2 + $0x9c] sm:$0xff]
    %v2991 = vld [vmem:[#allocation2 + $0xa4] sm:$0xf]
    %v2992 = vld [vmem:[#allocation2 + $0xa8] sm:$0xff]
    %v2993 = vld [vmem:[#allocation2 + $0xb0] sm:$0xf]
    %v2994 = vld [vmem:[#allocation2 + $0xb4] sm:$0xff]
    %v2995 = vld [vmem:[#allocation2 + $0xbc] sm:$0xf]
    %v2996 = vld [vmem:[%s4] sm:$0x7]
    %v2998 = vlaneseq
    %v2999 = vshrl.u32 %v2998, 7
    %v3000 = vsub.s32 0, %v2999
    %v3001 = vrot.slane %v2996, %v3000
    %v3002 = vlaneseq
    %v3003 = vshrl.u32 %v3002, 7
    %v3004 = vsub.s32 1, %v3003
    %v3005 = vrot.slane %v2996, %v3004
    %v3006 = vlaneseq
    %v3007 = vshrl.u32 %v3006, 7
    %v3008 = vsub.s32 2, %v3007
    %v3009 = vrot.slane %v2996, %v3008
    %v3045 = vunpack.c.l.b16 %v2964
    %v3046 = vunpack.c.h.b16 %v2964
    %v3047 = vunpack.c.l.b16 %v2965
    %v3048 = vunpack.c.l.b16 %v2966
    %v3049 = vunpack.c.h.b16 %v2966
    %v3050 = vunpack.c.l.b16 %v2967
    %v3051 = vunpack.c.l.b16 %v2968
    %v3052 = vunpack.c.h.b16 %v2968
    %v3053 = vunpack.c.l.b16 %v2969
    %v3054 = vunpack.c.l.b16 %v2970
    %v3055 = vunpack.c.h.b16 %v2970
    %v3056 = vunpack.c.l.b16 %v2971
    %v3057 = vunpack.c.l.b16 %v2972
    %v3058 = vunpack.c.h.b16 %v2972
    %v3059 = vunpack.c.l.b16 %v2973
    %v3060 = vunpack.c.l.b16 %v2974
    %v3061 = vunpack.c.h.b16 %v2974
    %v3062 = vunpack.c.l.b16 %v2975
    %v3063 = vunpack.c.l.b16 %v2976
    %v3064 = vunpack.c.h.b16 %v2976
    %v3065 = vunpack.c.l.b16 %v2977
    %v3066 = vunpack.c.l.b16 %v2978
    %v3067 = vunpack.c.h.b16 %v2978
    %v3068 = vunpack.c.l.b16 %v2979
    %v3069 = vunpack.c.l.b16 %v2980
    %v3070 = vunpack.c.h.b16 %v2980
    %v3071 = vunpack.c.l.b16 %v2981
    %v3072 = vunpack.c.l.b16 %v2982
    %v3073 = vunpack.c.h.b16 %v2982
    %v3074 = vunpack.c.l.b16 %v2983
    %v3075 = vunpack.c.l.b16 %v2984
    %v3076 = vunpack.c.h.b16 %v2984
    %v3077 = vunpack.c.l.b16 %v2985
    %v3078 = vunpack.c.l.b16 %v2986
    %v3079 = vunpack.c.h.b16 %v2986
    %v3080 = vunpack.c.l.b16 %v2987
    %v3081 = vunpack.c.l.b16 %v2988
    %v3082 = vunpack.c.h.b16 %v2988
    %v3083 = vunpack.c.l.b16 %v2989
    %v3084 = vunpack.c.l.b16 %v2990
    %v3085 = vunpack.c.h.b16 %v2990
    %v3086 = vunpack.c.l.b16 %v2991
    %v3087 = vunpack.c.l.b16 %v2992
    %v3088 = vunpack.c.h.b16 %v2992
    %v3089 = vunpack.c.l.b16 %v2993
    %v3090 = vunpack.c.l.b16 %v2994
    %v3091 = vunpack.c.h.b16 %v2994
    %v3092 = vunpack.c.l.b16 %v2995
    %v3093 = vpack.c.b16 %v3048, %v3045
    %v3094 = vpack.c.b16 %v3049, %v3046
    %v3095 = vpack.c.b16 %v3050, %v3047
    %v3096 = vpack.c.b16 %v3054, %v3051
    %v3097 = vpack.c.b16 %v3055, %v3052
    %v3098 = vpack.c.b16 %v3056, %v3053
    %v3099 = vpack.c.b16 %v3060, %v3057
    %v3100 = vpack.c.b16 %v3061, %v3058
    %v3101 = vpack.c.b16 %v3062, %v3059
    %v3102 = vpack.c.b16 %v3066, %v3063
    %v3103 = vpack.c.b16 %v3067, %v3064
    %v3104 = vpack.c.b16 %v3068, %v3065
    %v3105 = vpack.c.b16 %v3072, %v3069
    %v3106 = vpack.c.b16 %v3073, %v3070
    %v3107 = vpack.c.b16 %v3074, %v3071
    %v3108 = vpack.c.b16 %v3078, %v3075
    %v3109 = vpack.c.b16 %v3079, %v3076
    %v3110 = vpack.c.b16 %v3080, %v3077
    %v3111 = vpack.c.b16 %v3084, %v3081
    %v3112 = vpack.c.b16 %v3085, %v3082
    %v3113 = vpack.c.b16 %v3086, %v3083
    %v3114 = vpack.c.b16 %v3090, %v3087
    %v3115 = vpack.c.b16 %v3091, %v3088
    %v3116 = vpack.c.b16 %v3092, %v3089
    %3141 = vmatprep.subr.bf16.mxu0 %v3115
    %3142 = vmatpush1.bf16.msra.mxu0 %v3114
    %3143 = vmatprep.subr.bf16.mxu0 %v3112
    %3144 = vmatpush1.bf16.msra.mxu0 %v3111
    %3145 = vmatprep.subr.bf16.mxu0 %v3109
    %3146 = vmatpush1.bf16.msra.mxu0 %v3108
    %3147 = vmatprep.subr.bf16.mxu0 %v3106
    %3148 = vmatpush1.bf16.msra.mxu0 %v3105
    %3149 = vmatprep.subr.bf16.mxu0 %v3103
    %3150 = vmatpush1.bf16.msra.mxu0 %v3102
    %3151 = vmatprep.subr.bf16.mxu0 %v3100
    %3152 = vmatpush1.bf16.msra.mxu0 %v3099
    %3153 = vmatprep.subr.bf16.mxu0 %v3097
    %3154 = vmatpush1.bf16.msra.mxu0 %v3096
    %3155 = vmatprep.subr.bf16.mxu0 %v3094
    %3156 = vmatpush1.bf16.msra.mxu0 %v3093
    %3157 = vmatprep.subr.bf16.mxu0 0
    %3158 = vmatpush2.bf16.msra.mxu0 0
    %3159 = vmatprep.subr.bf16.mxu0 0
    %3160 = vmatpush2.bf16.msra.mxu0 0
    %3161 = vmatprep.subr.bf16.mxu0 0
    %3162 = vmatpush2.bf16.msra.mxu0 0
    %3163 = vmatprep.subr.bf16.mxu0 0
    %3164 = vmatpush2.bf16.msra.mxu0 0
    %3165 = vmatprep.subr.bf16.mxu0 0
    %3166 = vmatpush2.bf16.msra.mxu0 0
    %3167 = vmatprep.subr.bf16.mxu0 0
    %3168 = vmatpush2.bf16.msra.mxu0 0
    %3169 = vmatprep.subr.bf16.mxu0 0
    %3170 = vmatpush2.bf16.msra.mxu0 0
    %3171 = vmatprep.subr.bf16.mxu0 0
    %3172 = vmatpush2.bf16.msra.mxu0 0
    %3173 = vmatprep.mubr.bf16.mxu0 0
    %3174 = vmatmul.mubr.bf16.gmra.mxu0 %v2963
    %v3175 = vpop.f32.mrf.mxu0
    %v3176 = vadd.f32 %v3001, %v3175
    %v3177 = vpop.f32.mrf.mxu0
    %v3178 = vadd.f32 %v3005, %v3177
    %v3179 = vpop.f32.mrf.mxu0
    %v3180 = vpop.f32.mrf.mxu0
    %3181 = vdwg.mxu0
    %3182 = vmatprep.subr.bf16.mxu0 0
    %3183 = vmatpush1.bf16.msra.mxu0 %v3116
    %3184 = vmatprep.subr.bf16.mxu0 0
    %3185 = vmatpush1.bf16.msra.mxu0 %v3113
    %3186 = vmatprep.subr.bf16.mxu0 0
    %3187 = vmatpush1.bf16.msra.mxu0 %v3110
    %3188 = vmatprep.subr.bf16.mxu0 0
    %3189 = vmatpush1.bf16.msra.mxu0 %v3107
    %3190 = vmatprep.subr.bf16.mxu0 0
    %3191 = vmatpush1.bf16.msra.mxu0 %v3104
    %3192 = vmatprep.subr.bf16.mxu0 0
    %3193 = vmatpush1.bf16.msra.mxu0 %v3101
    %3194 = vmatprep.subr.bf16.mxu0 0
    %3195 = vmatpush1.bf16.msra.mxu0 %v3098
    %3196 = vmatprep.subr.bf16.mxu0 0
    %3197 = vmatpush1.bf16.msra.mxu0 %v3095
    %3198 = vmatprep.subr.bf16.mxu0 0
    %3199 = vmatpush2.bf16.msra.mxu0 0
    %3200 = vmatprep.subr.bf16.mxu0 0
    %3201 = vmatpush2.bf16.msra.mxu0 0
    %3202 = vmatprep.subr.bf16.mxu0 0
    %3203 = vmatpush2.bf16.msra.mxu0 0
    %3204 = vmatprep.subr.bf16.mxu0 0
    %3205 = vmatpush2.bf16.msra.mxu0 0
    %3206 = vmatprep.subr.bf16.mxu0 0
    %3207 = vmatpush2.bf16.msra.mxu0 0
    %3208 = vmatprep.subr.bf16.mxu0 0
    %3209 = vmatpush2.bf16.msra.mxu0 0
    %3210 = vmatprep.subr.bf16.mxu0 0
    %3211 = vmatpush2.bf16.msra.mxu0 0
    %3212 = vmatprep.subr.bf16.mxu0 0
    %3213 = vmatpush2.bf16.msra.mxu0 0
    %3214 = vmatprep.mubr.bf16.mxu0 0
    %3215 = vmatmul.mubr.bf16.gmra.mxu0 %v2963
    %v3216 = vpop.f32.mrf.mxu0
    %v3217 = vadd.f32 %v3009, %v3216
    %v3218 = vpop.f32.mrf.mxu0
    %v3219 = vpop.f32.mrf.mxu0
    %v3220 = vpop.f32.mrf.mxu0
    %3221 = vdwg.mxu0
    %v3223 = vcombine.high %v3176, %v3176
    %v3225 = vunpack.c.l.s4 1966171168
    %v3226 = vunpack.c.0.s8 %v3225
    %v3227 = vlaneseq
    %v3228 = vshrl.u32 %v3227, 7
    %v3229 = vsub.s32 %v3226, %v3228
    %v3230 = vrot.slane %v3176, %v3229
    %v3232 = vunpack.c.l.s4 1966171168
    %v3233 = vunpack.c.0.s8 %v3232
    %v3234 = vlaneseq
    %v3235 = vshrl.u32 %v3234, 7
    %v3236 = vsub.s32 %v3233, %v3235
    %v3237 = vrot.slane %v3223, %v3236
    %v3238 = vcombine.high %v3230, %v3230
    %v3239 = vcombine.high %v3237, %v3237
    %v3241 = vunpack.c.l.s4 1966171168
    %v3242 = vunpack.c.0.s8 %v3241
    %v3243 = vlaneseq
    %v3244 = vshrl.u32 %v3243, 7
    %v3245 = vsub.s32 %v3242, %v3244
    %v3246 = vrot.slane %v3230, %v3245
    %v3248 = vunpack.c.l.s4 1966171168
    %v3249 = vunpack.c.0.s8 %v3248
    %v3250 = vlaneseq
    %v3251 = vshrl.u32 %v3250, 7
    %v3252 = vsub.s32 %v3249, %v3251
    %v3253 = vrot.slane %v3237, %v3252
    %v3255 = vunpack.c.l.s4 1966171168
    %v3256 = vunpack.c.0.s8 %v3255
    %v3257 = vlaneseq
    %v3258 = vshrl.u32 %v3257, 7
    %v3259 = vsub.s32 %v3256, %v3258
    %v3260 = vrot.slane %v3238, %v3259
    %v3262 = vunpack.c.l.s4 1966171168
    %v3263 = vunpack.c.0.s8 %v3262
    %v3264 = vlaneseq
    %v3265 = vshrl.u32 %v3264, 7
    %v3266 = vsub.s32 %v3263, %v3265
    %v3267 = vrot.slane %v3239, %v3266
    %v3268 = vcombine.high %v3246, %v3246
    %v3269 = vcombine.high %v3260, %v3260
    %v3271 = vcombine.high %v3178, %v3178
    %v3273 = vunpack.c.l.s4 1966171168
    %v3274 = vunpack.c.0.s8 %v3273
    %v3275 = vlaneseq
    %v3276 = vshrl.u32 %v3275, 7
    %v3277 = vsub.s32 %v3274, %v3276
    %v3278 = vrot.slane %v3178, %v3277
    %v3280 = vunpack.c.l.s4 1966171168
    %v3281 = vunpack.c.0.s8 %v3280
    %v3282 = vlaneseq
    %v3283 = vshrl.u32 %v3282, 7
    %v3284 = vsub.s32 %v3281, %v3283
    %v3285 = vrot.slane %v3271, %v3284
    %v3286 = vcombine.high %v3278, %v3278
    %v3287 = vcombine.high %v3285, %v3285
    %v3289 = vunpack.c.l.s4 1966171168
    %v3290 = vunpack.c.0.s8 %v3289
    %v3291 = vlaneseq
    %v3292 = vshrl.u32 %v3291, 7
    %v3293 = vsub.s32 %v3290, %v3292
    %v3294 = vrot.slane %v3278, %v3293
    %v3296 = vunpack.c.l.s4 1966171168
    %v3297 = vunpack.c.0.s8 %v3296
    %v3298 = vlaneseq
    %v3299 = vshrl.u32 %v3298, 7
    %v3300 = vsub.s32 %v3297, %v3299
    %v3301 = vrot.slane %v3285, %v3300
    %v3303 = vunpack.c.l.s4 1966171168
    %v3304 = vunpack.c.0.s8 %v3303
    %v3305 = vlaneseq
    %v3306 = vshrl.u32 %v3305, 7
    %v3307 = vsub.s32 %v3304, %v3306
    %v3308 = vrot.slane %v3286, %v3307
    %v3310 = vunpack.c.l.s4 1966171168
    %v3311 = vunpack.c.0.s8 %v3310
    %v3312 = vlaneseq
    %v3313 = vshrl.u32 %v3312, 7
    %v3314 = vsub.s32 %v3311, %v3313
    %v3315 = vrot.slane %v3287, %v3314
    %v3316 = vcombine.high %v3294, %v3294
    %v3317 = vcombine.high %v3308, %v3308
    %v3319 = vcombine.high %v3217, %v3217
    %v3321 = vunpack.c.l.s4 1966171168
    %v3322 = vunpack.c.0.s8 %v3321
    %v3323 = vlaneseq
    %v3324 = vshrl.u32 %v3323, 7
    %v3325 = vsub.s32 %v3322, %v3324
    %v3326 = vrot.slane %v3217, %v3325
    %v3328 = vunpack.c.l.s4 1966171168
    %v3329 = vunpack.c.0.s8 %v3328
    %v3330 = vlaneseq
    %v3331 = vshrl.u32 %v3330, 7
    %v3332 = vsub.s32 %v3329, %v3331
    %v3333 = vrot.slane %v3319, %v3332
    %v3334 = vcombine.high %v3326, %v3326
    %v3335 = vcombine.high %v3333, %v3333
    %v3337 = vunpack.c.l.s4 1966171168
    %v3338 = vunpack.c.0.s8 %v3337
    %v3339 = vlaneseq
    %v3340 = vshrl.u32 %v3339, 7
    %v3341 = vsub.s32 %v3338, %v3340
    %v3342 = vrot.slane %v3326, %v3341
    %v3344 = vunpack.c.l.s4 1966171168
    %v3345 = vunpack.c.0.s8 %v3344
    %v3346 = vlaneseq
    %v3347 = vshrl.u32 %v3346, 7
    %v3348 = vsub.s32 %v3345, %v3347
    %v3349 = vrot.slane %v3333, %v3348
    %v3351 = vunpack.c.l.s4 1966171168
    %v3352 = vunpack.c.0.s8 %v3351
    %v3353 = vlaneseq
    %v3354 = vshrl.u32 %v3353, 7
    %v3355 = vsub.s32 %v3352, %v3354
    %v3356 = vrot.slane %v3334, %v3355
    %v3358 = vunpack.c.l.s4 1966171168
    %v3359 = vunpack.c.0.s8 %v3358
    %v3360 = vlaneseq
    %v3361 = vshrl.u32 %v3360, 7
    %v3362 = vsub.s32 %v3359, %v3361
    %v3363 = vrot.slane %v3335, %v3362
    %v3364 = vcombine.high %v3342, %v3342
    %v3365 = vcombine.high %v3356, %v3356
    %v3366 = vcombine.low %v3246, %v3260
    %v3368 = vunpack.c.l.s4 1966171168
    %v3369 = vunpack.c.0.s8 %v3368
    %v3370 = vlaneseq
    %v3371 = vshrl.u32 %v3370, 7
    %v3372 = vsub.s32 %v3369, %v3371
    %v3373 = vrot.slane %v3366, %v3372
    %v3375 = vunpack.c.l.s4 1966171168
    %v3376 = vunpack.c.0.s8 %v3375
    %v3377 = vlaneseq
    %v3378 = vshrl.u32 %v3377, 7
    %v3379 = vsub.s32 %v3376, %v3378
    %v3380 = vrot.slane %v3268, %v3379
    %v3381 = vcombine.low %v3373, %v3380
    %v3383 = vunpack.c.l.s4 1966171168
    %v3384 = vunpack.c.0.s8 %v3383
    %v3385 = vlaneseq
    %v3386 = vshrl.u32 %v3385, 7
    %v3387 = vsub.s32 %v3384, %v3386
    %v3388 = vrot.slane %v3381, %v3387
    %v3390 = vcombine.low %v3294, %v3308
    %v3392 = vunpack.c.l.s4 1966171168
    %v3393 = vunpack.c.0.s8 %v3392
    %v3394 = vlaneseq
    %v3395 = vshrl.u32 %v3394, 7
    %v3396 = vsub.s32 %v3393, %v3395
    %v3397 = vrot.slane %v3390, %v3396
    %v3399 = vunpack.c.l.s4 1966171168
    %v3400 = vunpack.c.0.s8 %v3399
    %v3401 = vlaneseq
    %v3402 = vshrl.u32 %v3401, 7
    %v3403 = vsub.s32 %v3400, %v3402
    %v3404 = vrot.slane %v3316, %v3403
    %v3405 = vcombine.low %v3397, %v3404
    %v3407 = vunpack.c.l.s4 1966171168
    %v3408 = vunpack.c.0.s8 %v3407
    %v3409 = vlaneseq
    %v3410 = vshrl.u32 %v3409, 7
    %v3411 = vsub.s32 %v3408, %v3410
    %v3412 = vrot.slane %v3405, %v3411
    %3414 = vmatprep.subr.mxu0 0.0
    %3415 = vmatpush1.xpose.msra.mxu0 0.0
    %3416 = vmatprep.subr.mxu0 0.0
    %3417 = vmatpush1.xpose.msra.mxu0 0.0
    %3418 = vmatprep.subr.mxu0 0.0
    %3419 = vmatpush1.xpose.msra.mxu0 0.0
    %3420 = vmatprep.subr.mxu0 0.0
    %3421 = vmatpush1.xpose.msra.mxu0 0.0
    %3422 = vmatprep.subr.mxu0 0.0
    %3423 = vmatpush1.xpose.msra.mxu0 0.0
    %3424 = vmatprep.subr.mxu0 0.0
    %3425 = vmatpush1.xpose.msra.mxu0 0.0
    %3426 = vmatprep.subr.mxu0 0.0
    %3427 = vmatpush1.xpose.msra.mxu0 0.0
    %3428 = vmatprep.subr.mxu0 0.0
    %3429 = vmatpush1.xpose.msra.mxu0 0.0
    %3430 = vmatprep.subr.mxu0 0.0
    %3431 = vmatpush1.xpose.msra.mxu0 0.0
    %3432 = vmatprep.subr.mxu0 0.0
    %3433 = vmatpush1.xpose.msra.mxu0 0.0
    %3434 = vmatprep.subr.mxu0 0.0
    %3435 = vmatpush1.xpose.msra.mxu0 0.0
    %3436 = vmatprep.subr.mxu0 0.0
    %3437 = vmatpush1.xpose.msra.mxu0 0.0
    %3438 = vmatprep.subr.mxu0 0.0
    %3439 = vmatpush1.xpose.msra.mxu0 0.0
    %3440 = vmatprep.subr.mxu0 0.0
    %3441 = vmatpush1.xpose.msra.mxu0 0.0
    %3442 = vmatprep.subr.mxu0 0.0
    %3443 = vmatpush1.xpose.msra.mxu0 0.0
    %3444 = vmatprep.subr.mxu0 0.0
    %3445 = vmatpush1.xpose.msra.mxu0 %v3412
    %3446 = vmatprep.subr.mxu0 0.0
    %3447 = vmatpush2.xpose.msra.mxu0 0.0
    %3448 = vmatprep.subr.mxu0 0.0
    %3449 = vmatpush2.xpose.msra.mxu0 0.0
    %3450 = vmatprep.subr.mxu0 0.0
    %3451 = vmatpush2.xpose.msra.mxu0 0.0
    %3452 = vmatprep.subr.mxu0 0.0
    %3453 = vmatpush2.xpose.msra.mxu0 0.0
    %3454 = vmatprep.subr.mxu0 0.0
    %3455 = vmatpush2.xpose.msra.mxu0 0.0
    %3456 = vmatprep.subr.mxu0 0.0
    %3457 = vmatpush2.xpose.msra.mxu0 0.0
    %3458 = vmatprep.subr.mxu0 0.0
    %3459 = vmatpush2.xpose.msra.mxu0 0.0
    %3460 = vmatprep.subr.mxu0 0.0
    %3461 = vmatpush2.xpose.msra.mxu0 0.0
    %3462 = vmatprep.subr.mxu0 0.0
    %3463 = vmatpush2.xpose.msra.mxu0 0.0
    %3464 = vmatprep.subr.mxu0 0.0
    %3465 = vmatpush2.xpose.msra.mxu0 0.0
    %3466 = vmatprep.subr.mxu0 0.0
    %3467 = vmatpush2.xpose.msra.mxu0 0.0
    %3468 = vmatprep.subr.mxu0 0.0
    %3469 = vmatpush2.xpose.msra.mxu0 0.0
    %3470 = vmatprep.subr.mxu0 0.0
    %3471 = vmatpush2.xpose.msra.mxu0 0.0
    %3472 = vmatprep.subr.mxu0 0.0
    %3473 = vmatpush2.xpose.msra.mxu0 0.0
    %3474 = vmatprep.subr.mxu0 0.0
    %3475 = vmatpush2.xpose.msra.mxu0 0.0
    %3476 = vmatprep.subr.mxu0 0.0
    %3477 = vmatpush2.xpose.msra.mxu0 0.0
    %3478 = vmatprep.mubr.f32.mxu0 0.0
    %3479 = vmatmul.mubr.f32.gmra.mxu0 %v3388
    %v3480 = vpop.f32.mrf.mxu0
    %v3481 = vadd.f32 0.0, %v3480
    %v3482 = vpop.f32.mrf.mxu0
    %3483 = vdwg.mxu0
    %v3484 = vcombine.low %v3269, %v3253
    %v3486 = vunpack.c.l.s4 1966171168
    %v3487 = vunpack.c.0.s8 %v3486
    %v3488 = vlaneseq
    %v3489 = vshrl.u32 %v3488, 7
    %v3490 = vsub.s32 %v3487, %v3489
    %v3491 = vrot.slane %v3484, %v3490
    %v3493 = vunpack.c.l.s4 1966171168
    %v3494 = vunpack.c.0.s8 %v3493
    %v3495 = vlaneseq
    %v3496 = vshrl.u32 %v3495, 7
    %v3497 = vsub.s32 %v3494, %v3496
    %v3498 = vrot.slane %v3267, %v3497
    %v3499 = vcombine.low %v3491, %v3498
    %v3501 = vunpack.c.l.s4 1966171168
    %v3502 = vunpack.c.0.s8 %v3501
    %v3503 = vlaneseq
    %v3504 = vshrl.u32 %v3503, 7
    %v3505 = vsub.s32 %v3502, %v3504
    %v3506 = vrot.slane %v3499, %v3505
    %v3508 = vcombine.low %v3317, %v3301
    %v3510 = vunpack.c.l.s4 1966171168
    %v3511 = vunpack.c.0.s8 %v3510
    %v3512 = vlaneseq
    %v3513 = vshrl.u32 %v3512, 7
    %v3514 = vsub.s32 %v3511, %v3513
    %v3515 = vrot.slane %v3508, %v3514
    %v3517 = vunpack.c.l.s4 1966171168
    %v3518 = vunpack.c.0.s8 %v3517
    %v3519 = vlaneseq
    %v3520 = vshrl.u32 %v3519, 7
    %v3521 = vsub.s32 %v3518, %v3520
    %v3522 = vrot.slane %v3315, %v3521
    %v3523 = vcombine.low %v3515, %v3522
    %v3525 = vunpack.c.l.s4 1966171168
    %v3526 = vunpack.c.0.s8 %v3525
    %v3527 = vlaneseq
    %v3528 = vshrl.u32 %v3527, 7
    %v3529 = vsub.s32 %v3526, %v3528
    %v3530 = vrot.slane %v3523, %v3529
    %3532 = vmatprep.subr.mxu0 0.0
    %3533 = vmatpush1.xpose.msra.mxu0 0.0
    %3534 = vmatprep.subr.mxu0 0.0
    %3535 = vmatpush1.xpose.msra.mxu0 0.0
    %3536 = vmatprep.subr.mxu0 0.0
    %3537 = vmatpush1.xpose.msra.mxu0 0.0
    %3538 = vmatprep.subr.mxu0 0.0
    %3539 = vmatpush1.xpose.msra.mxu0 0.0
    %3540 = vmatprep.subr.mxu0 0.0
    %3541 = vmatpush1.xpose.msra.mxu0 0.0
    %3542 = vmatprep.subr.mxu0 0.0
    %3543 = vmatpush1.xpose.msra.mxu0 0.0
    %3544 = vmatprep.subr.mxu0 0.0
    %3545 = vmatpush1.xpose.msra.mxu0 0.0
    %3546 = vmatprep.subr.mxu0 0.0
    %3547 = vmatpush1.xpose.msra.mxu0 0.0
    %3548 = vmatprep.subr.mxu0 0.0
    %3549 = vmatpush1.xpose.msra.mxu0 0.0
    %3550 = vmatprep.subr.mxu0 0.0
    %3551 = vmatpush1.xpose.msra.mxu0 0.0
    %3552 = vmatprep.subr.mxu0 0.0
    %3553 = vmatpush1.xpose.msra.mxu0 0.0
    %3554 = vmatprep.subr.mxu0 0.0
    %3555 = vmatpush1.xpose.msra.mxu0 0.0
    %3556 = vmatprep.subr.mxu0 0.0
    %3557 = vmatpush1.xpose.msra.mxu0 0.0
    %3558 = vmatprep.subr.mxu0 0.0
    %3559 = vmatpush1.xpose.msra.mxu0 0.0
    %3560 = vmatprep.subr.mxu0 0.0
    %3561 = vmatpush1.xpose.msra.mxu0 0.0
    %3562 = vmatprep.subr.mxu0 0.0
    %3563 = vmatpush1.xpose.msra.mxu0 %v3530
    %3564 = vmatprep.subr.mxu0 0.0
    %3565 = vmatpush2.xpose.msra.mxu0 0.0
    %3566 = vmatprep.subr.mxu0 0.0
    %3567 = vmatpush2.xpose.msra.mxu0 0.0
    %3568 = vmatprep.subr.mxu0 0.0
    %3569 = vmatpush2.xpose.msra.mxu0 0.0
    %3570 = vmatprep.subr.mxu0 0.0
    %3571 = vmatpush2.xpose.msra.mxu0 0.0
    %3572 = vmatprep.subr.mxu0 0.0
    %3573 = vmatpush2.xpose.msra.mxu0 0.0
    %3574 = vmatprep.subr.mxu0 0.0
    %3575 = vmatpush2.xpose.msra.mxu0 0.0
    %3576 = vmatprep.subr.mxu0 0.0
    %3577 = vmatpush2.xpose.msra.mxu0 0.0
    %3578 = vmatprep.subr.mxu0 0.0
    %3579 = vmatpush2.xpose.msra.mxu0 0.0
    %3580 = vmatprep.subr.mxu0 0.0
    %3581 = vmatpush2.xpose.msra.mxu0 0.0
    %3582 = vmatprep.subr.mxu0 0.0
    %3583 = vmatpush2.xpose.msra.mxu0 0.0
    %3584 = vmatprep.subr.mxu0 0.0
    %3585 = vmatpush2.xpose.msra.mxu0 0.0
    %3586 = vmatprep.subr.mxu0 0.0
    %3587 = vmatpush2.xpose.msra.mxu0 0.0
    %3588 = vmatprep.subr.mxu0 0.0
    %3589 = vmatpush2.xpose.msra.mxu0 0.0
    %3590 = vmatprep.subr.mxu0 0.0
    %3591 = vmatpush2.xpose.msra.mxu0 0.0
    %3592 = vmatprep.subr.mxu0 0.0
    %3593 = vmatpush2.xpose.msra.mxu0 0.0
    %3594 = vmatprep.subr.mxu0 0.0
    %3595 = vmatpush2.xpose.msra.mxu0 0.0
    %3596 = vmatprep.mubr.f32.mxu0 0.0
    %3597 = vmatmul.mubr.f32.gmra.mxu0 %v3506
    %v3598 = vpop.f32.mrf.mxu0
    %v3599 = vadd.f32 0.0, %v3598
    %v3600 = vpop.f32.mrf.mxu0
    %3601 = vdwg.mxu0
    %v3602 = vmul.f32 %v3481, 0.088388346
    %v3603 = vmul.f32 %v3599, 0.088388346
    %vm3604 = vcmask 18432
    %v3605 = vsel %vm3604, %v3602, -inf
    %3606 = vmax.xlane.f32.xlu0 %v3605
    %v3607 = vpop.xlane.xlu0 %3606
    %v3608 = vsel %vm3604, %v3603, -inf
    %3609 = vmax.xlane.f32.xlu0 %v3608
    %v3610 = vpop.xlane.xlu0 %3609
    %v3611 = vsub.f32 %v3602, %v3607
    %v3612 = vsub.f32 %v3603, %v3610
    %v3613 = vmul.f32 %v3611, 1.442695
    %v3614 = vpow.pop %v3613
    %v3615 = vmul.f32 %v3612, 1.442695
    %v3616 = vpow.pop %v3615
    %v3617 = vsel %vm3604, %v3614, 0.0
    %3618 = vadd.xlane.f32.xlu0 %v3617
    %v3619 = vpop.xlane.xlu0 %3618
    %v3620 = vsel %vm3604, %v3616, 0.0
    %3621 = vadd.xlane.f32.xlu0 %v3620
    %v3622 = vpop.xlane.xlu0 %3621
    %v3623 = vrcp.pop %v3619
    %v3624 = vrcp.pop %v3622
    %v3625 = vmul.f32 %v3614, %v3623
    %v3626 = vmul.f32 %v3616, %v3624
    %v3627 = vcombine.low %v3342, %v3356
    %v3629 = vunpack.c.l.s4 1966171168
    %v3630 = vunpack.c.0.s8 %v3629
    %v3631 = vlaneseq
    %v3632 = vshrl.u32 %v3631, 7
    %v3633 = vsub.s32 %v3630, %v3632
    %v3634 = vrot.slane %v3627, %v3633
    %v3636 = vunpack.c.l.s4 1966171168
    %v3637 = vunpack.c.0.s8 %v3636
    %v3638 = vlaneseq
    %v3639 = vshrl.u32 %v3638, 7
    %v3640 = vsub.s32 %v3637, %v3639
    %v3641 = vrot.slane %v3364, %v3640
    %v3642 = vcombine.low %v3634, %v3641
    %v3644 = vunpack.c.l.s4 1966171168
    %v3645 = vunpack.c.0.s8 %v3644
    %v3646 = vlaneseq
    %v3647 = vshrl.u32 %v3646, 7
    %v3648 = vsub.s32 %v3645, %v3647
    %v3649 = vrot.slane %v3642, %v3648
    %vm3650 = vcmask 23552
    %v3652 = vsel %vm3650, %v3625, 0
    %vm3654 = vcmask 1042432
    %v3655 = vsel %vm3654, %v3649, 0
    %3657 = vmatprep.subr.mxu0 0.0
    %3658 = vmatpush1.msra.mxu0 0.0
    %3659 = vmatprep.subr.mxu0 0.0
    %3660 = vmatpush1.msra.mxu0 0.0
    %3661 = vmatprep.subr.mxu0 0.0
    %3662 = vmatpush1.msra.mxu0 0.0
    %3663 = vmatprep.subr.mxu0 0.0
    %3664 = vmatpush1.msra.mxu0 0.0
    %3665 = vmatprep.subr.mxu0 0.0
    %3666 = vmatpush1.msra.mxu0 0.0
    %3667 = vmatprep.subr.mxu0 0.0
    %3668 = vmatpush1.msra.mxu0 0.0
    %3669 = vmatprep.subr.mxu0 0.0
    %3670 = vmatpush1.msra.mxu0 0.0
    %3671 = vmatprep.subr.mxu0 0.0
    %3672 = vmatpush1.msra.mxu0 0.0
    %3673 = vmatprep.subr.mxu0 0.0
    %3674 = vmatpush1.msra.mxu0 0.0
    %3675 = vmatprep.subr.mxu0 0.0
    %3676 = vmatpush1.msra.mxu0 0.0
    %3677 = vmatprep.subr.mxu0 0.0
    %3678 = vmatpush1.msra.mxu0 0.0
    %3679 = vmatprep.subr.mxu0 0.0
    %3680 = vmatpush1.msra.mxu0 0.0
    %3681 = vmatprep.subr.mxu0 0.0
    %3682 = vmatpush1.msra.mxu0 0.0
    %3683 = vmatprep.subr.mxu0 0.0
    %3684 = vmatpush1.msra.mxu0 0.0
    %3685 = vmatprep.subr.mxu0 0.0
    %3686 = vmatpush1.msra.mxu0 0.0
    %3687 = vmatprep.subr.mxu0 0.0
    %3688 = vmatpush1.msra.mxu0 %v3655
    %3689 = vmatprep.subr.mxu0 0.0
    %3690 = vmatpush2.msra.mxu0 0.0
    %3691 = vmatprep.subr.mxu0 0.0
    %3692 = vmatpush2.msra.mxu0 0.0
    %3693 = vmatprep.subr.mxu0 0.0
    %3694 = vmatpush2.msra.mxu0 0.0
    %3695 = vmatprep.subr.mxu0 0.0
    %3696 = vmatpush2.msra.mxu0 0.0
    %3697 = vmatprep.subr.mxu0 0.0
    %3698 = vmatpush2.msra.mxu0 0.0
    %3699 = vmatprep.subr.mxu0 0.0
    %3700 = vmatpush2.msra.mxu0 0.0
    %3701 = vmatprep.subr.mxu0 0.0
    %3702 = vmatpush2.msra.mxu0 0.0
    %3703 = vmatprep.subr.mxu0 0.0
    %3704 = vmatpush2.msra.mxu0 0.0
    %3705 = vmatprep.subr.mxu0 0.0
    %3706 = vmatpush2.msra.mxu0 0.0
    %3707 = vmatprep.subr.mxu0 0.0
    %3708 = vmatpush2.msra.mxu0 0.0
    %3709 = vmatprep.subr.mxu0 0.0
    %3710 = vmatpush2.msra.mxu0 0.0
    %3711 = vmatprep.subr.mxu0 0.0
    %3712 = vmatpush2.msra.mxu0 0.0
    %3713 = vmatprep.subr.mxu0 0.0
    %3714 = vmatpush2.msra.mxu0 0.0
    %3715 = vmatprep.subr.mxu0 0.0
    %3716 = vmatpush2.msra.mxu0 0.0
    %3717 = vmatprep.subr.mxu0 0.0
    %3718 = vmatpush2.msra.mxu0 0.0
    %3719 = vmatprep.subr.mxu0 0.0
    %3720 = vmatpush2.msra.mxu0 0.0
    %3721 = vmatprep.mubr.f32.mxu0 0.0
    %3722 = vmatmul.mubr.f32.gmra.mxu0 %v3652
    %v3723 = vpop.f32.mrf.mxu0
    %v3724 = vadd.f32 0.0, %v3723
    %v3725 = vpop.f32.mrf.mxu0
    %3726 = vdwg.mxu0
    %v3727 = vcombine.low %v3365, %v3349
    %v3729 = vunpack.c.l.s4 1966171168
    %v3730 = vunpack.c.0.s8 %v3729
    %v3731 = vlaneseq
    %v3732 = vshrl.u32 %v3731, 7
    %v3733 = vsub.s32 %v3730, %v3732
    %v3734 = vrot.slane %v3727, %v3733
    %v3736 = vunpack.c.l.s4 1966171168
    %v3737 = vunpack.c.0.s8 %v3736
    %v3738 = vlaneseq
    %v3739 = vshrl.u32 %v3738, 7
    %v3740 = vsub.s32 %v3737, %v3739
    %v3741 = vrot.slane %v3363, %v3740
    %v3742 = vcombine.low %v3734, %v3741
    %v3744 = vunpack.c.l.s4 1966171168
    %v3745 = vunpack.c.0.s8 %v3744
    %v3746 = vlaneseq
    %v3747 = vshrl.u32 %v3746, 7
    %v3748 = vsub.s32 %v3745, %v3747
    %v3749 = vrot.slane %v3742, %v3748
    %v3751 = vsel %vm3650, %v3626, 0
    %v3753 = vsel %vm3654, %v3749, 0
    %3755 = vmatprep.subr.mxu0 0.0
    %3756 = vmatpush1.msra.mxu0 0.0
    %3757 = vmatprep.subr.mxu0 0.0
    %3758 = vmatpush1.msra.mxu0 0.0
    %3759 = vmatprep.subr.mxu0 0.0
    %3760 = vmatpush1.msra.mxu0 0.0
    %3761 = vmatprep.subr.mxu0 0.0
    %3762 = vmatpush1.msra.mxu0 0.0
    %3763 = vmatprep.subr.mxu0 0.0
    %3764 = vmatpush1.msra.mxu0 0.0
    %3765 = vmatprep.subr.mxu0 0.0
    %3766 = vmatpush1.msra.mxu0 0.0
    %3767 = vmatprep.subr.mxu0 0.0
    %3768 = vmatpush1.msra.mxu0 0.0
    %3769 = vmatprep.subr.mxu0 0.0
    %3770 = vmatpush1.msra.mxu0 0.0
    %3771 = vmatprep.subr.mxu0 0.0
    %3772 = vmatpush1.msra.mxu0 0.0
    %3773 = vmatprep.subr.mxu0 0.0
    %3774 = vmatpush1.msra.mxu0 0.0
    %3775 = vmatprep.subr.mxu0 0.0
    %3776 = vmatpush1.msra.mxu0 0.0
    %3777 = vmatprep.subr.mxu0 0.0
    %3778 = vmatpush1.msra.mxu0 0.0
    %3779 = vmatprep.subr.mxu0 0.0
    %3780 = vmatpush1.msra.mxu0 0.0
    %3781 = vmatprep.subr.mxu0 0.0
    %3782 = vmatpush1.msra.mxu0 0.0
    %3783 = vmatprep.subr.mxu0 0.0
    %3784 = vmatpush1.msra.mxu0 0.0
    %3785 = vmatprep.subr.mxu0 0.0
    %3786 = vmatpush1.msra.mxu0 %v3753
    %3787 = vmatprep.subr.mxu0 0.0
    %3788 = vmatpush2.msra.mxu0 0.0
    %3789 = vmatprep.subr.mxu0 0.0
    %3790 = vmatpush2.msra.mxu0 0.0
    %3791 = vmatprep.subr.mxu0 0.0
    %3792 = vmatpush2.msra.mxu0 0.0
    %3793 = vmatprep.subr.mxu0 0.0
    %3794 = vmatpush2.msra.mxu0 0.0
    %3795 = vmatprep.subr.mxu0 0.0
    %3796 = vmatpush2.msra.mxu0 0.0
    %3797 = vmatprep.subr.mxu0 0.0
    %3798 = vmatpush2.msra.mxu0 0.0
    %3799 = vmatprep.subr.mxu0 0.0
    %3800 = vmatpush2.msra.mxu0 0.0
    %3801 = vmatprep.subr.mxu0 0.0
    %3802 = vmatpush2.msra.mxu0 0.0
    %3803 = vmatprep.subr.mxu0 0.0
    %3804 = vmatpush2.msra.mxu0 0.0
    %3805 = vmatprep.subr.mxu0 0.0
    %3806 = vmatpush2.msra.mxu0 0.0
    %3807 = vmatprep.subr.mxu0 0.0
    %3808 = vmatpush2.msra.mxu0 0.0
    %3809 = vmatprep.subr.mxu0 0.0
    %3810 = vmatpush2.msra.mxu0 0.0
    %3811 = vmatprep.subr.mxu0 0.0
    %3812 = vmatpush2.msra.mxu0 0.0
    %3813 = vmatprep.subr.mxu0 0.0
    %3814 = vmatpush2.msra.mxu0 0.0
    %3815 = vmatprep.subr.mxu0 0.0
    %3816 = vmatpush2.msra.mxu0 0.0
    %3817 = vmatprep.subr.mxu0 0.0
    %3818 = vmatpush2.msra.mxu0 0.0
    %3819 = vmatprep.mubr.f32.mxu0 0.0
    %3820 = vmatmul.mubr.f32.gmra.mxu0 %v3751
    %v3821 = vpop.f32.mrf.mxu0
    %v3822 = vadd.f32 0.0, %v3821
    %v3823 = vpop.f32.mrf.mxu0
    %3824 = vdwg.mxu0
    %v3828 = vunpack.c.l.s4 1966171168
    %v3829 = vunpack.c.0.s8 %v3828
    %v3830 = vlaneseq
    %v3831 = vshrl.u32 %v3830, 7
    %v3832 = vsub.s32 %v3829, %v3831
    %v3833 = vrot.slane %v3724, %v3832
    %v3834 = vcombine.high %v3833, %v3833
    %v3836 = vunpack.c.l.s4 1966171168
    %v3837 = vunpack.c.0.s8 %v3836
    %v3838 = vlaneseq
    %v3839 = vshrl.u32 %v3838, 7
    %v3840 = vsub.s32 %v3837, %v3839
    %v3841 = vrot.slane %v3833, %v3840
    %v3843 = vunpack.c.l.s4 1966171168
    %v3844 = vunpack.c.0.s8 %v3843
    %v3845 = vlaneseq
    %v3846 = vshrl.u32 %v3845, 7
    %v3847 = vsub.s32 %v3844, %v3846
    %v3848 = vrot.slane %v3834, %v3847
    %v3849 = vcombine.high %v3841, %v3841
    %v3851 = vunpack.c.l.s4 1966171168
    %v3852 = vunpack.c.0.s8 %v3851
    %v3853 = vlaneseq
    %v3854 = vshrl.u32 %v3853, 7
    %v3855 = vsub.s32 %v3852, %v3854
    %v3856 = vrot.slane %v3822, %v3855
    %v3857 = vcombine.high %v3856, %v3856
    %v3859 = vunpack.c.l.s4 1966171168
    %v3860 = vunpack.c.0.s8 %v3859
    %v3861 = vlaneseq
    %v3862 = vshrl.u32 %v3861, 7
    %v3863 = vsub.s32 %v3860, %v3862
    %v3864 = vrot.slane %v3856, %v3863
    %v3866 = vunpack.c.l.s4 1966171168
    %v3867 = vunpack.c.0.s8 %v3866
    %v3868 = vlaneseq
    %v3869 = vshrl.u32 %v3868, 7
    %v3870 = vsub.s32 %v3867, %v3869
    %v3871 = vrot.slane %v3857, %v3870
    %v3872 = vcombine.high %v3864, %v3864
    %v3873 = vcombine.low %v3841, %v3848
    %v3874 = vcombine.low %v3849, %v3864
    %v3875 = vcombine.low %v3871, %v3872
    %v3877 = vunpack.c.l.s4 1966171168
    %v3878 = vunpack.c.0.s8 %v3877
    %v3879 = vlaneseq
    %v3880 = vshrl.u32 %v3879, 7
    %v3881 = vsub.s32 %v3878, %v3880
    %v3882 = vrot.slane %v3873, %v3881
    %v3884 = vunpack.c.l.s4 1966171168
    %v3885 = vunpack.c.0.s8 %v3884
    %v3886 = vlaneseq
    %v3887 = vshrl.u32 %v3886, 7
    %v3888 = vsub.s32 %v3885, %v3887
    %v3889 = vrot.slane %v3874, %v3888
    %v3891 = vunpack.c.l.s4 1966171168
    %v3892 = vunpack.c.0.s8 %v3891
    %v3893 = vlaneseq
    %v3894 = vshrl.u32 %v3893, 7
    %v3895 = vsub.s32 %v3892, %v3894
    %v3896 = vrot.slane %v3875, %v3895
    %v3897 = vcombine.low %v3882, %v3889
    %v3899 = vunpack.c.l.s4 1966171168
    %v3900 = vunpack.c.0.s8 %v3899
    %v3901 = vlaneseq
    %v3902 = vshrl.u32 %v3901, 7
    %v3903 = vsub.s32 %v3900, %v3902
    %v3904 = vrot.slane %v3897, %v3903
    %v3906 = vunpack.c.l.s4 1966171168
    %v3907 = vunpack.c.0.s8 %v3906
    %v3908 = vlaneseq
    %v3909 = vshrl.u32 %v3908, 7
    %v3910 = vsub.s32 %v3907, %v3909
    %v3911 = vrot.slane %v3896, %v3910
    %v3912 = vcombine.low %v3904, %v3911
    %v3914 = vpack.c.bf16 %v3912, %v3912
    %v3915 = vld [vmem:[#allocation5] sm:$0xf]
    %v3916 = vld [vmem:[#allocation5 + $0x4] sm:$0xf]
    %v3917 = vld [vmem:[#allocation5 + $0x8] sm:$0xf]
    %v3918 = vld [vmem:[#allocation5 + $0xc] sm:$0xf]
    %v3919 = vld [vmem:[#allocation5 + $0x10] sm:$0xf]
    %v3920 = vld [vmem:[#allocation5 + $0x14] sm:$0xf]
    %v3921 = vld [vmem:[#allocation5 + $0x18] sm:$0xf]
    %v3922 = vld [vmem:[#allocation5 + $0x1c] sm:$0xf]
    %v3923 = vld [vmem:[#allocation5 + $0x20] sm:$0xf]
    %v3924 = vld [vmem:[#allocation5 + $0x24] sm:$0xf]
    %v3925 = vld [vmem:[#allocation5 + $0x28] sm:$0xf]
    %v3926 = vld [vmem:[#allocation5 + $0x2c] sm:$0xf]
    %v3927 = vld [vmem:[#allocation5 + $0x30] sm:$0xf]
    %v3928 = vld [vmem:[#allocation5 + $0x34] sm:$0xf]
    %v3929 = vld [vmem:[#allocation5 + $0x38] sm:$0xf]
    %v3930 = vld [vmem:[#allocation5 + $0x3c] sm:$0xf]
    %v3931 = vld [vmem:[%s6] sm:$0x1]
    %v3933 = vlaneseq
    %v3934 = vshrl.u32 %v3933, 7
    %v3935 = vsub.s32 0, %v3934
    %v3936 = vrot.slane %v3931, %v3935
    %v3954 = vunpack.c.l.b16 %v3915
    %v3955 = vunpack.c.l.b16 %v3916
    %v3956 = vunpack.c.l.b16 %v3917
    %v3957 = vunpack.c.l.b16 %v3918
    %v3958 = vunpack.c.l.b16 %v3919
    %v3959 = vunpack.c.l.b16 %v3920
    %v3960 = vunpack.c.l.b16 %v3921
    %v3961 = vunpack.c.l.b16 %v3922
    %v3962 = vunpack.c.l.b16 %v3923
    %v3963 = vunpack.c.l.b16 %v3924
    %v3964 = vunpack.c.l.b16 %v3925
    %v3965 = vunpack.c.l.b16 %v3926
    %v3966 = vunpack.c.l.b16 %v3927
    %v3967 = vunpack.c.l.b16 %v3928
    %v3968 = vunpack.c.l.b16 %v3929
    %v3969 = vunpack.c.l.b16 %v3930
    %v3970 = vpack.c.b16 %v3955, %v3954
    %v3971 = vpack.c.b16 %v3957, %v3956
    %v3972 = vpack.c.b16 %v3959, %v3958
    %v3973 = vpack.c.b16 %v3961, %v3960
    %v3974 = vpack.c.b16 %v3963, %v3962
    %v3975 = vpack.c.b16 %v3965, %v3964
    %v3976 = vpack.c.b16 %v3967, %v3966
    %v3977 = vpack.c.b16 %v3969, %v3968
    %3986 = vmatprep.subr.bf16.mxu0 0
    %3987 = vmatpush1.bf16.msra.mxu0 %v3977
    %3988 = vmatprep.subr.bf16.mxu0 0
    %3989 = vmatpush1.bf16.msra.mxu0 %v3976
    %3990 = vmatprep.subr.bf16.mxu0 0
    %3991 = vmatpush1.bf16.msra.mxu0 %v3975
    %3992 = vmatprep.subr.bf16.mxu0 0
    %3993 = vmatpush1.bf16.msra.mxu0 %v3974
    %3994 = vmatprep.subr.bf16.mxu0 0
    %3995 = vmatpush1.bf16.msra.mxu0 %v3973
    %3996 = vmatprep.subr.bf16.mxu0 0
    %3997 = vmatpush1.bf16.msra.mxu0 %v3972
    %3998 = vmatprep.subr.bf16.mxu0 0
    %3999 = vmatpush1.bf16.msra.mxu0 %v3971
    %4000 = vmatprep.subr.bf16.mxu0 0
    %4001 = vmatpush1.bf16.msra.mxu0 %v3970
    %4002 = vmatprep.subr.bf16.mxu0 0
    %4003 = vmatpush2.bf16.msra.mxu0 0
    %4004 = vmatprep.subr.bf16.mxu0 0
    %4005 = vmatpush2.bf16.msra.mxu0 0
    %4006 = vmatprep.subr.bf16.mxu0 0
    %4007 = vmatpush2.bf16.msra.mxu0 0
    %4008 = vmatprep.subr.bf16.mxu0 0
    %4009 = vmatpush2.bf16.msra.mxu0 0
    %4010 = vmatprep.subr.bf16.mxu0 0
    %4011 = vmatpush2.bf16.msra.mxu0 0
    %4012 = vmatprep.subr.bf16.mxu0 0
    %4013 = vmatpush2.bf16.msra.mxu0 0
    %4014 = vmatprep.subr.bf16.mxu0 0
    %4015 = vmatpush2.bf16.msra.mxu0 0
    %4016 = vmatprep.subr.bf16.mxu0 0
    %4017 = vmatpush2.bf16.msra.mxu0 0
    %4018 = vmatprep.mubr.bf16.mxu0 0
    %4019 = vmatmul.mubr.bf16.gmra.mxu0 %v3914
    %v4020 = vpop.f32.mrf.mxu0
    %v4021 = vadd.f32 %v3936, %v4020
    %v4022 = vpop.f32.mrf.mxu0
    %v4023 = vpop.f32.mrf.mxu0
    %v4024 = vpop.f32.mrf.mxu0
    %4025 = vdwg.mxu0
    %v4026 = vadd.f32 %v2955, %v4021
    %vm4027 = vcmask 1045504
    %v4028 = vsel %vm4027, %v4026, 0.0
    %4029 = vadd.xlane.f32.xlu0 %v4028
    %v4030 = vpop.xlane.xlu0 %4029
    %v4031 = vrcp.pop 128.0
    %v4032 = vmul.f32 %v4030, %v4031
    %v4033 = vsub.f32 %v4026, %v4032
    %v4034 = vmul.f32 %v4033, %v4033
    %v4035 = vsel %vm4027, %v4034, 0.0
    %4036 = vadd.xlane.f32.xlu0 %v4035
    %v4037 = vpop.xlane.xlu0 %4036
    %v4038 = vmul.f32 %v4037, %v4031
    %v4039 = vadd.f32 %v4038, 1e-05
    %v4040 = vrsqrt.pop %v4039
    %v4041 = vmul.f32 %v4033, %v4040
    %v4043 = vlaneseq
    %v4044 = vshrl.u32 %v4043, 7
    %v4045 = vsub.s32 0, %v4044
    %v4046 = vrot.slane %v2956, %v4045
    %v4048 = vmul.f32 %v4041, %v4046
    %v4050 = vlaneseq
    %v4051 = vshrl.u32 %v4050, 7
    %v4052 = vsub.s32 0, %v4051
    %v4053 = vrot.slane %v2958, %v4052
    %v4055 = vadd.f32 %v4048, %v4053
    %v4056 = vpack.c.bf16 %v4055, %v4055
    %v4057 = vld [vmem:[#allocation7] sm:$0xff]
    %v4058 = vld [vmem:[#allocation7 + $0x8] sm:$0xff]
    %v4059 = vld [vmem:[#allocation7 + $0x10] sm:$0xff]
    %v4060 = vld [vmem:[#allocation7 + $0x18] sm:$0xff]
    %v4061 = vld [vmem:[#allocation7 + $0x20] sm:$0xff]
    %v4062 = vld [vmem:[#allocation7 + $0x28] sm:$0xff]
    %v4063 = vld [vmem:[#allocation7 + $0x30] sm:$0xff]
    %v4064 = vld [vmem:[#allocation7 + $0x38] sm:$0xff]
    %v4065 = vld [vmem:[#allocation7 + $0x40] sm:$0xff]
    %v4066 = vld [vmem:[#allocation7 + $0x48] sm:$0xff]
    %v4067 = vld [vmem:[#allocation7 + $0x50] sm:$0xff]
    %v4068 = vld [vmem:[#allocation7 + $0x58] sm:$0xff]
    %v4069 = vld [vmem:[#allocation7 + $0x60] sm:$0xff]
    %v4070 = vld [vmem:[#allocation7 + $0x68] sm:$0xff]
    %v4071 = vld [vmem:[#allocation7 + $0x70] sm:$0xff]
    %v4072 = vld [vmem:[#allocation7 + $0x78] sm:$0xff]
    %v4073 = vld [vmem:[%s9] sm:$0x3]
    %v4075 = vlaneseq
    %v4076 = vshrl.u32 %v4075, 7
    %v4077 = vsub.s32 0, %v4076
    %v4078 = vrot.slane %v4073, %v4077
    %v4079 = vlaneseq
    %v4080 = vshrl.u32 %v4079, 7
    %v4081 = vsub.s32 1, %v4080
    %v4082 = vrot.slane %v4073, %v4081
    %v4101 = vunpack.c.l.b16 %v4057
    %v4102 = vunpack.c.h.b16 %v4057
    %v4103 = vunpack.c.l.b16 %v4058
    %v4104 = vunpack.c.h.b16 %v4058
    %v4105 = vunpack.c.l.b16 %v4059
    %v4106 = vunpack.c.h.b16 %v4059
    %v4107 = vunpack.c.l.b16 %v4060
    %v4108 = vunpack.c.h.b16 %v4060
    %v4109 = vunpack.c.l.b16 %v4061
    %v4110 = vunpack.c.h.b16 %v4061
    %v4111 = vunpack.c.l.b16 %v4062
    %v4112 = vunpack.c.h.b16 %v4062
    %v4113 = vunpack.c.l.b16 %v4063
    %v4114 = vunpack.c.h.b16 %v4063
    %v4115 = vunpack.c.l.b16 %v4064
    %v4116 = vunpack.c.h.b16 %v4064
    %v4117 = vunpack.c.l.b16 %v4065
    %v4118 = vunpack.c.h.b16 %v4065
    %v4119 = vunpack.c.l.b16 %v4066
    %v4120 = vunpack.c.h.b16 %v4066
    %v4121 = vunpack.c.l.b16 %v4067
    %v4122 = vunpack.c.h.b16 %v4067
    %v4123 = vunpack.c.l.b16 %v4068
    %v4124 = vunpack.c.h.b16 %v4068
    %v4125 = vunpack.c.l.b16 %v4069
    %v4126 = vunpack.c.h.b16 %v4069
    %v4127 = vunpack.c.l.b16 %v4070
    %v4128 = vunpack.c.h.b16 %v4070
    %v4129 = vunpack.c.l.b16 %v4071
    %v4130 = vunpack.c.h.b16 %v4071
    %v4131 = vunpack.c.l.b16 %v4072
    %v4132 = vunpack.c.h.b16 %v4072
    %v4133 = vpack.c.b16 %v4103, %v4101
    %v4134 = vpack.c.b16 %v4104, %v4102
    %v4135 = vpack.c.b16 %v4107, %v4105
    %v4136 = vpack.c.b16 %v4108, %v4106
    %v4137 = vpack.c.b16 %v4111, %v4109
    %v4138 = vpack.c.b16 %v4112, %v4110
    %v4139 = vpack.c.b16 %v4115, %v4113
    %v4140 = vpack.c.b16 %v4116, %v4114
    %v4141 = vpack.c.b16 %v4119, %v4117
    %v4142 = vpack.c.b16 %v4120, %v4118
    %v4143 = vpack.c.b16 %v4123, %v4121
    %v4144 = vpack.c.b16 %v4124, %v4122
    %v4145 = vpack.c.b16 %v4127, %v4125
    %v4146 = vpack.c.b16 %v4128, %v4126
    %v4147 = vpack.c.b16 %v4131, %v4129
    %v4148 = vpack.c.b16 %v4132, %v4130
    %4165 = vmatprep.subr.bf16.mxu0 %v4148
    %4166 = vmatpush1.bf16.msra.mxu0 %v4147
    %4167 = vmatprep.subr.bf16.mxu0 %v4146
    %4168 = vmatpush1.bf16.msra.mxu0 %v4145
    %4169 = vmatprep.subr.bf16.mxu0 %v4144
    %4170 = vmatpush1.bf16.msra.mxu0 %v4143
    %4171 = vmatprep.subr.bf16.mxu0 %v4142
    %4172 = vmatpush1.bf16.msra.mxu0 %v4141
    %4173 = vmatprep.subr.bf16.mxu0 %v4140
    %4174 = vmatpush1.bf16.msra.mxu0 %v4139
    %4175 = vmatprep.subr.bf16.mxu0 %v4138
    %4176 = vmatpush1.bf16.msra.mxu0 %v4137
    %4177 = vmatprep.subr.bf16.mxu0 %v4136
    %4178 = vmatpush1.bf16.msra.mxu0 %v4135
    %4179 = vmatprep.subr.bf16.mxu0 %v4134
    %4180 = vmatpush1.bf16.msra.mxu0 %v4133
    %4181 = vmatprep.subr.bf16.mxu0 0
    %4182 = vmatpush2.bf16.msra.mxu0 0
    %4183 = vmatprep.subr.bf16.mxu0 0
    %4184 = vmatpush2.bf16.msra.mxu0 0
    %4185 = vmatprep.subr.bf16.mxu0 0
    %4186 = vmatpush2.bf16.msra.mxu0 0
    %4187 = vmatprep.subr.bf16.mxu0 0
    %4188 = vmatpush2.bf16.msra.mxu0 0
    %4189 = vmatprep.subr.bf16.mxu0 0
    %4190 = vmatpush2.bf16.msra.mxu0 0
    %4191 = vmatprep.subr.bf16.mxu0 0
    %4192 = vmatpush2.bf16.msra.mxu0 0
    %4193 = vmatprep.subr.bf16.mxu0 0
    %4194 = vmatpush2.bf16.msra.mxu0 0
    %4195 = vmatprep.subr.bf16.mxu0 0
    %4196 = vmatpush2.bf16.msra.mxu0 0
    %4197 = vmatprep.mubr.bf16.mxu0 0
    %4198 = vmatmul.mubr.bf16.gmra.mxu0 %v4056
    %v4199 = vpop.f32.mrf.mxu0
    %v4200 = vadd.f32 %v4078, %v4199
    %v4201 = vpop.f32.mrf.mxu0
    %v4202 = vadd.f32 %v4082, %v4201
    %v4203 = vpop.f32.mrf.mxu0
    %v4204 = vpop.f32.mrf.mxu0
    %4205 = vdwg.mxu0
    %v4206 = vmax.f32 %v4200, 0.0
    %v4207 = vmax.f32 %v4202, 0.0
    %v4208 = vpack.c.bf16 %v4206, %v4206
    %v4209 = vpack.c.bf16 %v4207, %v4207
    %v4210 = vld [vmem:[#allocation8] sm:$0xf]
    %v4211 = vld [vmem:[#allocation8 + $0x4] sm:$0xf]
    %v4212 = vld [vmem:[#allocation8 + $0x8] sm:$0xf]
    %v4213 = vld [vmem:[#allocation8 + $0xc] sm:$0xf]
    %v4214 = vld [vmem:[#allocation8 + $0x10] sm:$0xf]
    %v4215 = vld [vmem:[#allocation8 + $0x14] sm:$0xf]
    %v4216 = vld [vmem:[#allocation8 + $0x18] sm:$0xf]
    %v4217 = vld [vmem:[#allocation8 + $0x1c] sm:$0xf]
    %v4218 = vld [vmem:[#allocation8 + $0x20] sm:$0xf]
    %v4219 = vld [vmem:[#allocation8 + $0x24] sm:$0xf]
    %v4220 = vld [vmem:[#allocation8 + $0x28] sm:$0xf]
    %v4221 = vld [vmem:[#allocation8 + $0x2c] sm:$0xf]
    %v4222 = vld [vmem:[#allocation8 + $0x30] sm:$0xf]
    %v4223 = vld [vmem:[#allocation8 + $0x34] sm:$0xf]
    %v4224 = vld [vmem:[#allocation8 + $0x38] sm:$0xf]
    %v4225 = vld [vmem:[#allocation8 + $0x3c] sm:$0xf]
    %v4226 = vld [vmem:[#allocation8 + $0x40] sm:$0xf]
    %v4227 = vld [vmem:[#allocation8 + $0x44] sm:$0xf]
    %v4228 = vld [vmem:[#allocation8 + $0x48] sm:$0xf]
    %v4229 = vld [vmem:[#allocation8 + $0x4c] sm:$0xf]
    %v4230 = vld [vmem:[#allocation8 + $0x50] sm:$0xf]
    %v4231 = vld [vmem:[#allocation8 + $0x54] sm:$0xf]
    %v4232 = vld [vmem:[#allocation8 + $0x58] sm:$0xf]
    %v4233 = vld [vmem:[#allocation8 + $0x5c] sm:$0xf]
    %v4234 = vld [vmem:[#allocation8 + $0x60] sm:$0xf]
    %v4235 = vld [vmem:[#allocation8 + $0x64] sm:$0xf]
    %v4236 = vld [vmem:[#allocation8 + $0x68] sm:$0xf]
    %v4237 = vld [vmem:[#allocation8 + $0x6c] sm:$0xf]
    %v4238 = vld [vmem:[#allocation8 + $0x70] sm:$0xf]
    %v4239 = vld [vmem:[#allocation8 + $0x74] sm:$0xf]
    %v4240 = vld [vmem:[#allocation8 + $0x78] sm:$0xf]
    %v4241 = vld [vmem:[#allocation8 + $0x7c] sm:$0xf]
    %v4242 = vld [vmem:[%s11] sm:$0x1]
    %v4244 = vlaneseq
    %v4245 = vshrl.u32 %v4244, 7
    %v4246 = vsub.s32 0, %v4245
    %v4247 = vrot.slane %v4242, %v4246
    %v4281 = vunpack.c.l.b16 %v4210
    %v4282 = vunpack.c.l.b16 %v4211
    %v4283 = vunpack.c.l.b16 %v4212
    %v4284 = vunpack.c.l.b16 %v4213
    %v4285 = vunpack.c.l.b16 %v4214
    %v4286 = vunpack.c.l.b16 %v4215
    %v4287 = vunpack.c.l.b16 %v4216
    %v4288 = vunpack.c.l.b16 %v4217
    %v4289 = vunpack.c.l.b16 %v4218
    %v4290 = vunpack.c.l.b16 %v4219
    %v4291 = vunpack.c.l.b16 %v4220
    %v4292 = vunpack.c.l.b16 %v4221
    %v4293 = vunpack.c.l.b16 %v4222
    %v4294 = vunpack.c.l.b16 %v4223
    %v4295 = vunpack.c.l.b16 %v4224
    %v4296 = vunpack.c.l.b16 %v4225
    %v4297 = vunpack.c.l.b16 %v4226
    %v4298 = vunpack.c.l.b16 %v4227
    %v4299 = vunpack.c.l.b16 %v4228
    %v4300 = vunpack.c.l.b16 %v4229
    %v4301 = vunpack.c.l.b16 %v4230
    %v4302 = vunpack.c.l.b16 %v4231
    %v4303 = vunpack.c.l.b16 %v4232
    %v4304 = vunpack.c.l.b16 %v4233
    %v4305 = vunpack.c.l.b16 %v4234
    %v4306 = vunpack.c.l.b16 %v4235
    %v4307 = vunpack.c.l.b16 %v4236
    %v4308 = vunpack.c.l.b16 %v4237
    %v4309 = vunpack.c.l.b16 %v4238
    %v4310 = vunpack.c.l.b16 %v4239
    %v4311 = vunpack.c.l.b16 %v4240
    %v4312 = vunpack.c.l.b16 %v4241
    %v4313 = vpack.c.b16 %v4282, %v4281
    %v4314 = vpack.c.b16 %v4284, %v4283
    %v4315 = vpack.c.b16 %v4286, %v4285
    %v4316 = vpack.c.b16 %v4288, %v4287
    %v4317 = vpack.c.b16 %v4290, %v4289
    %v4318 = vpack.c.b16 %v4292, %v4291
    %v4319 = vpack.c.b16 %v4294, %v4293
    %v4320 = vpack.c.b16 %v4296, %v4295
    %v4321 = vpack.c.b16 %v4298, %v4297
    %v4322 = vpack.c.b16 %v4300, %v4299
    %v4323 = vpack.c.b16 %v4302, %v4301
    %v4324 = vpack.c.b16 %v4304, %v4303
    %v4325 = vpack.c.b16 %v4306, %v4305
    %v4326 = vpack.c.b16 %v4308, %v4307
    %v4327 = vpack.c.b16 %v4310, %v4309
    %v4328 = vpack.c.b16 %v4312, %v4311
    %4345 = vmatprep.subr.bf16.mxu0 0
    %4346 = vmatpush1.bf16.msra.mxu0 %v4320
    %4347 = vmatprep.subr.bf16.mxu0 0
    %4348 = vmatpush1.bf16.msra.mxu0 %v4319
    %4349 = vmatprep.subr.bf16.mxu0 0
    %4350 = vmatpush1.bf16.msra.mxu0 %v4318
    %4351 = vmatprep.subr.bf16.mxu0 0
    %4352 = vmatpush1.bf16.msra.mxu0 %v4317
    %4353 = vmatprep.subr.bf16.mxu0 0
    %4354 = vmatpush1.bf16.msra.mxu0 %v4316
    %4355 = vmatprep.subr.bf16.mxu0 0
    %4356 = vmatpush1.bf16.msra.mxu0 %v4315
    %4357 = vmatprep.subr.bf16.mxu0 0
    %4358 = vmatpush1.bf16.msra.mxu0 %v4314
    %4359 = vmatprep.subr.bf16.mxu0 0
    %4360 = vmatpush1.bf16.msra.mxu0 %v4313
    %4361 = vmatprep.subr.bf16.mxu0 0
    %4362 = vmatpush2.bf16.msra.mxu0 %v4328
    %4363 = vmatprep.subr.bf16.mxu0 0
    %4364 = vmatpush2.bf16.msra.mxu0 %v4327
    %4365 = vmatprep.subr.bf16.mxu0 0
    %4366 = vmatpush2.bf16.msra.mxu0 %v4326
    %4367 = vmatprep.subr.bf16.mxu0 0
    %4368 = vmatpush2.bf16.msra.mxu0 %v4325
    %4369 = vmatprep.subr.bf16.mxu0 0
    %4370 = vmatpush2.bf16.msra.mxu0 %v4324
    %4371 = vmatprep.subr.bf16.mxu0 0
    %4372 = vmatpush2.bf16.msra.mxu0 %v4323
    %4373 = vmatprep.subr.bf16.mxu0 0
    %4374 = vmatpush2.bf16.msra.mxu0 %v4322
    %4375 = vmatprep.subr.bf16.mxu0 0
    %4376 = vmatpush2.bf16.msra.mxu0 %v4321
    %4377 = vmatprep.mubr.bf16.mxu0 %v4209
    %4378 = vmatmul.mubr.bf16.gmra.mxu0 %v4208
    %v4379 = vpop.f32.mrf.mxu0
    %v4380 = vadd.f32 %v4247, %v4379
    %v4381 = vpop.f32.mrf.mxu0
    %v4382 = vpop.f32.mrf.mxu0
    %v4383 = vpop.f32.mrf.mxu0
    %4384 = vdwg.mxu0
    %v4385 = vadd.f32 %v4055, %v4380
    %v4386 = vsel %vm4027, %v4385, 0.0
    %4387 = vadd.xlane.f32.xlu0 %v4386
    %v4388 = vpop.xlane.xlu0 %4387
    %v4389 = vmul.f32 %v4388, %v4031
    %v4390 = vsub.f32 %v4385, %v4389
    %v4391 = vmul.f32 %v4390, %v4390
    %v4392 = vsel %vm4027, %v4391, 0.0
    %4393 = vadd.xlane.f32.xlu0 %v4392
    %v4394 = vpop.xlane.xlu0 %4393
    %v4395 = vmul.f32 %v4394, %v4031
    %v4396 = vadd.f32 %v4395, 1e-05
    %v4397 = vrsqrt.pop %v4396
    %v4398 = vmul.f32 %v4390, %v4397
    %v4400 = vlaneseq
    %v4401 = vshrl.u32 %v4400, 7
    %v4402 = vsub.s32 0, %v4401
    %v4403 = vrot.slane %v2960, %v4402
    %v4405 = vmul.f32 %v4398, %v4403
    %v4407 = vlaneseq
    %v4408 = vshrl.u32 %v4407, 7
    %v4409 = vsub.s32 0, %v4408
    %v4410 = vrot.slane %v2962, %v4409
    %v4412 = vadd.f32 %v4405, %v4410
    %vm4413 = vcmask 1040384
    %v4414 = vsel %vm4413, %v4412, 0.0
    %v4415 = vrot.slane %v4412, 2
    %vm4416 = vcmask 1041409
    %v4417 = vsel %vm4416, %v4415, %v4414
    %v4418 = vrot.slane %v4412, 1
    %v4419 = vsel %vm4413, %v4418, 0.0
    %v4420 = vrot.slane %v4412, 3
    %v4421 = vsel %vm4416, %v4420, %v4419
    %v4422 = vsel %vm4413, %v4415, 0.0
    %v4423 = vrot.slane %v4412, 4
    %v4424 = vsel %vm4416, %v4423, %v4422
    %v4425 = vpack.c.bf16 %v4417, %v4417
    %v4426 = vpack.c.bf16 %v4421, %v4421
    %v4427 = vpack.c.bf16 %v4424, %v4424
    %v4428 = vld [vmem:[%s12] sm:$0xf]
    %v4429 = vld [vmem:[%s12 + $0x4] sm:$0xf]
    %v4430 = vld [vmem:[%s12 + $0x8] sm:$0xf]
    %v4431 = vld [vmem:[%s12 + $0xc] sm:$0xf]
    %v4432 = vld [vmem:[%s12 + $0x10] sm:$0xf]
    %v4433 = vld [vmem:[%s12 + $0x14] sm:$0xf]
    %v4434 = vld [vmem:[%s12 + $0x18] sm:$0xf]
    %v4435 = vld [vmem:[%s12 + $0x1c] sm:$0xf]
    %v4436 = vld [vmem:[%s12 + $0x20] sm:$0xf]
    %v4437 = vld [vmem:[%s12 + $0x24] sm:$0xf]
    %v4438 = vld [vmem:[%s12 + $0x28] sm:$0xf]
    %v4439 = vld [vmem:[%s12 + $0x2c] sm:$0xf]
    %v4440 = vld [vmem:[%s12 + $0x30] sm:$0xf]
    %v4441 = vld [vmem:[%s12 + $0x34] sm:$0xf]
    %v4442 = vld [vmem:[%s12 + $0x38] sm:$0xf]
    %v4443 = vld [vmem:[%s12 + $0x3c] sm:$0xf]
    %v4444 = vld [vmem:[%s12 + $0x40] sm:$0xf]
    %v4445 = vld [vmem:[%s12 + $0x44] sm:$0xf]
    %v4446 = vld [vmem:[%s12 + $0x48] sm:$0xf]
    %v4447 = vld [vmem:[%s12 + $0x4c] sm:$0xf]
    %v4448 = vld [vmem:[%s12 + $0x50] sm:$0xf]
    %v4449 = vld [vmem:[%s12 + $0x54] sm:$0xf]
    %v4450 = vld [vmem:[%s12 + $0x58] sm:$0xf]
    %v4451 = vld [vmem:[%s12 + $0x5c] sm:$0xf]
    %v4452 = vld [vmem:[%s12 + $0x60] sm:$0xf]
    %v4453 = vld [vmem:[%s12 + $0x64] sm:$0xf]
    %v4454 = vld [vmem:[%s12 + $0x68] sm:$0xf]
    %v4455 = vld [vmem:[%s12 + $0x6c] sm:$0xf]
    %v4456 = vld [vmem:[%s12 + $0x70] sm:$0xf]
    %v4457 = vld [vmem:[%s12 + $0x74] sm:$0xf]
    %v4458 = vld [vmem:[%s12 + $0x78] sm:$0xf]
    %v4459 = vld [vmem:[%s12 + $0x7c] sm:$0xf]
    %v4460 = vld [vmem:[%s12 + $0x80] sm:$0xf]
    %v4461 = vld [vmem:[%s12 + $0x84] sm:$0xf]
    %v4462 = vld [vmem:[%s12 + $0x88] sm:$0xf]
    %v4463 = vld [vmem:[%s12 + $0x8c] sm:$0xf]
    %v4464 = vld [vmem:[%s12 + $0x90] sm:$0xf]
    %v4465 = vld [vmem:[%s12 + $0x94] sm:$0xf]
    %v4466 = vld [vmem:[%s12 + $0x98] sm:$0xf]
    %v4467 = vld [vmem:[%s12 + $0x9c] sm:$0xf]
    %v4468 = vld [vmem:[%s12 + $0xa0] sm:$0xf]
    %v4469 = vld [vmem:[%s12 + $0xa4] sm:$0xf]
    %v4470 = vld [vmem:[%s12 + $0xa8] sm:$0xf]
    %v4471 = vld [vmem:[%s12 + $0xac] sm:$0xf]
    %v4472 = vld [vmem:[%s12 + $0xb0] sm:$0xf]
    %v4473 = vld [vmem:[%s12 + $0xb4] sm:$0xf]
    %v4474 = vld [vmem:[%s12 + $0xb8] sm:$0xf]
    %v4475 = vld [vmem:[%s12 + $0xbc] sm:$0xf]
    %v4476 = vld [vmem:[%s13] sm:$0x1]
    %v4478 = vlaneseq
    %v4479 = vshrl.u32 %v4478, 7
    %v4480 = vsub.s32 0, %v4479
    %v4481 = vrot.slane %v4476, %v4480
    %v4531 = vunpack.c.l.b16 %v4428
    %v4532 = vunpack.c.l.b16 %v4429
    %v4533 = vunpack.c.l.b16 %v4430
    %v4534 = vunpack.c.l.b16 %v4431
    %v4535 = vunpack.c.l.b16 %v4432
    %v4536 = vunpack.c.l.b16 %v4433
    %v4537 = vunpack.c.l.b16 %v4434
    %v4538 = vunpack.c.l.b16 %v4435
    %v4539 = vunpack.c.l.b16 %v4436
    %v4540 = vunpack.c.l.b16 %v4437
    %v4541 = vunpack.c.l.b16 %v4438
    %v4542 = vunpack.c.l.b16 %v4439
    %v4543 = vunpack.c.l.b16 %v4440
    %v4544 = vunpack.c.l.b16 %v4441
    %v4545 = vunpack.c.l.b16 %v4442
    %v4546 = vunpack.c.l.b16 %v4443
    %v4547 = vunpack.c.l.b16 %v4444
    %v4548 = vunpack.c.l.b16 %v4445
    %v4549 = vunpack.c.l.b16 %v4446
    %v4550 = vunpack.c.l.b16 %v4447
    %v4551 = vunpack.c.l.b16 %v4448
    %v4552 = vunpack.c.l.b16 %v4449
    %v4553 = vunpack.c.l.b16 %v4450
    %v4554 = vunpack.c.l.b16 %v4451
    %v4555 = vunpack.c.l.b16 %v4452
    %v4556 = vunpack.c.l.b16 %v4453
    %v4557 = vunpack.c.l.b16 %v4454
    %v4558 = vunpack.c.l.b16 %v4455
    %v4559 = vunpack.c.l.b16 %v4456
    %v4560 = vunpack.c.l.b16 %v4457
    %v4561 = vunpack.c.l.b16 %v4458
    %v4562 = vunpack.c.l.b16 %v4459
    %v4563 = vunpack.c.l.b16 %v4460
    %v4564 = vunpack.c.l.b16 %v4461
    %v4565 = vunpack.c.l.b16 %v4462
    %v4566 = vunpack.c.l.b16 %v4463
    %v4567 = vunpack.c.l.b16 %v4464
    %v4568 = vunpack.c.l.b16 %v4465
    %v4569 = vunpack.c.l.b16 %v4466
    %v4570 = vunpack.c.l.b16 %v4467
    %v4571 = vunpack.c.l.b16 %v4468
    %v4572 = vunpack.c.l.b16 %v4469
    %v4573 = vunpack.c.l.b16 %v4470
    %v4574 = vunpack.c.l.b16 %v4471
    %v4575 = vunpack.c.l.b16 %v4472
    %v4576 = vunpack.c.l.b16 %v4473
    %v4577 = vunpack.c.l.b16 %v4474
    %v4578 = vunpack.c.l.b16 %v4475
    %v4579 = vpack.c.b16 %v4532, %v4531
    %v4580 = vpack.c.b16 %v4534, %v4533
    %v4581 = vpack.c.b16 %v4536, %v4535
    %v4582 = vpack.c.b16 %v4538, %v4537
    %v4583 = vpack.c.b16 %v4540, %v4539
    %v4584 = vpack.c.b16 %v4542, %v4541
    %v4585 = vpack.c.b16 %v4544, %v4543
    %v4586 = vpack.c.b16 %v4546, %v4545
    %v4587 = vpack.c.b16 %v4548, %v4547
    %v4588 = vpack.c.b16 %v4550, %v4549
    %v4589 = vpack.c.b16 %v4552, %v4551
    %v4590 = vpack.c.b16 %v4554, %v4553
    %v4591 = vpack.c.b16 %v4556, %v4555
    %v4592 = vpack.c.b16 %v4558, %v4557
    %v4593 = vpack.c.b16 %v4560, %v4559
    %v4594 = vpack.c.b16 %v4562, %v4561
    %v4595 = vpack.c.b16 %v4564, %v4563
    %v4596 = vpack.c.b16 %v4566, %v4565
    %v4597 = vpack.c.b16 %v4568, %v4567
    %v4598 = vpack.c.b16 %v4570, %v4569
    %v4599 = vpack.c.b16 %v4572, %v4571
    %v4600 = vpack.c.b16 %v4574, %v4573
    %v4601 = vpack.c.b16 %v4576, %v4575
    %v4602 = vpack.c.b16 %v4578, %v4577
    %4627 = vmatprep.subr.bf16.mxu0 0
    %4628 = vmatpush1.bf16.msra.mxu0 %v4586
    %4629 = vmatprep.subr.bf16.mxu0 0
    %4630 = vmatpush1.bf16.msra.mxu0 %v4585
    %4631 = vmatprep.subr.bf16.mxu0 0
    %4632 = vmatpush1.bf16.msra.mxu0 %v4584
    %4633 = vmatprep.subr.bf16.mxu0 0
    %4634 = vmatpush1.bf16.msra.mxu0 %v4583
    %4635 = vmatprep.subr.bf16.mxu0 0
    %4636 = vmatpush1.bf16.msra.mxu0 %v4582
    %4637 = vmatprep.subr.bf16.mxu0 0
    %4638 = vmatpush1.bf16.msra.mxu0 %v4581
    %4639 = vmatprep.subr.bf16.mxu0 0
    %4640 = vmatpush1.bf16.msra.mxu0 %v4580
    %4641 = vmatprep.subr.bf16.mxu0 0
    %4642 = vmatpush1.bf16.msra.mxu0 %v4579
    %4643 = vmatprep.subr.bf16.mxu0 0
    %4644 = vmatpush2.bf16.msra.mxu0 %v4594
    %4645 = vmatprep.subr.bf16.mxu0 0
    %4646 = vmatpush2.bf16.msra.mxu0 %v4593
    %4647 = vmatprep.subr.bf16.mxu0 0
    %4648 = vmatpush2.bf16.msra.mxu0 %v4592
    %4649 = vmatprep.subr.bf16.mxu0 0
    %4650 = vmatpush2.bf16.msra.mxu0 %v4591
    %4651 = vmatprep.subr.bf16.mxu0 0
    %4652 = vmatpush2.bf16.msra.mxu0 %v4590
    %4653 = vmatprep.subr.bf16.mxu0 0
    %4654 = vmatpush2.bf16.msra.mxu0 %v4589
    %4655 = vmatprep.subr.bf16.mxu0 0
    %4656 = vmatpush2.bf16.msra.mxu0 %v4588
    %4657 = vmatprep.subr.bf16.mxu0 0
    %4658 = vmatpush2.bf16.msra.mxu0 %v4587
    %4659 = vmatprep.mubr.bf16.mxu0 %v4426
    %4660 = vmatmul.mubr.bf16.gmra.mxu0 %v4425
    %v4661 = vpop.f32.mrf.mxu0
    %v4662 = vadd.f32 %v4481, %v4661
    %v4663 = vpop.f32.mrf.mxu0
    %v4664 = vpop.f32.mrf.mxu0
    %v4665 = vpop.f32.mrf.mxu0
    %4666 = vdwg.mxu0
    %4667 = vmatprep.subr.bf16.mxu0 0
    %4668 = vmatpush1.bf16.msra.mxu0 %v4602
    %4669 = vmatprep.subr.bf16.mxu0 0
    %4670 = vmatpush1.bf16.msra.mxu0 %v4601
    %4671 = vmatprep.subr.bf16.mxu0 0
    %4672 = vmatpush1.bf16.msra.mxu0 %v4600
    %4673 = vmatprep.subr.bf16.mxu0 0
    %4674 = vmatpush1.bf16.msra.mxu0 %v4599
    %4675 = vmatprep.subr.bf16.mxu0 0
    %4676 = vmatpush1.bf16.msra.mxu0 %v4598
    %4677 = vmatprep.subr.bf16.mxu0 0
    %4678 = vmatpush1.bf16.msra.mxu0 %v4597
    %4679 = vmatprep.subr.bf16.mxu0 0
    %4680 = vmatpush1.bf16.msra.mxu0 %v4596
    %4681 = vmatprep.subr.bf16.mxu0 0
    %4682 = vmatpush1.bf16.msra.mxu0 %v4595
    %4683 = vmatprep.subr.bf16.mxu0 0
    %4684 = vmatpush2.bf16.msra.mxu0 0
    %4685 = vmatprep.subr.bf16.mxu0 0
    %4686 = vmatpush2.bf16.msra.mxu0 0
    %4687 = vmatprep.subr.bf16.mxu0 0
    %4688 = vmatpush2.bf16.msra.mxu0 0
    %4689 = vmatprep.subr.bf16.mxu0 0
    %4690 = vmatpush2.bf16.msra.mxu0 0
    %4691 = vmatprep.subr.bf16.mxu0 0
    %4692 = vmatpush2.bf16.msra.mxu0 0
    %4693 = vmatprep.subr.bf16.mxu0 0
    %4694 = vmatpush2.bf16.msra.mxu0 0
    %4695 = vmatprep.subr.bf16.mxu0 0
    %4696 = vmatpush2.bf16.msra.mxu0 0
    %4697 = vmatprep.subr.bf16.mxu0 0
    %4698 = vmatpush2.bf16.msra.mxu0 0
    %4699 = vmatprep.mubr.bf16.mxu0 0
    %4700 = vmatmul.mubr.bf16.gmra.mxu0 %v4427
    %v4701 = vpop.f32.mrf.mxu0
    %v4702 = vadd.f32 %v4662, %v4701
    %v4703 = vpop.f32.mrf.mxu0
    %v4704 = vpop.f32.mrf.mxu0
    %v4705 = vpop.f32.mrf.mxu0
    %4706 = vdwg.mxu0
    %vm4707 = vcmask 41984
    %4708 = vst.msk [vmem:[#allocation10] sm:$0x3] %vm4707, %v4702
    // Predicated region
    $region74: #{vcopn_attention_forward.1} parent=1 // pred_check
      _
    $region75: #{vcopn_attention_forward.1} parent=1 // pred_check_branch
      %4710 = sbr.rel (0) target = $region77
    $region76: #{vcopn_attention_forward.1} parent=1 // pred_region
      %s4712 = ssub.s32 32, 32
      %4713 = vsyncadd [#allocation4], %s4712
      %s4715 = sshll.u32 [#allocation10], 4
      %s4716 = int_to_ptr.vmem [resolvable:$true] %s4715
      %4718 = dma.vmem_to_hbm [thread:$0]  %s4716, 32, %s14, [#allocation4]
    $region77: #{vcopn_attention_forward.1} parent=1 // pred_fallthru
      _
    // Predicated region
    $region78: #{vcopn_attention_forward.1} parent=1 // pred_check
      _
    $region79: #{vcopn_attention_forward.1} parent=1 // pred_check_branch
      %4720 = sbr.rel (0) target = $region81
    $region80: #{vcopn_attention_forward.1} parent=1 // pred_region
      %4721 = dma.done [#allocation4], 32
    $region81: #{vcopn_attention_forward.1} parent=1 // pred_fallthru
      _
    %4722 = vsyncpa [#allocation3], 1
    %4723 = vsyncpa [#allocation6], 1
    %4724 = vsyncpa [#allocation9], 1
    %4725 = vsyncpa [#allocation4], 1

</llo_original>
